<compile_context>
chip_gen: v7x
topology: tpu7x:2x2x1
jax: 0.10.0
libtpu: 0.0.40
codegen_flags: <defaults>
</compile_context>

<pallas_src>
import functools

import jax
import jax.numpy as jnp
from jax import lax
from jax.experimental import pallas as pl
from jax.experimental.pallas import tpu as pltpu

# ---------------- model config (small, consistent with the module) ----------------
VOCAB = 64
N_LAYERS = 2
N_HEADS = 4
HEAD_DIM = 8
DIM = 32
N_KV_HEADS = 2
HIDDEN_DIM = 64
MAX_SEQ_LEN = 16
ROPE_BASE = 10000.0
NORM_EPS = 1e-6

BATCH = 2
SEQ = 8
LOGITS_PAD = 128  # lane-dense output width (>= VOCAB)


# ---------------- fused transformer kernel (single grid step) ----------------
def _transformer_kernel(h0_ref, cos_q_ref, sin_q_ref, cos_k_ref, sin_k_ref, mask_ref,
                        attn_norm_ref, wqkv_ref, wo_ref,
                        ffn_norm_ref, w13_ref, w2_ref,
                        norm_w_ref, out_w_ref,
                        logits_ref,
                        *, eps, n_layers, n_heads, n_kv_heads, head_dim, hidden_dim,
                        batch, seq):
    bs = batch * seq
    half = head_dim // 2
    repeats = n_heads // n_kv_heads
    q_w = n_heads * head_dim
    kv_w = n_kv_heads * head_dim

    h = h0_ref[...]            # (B*S, D) f32, carried as a value across layers
    cos_q = cos_q_ref[...]     # (B*S, n_heads*half)
    sin_q = sin_q_ref[...]
    cos_k = cos_k_ref[...]     # (B*S, n_kv_heads*half)
    sin_k = sin_k_ref[...]
    mask = mask_ref[...]       # (S, S) f32 (0 / -inf band)

    def rms(x, w):
        ms = jnp.mean(x * x, axis=-1, keepdims=True)
        return x * lax.rsqrt(ms + eps) * w

    def bdot(a, b):
        # bf16 MXU inputs, f32 accumulation
        return jnp.dot(a.astype(jnp.bfloat16), b, preferred_element_type=jnp.float32)

    for l in range(n_layers):  # static unroll: no grid steps, no pl.when gates
        # ---------------- attention ----------------
        xn = rms(h, attn_norm_ref[l])                       # (BS, D)
        qkv = bdot(xn, wqkv_ref[l])                         # (BS, 64)
        q = qkv[:, :q_w]
        k = qkv[:, q_w:q_w + kv_w]
        v = qkv[:, q_w + kv_w:]

        # RoPE across ALL heads at once.  q/k columns were permuted at init to
        # [all-heads real | all-heads imag]; softmax scale is folded into wq.
        q_re, q_im = q[:, :q_w // 2], q[:, q_w // 2:]
        k_re, k_im = k[:, :kv_w // 2], k[:, kv_w // 2:]
        q_re2 = q_re * cos_q - q_im * sin_q
        q_im2 = q_re * sin_q + q_im * cos_q
        k_re2 = k_re * cos_k - k_im * sin_k
        k_im2 = k_re * sin_k + k_im * cos_k

        # per-KV-head rotated K and V (computed once, shared by the GQA groups)
        k_g, v_g = [], []
        for g in range(n_kv_heads):
            kg = jnp.concatenate([k_re2[:, g * half:(g + 1) * half],
                                  k_im2[:, g * half:(g + 1) * half]], axis=1)
            k_g.append(kg.reshape(batch, seq, head_dim).astype(jnp.bfloat16))
            vg = v[:, g * head_dim:(g + 1) * head_dim]
            v_g.append(vg.reshape(batch, seq, head_dim).astype(jnp.bfloat16))

        head_outs = []
        for hh in range(n_heads):                            # static unroll
            g = hh // repeats
            qh = jnp.concatenate([q_re2[:, hh * half:(hh + 1) * half],
                                  q_im2[:, hh * half:(hh + 1) * half]], axis=1)
            qh = qh.reshape(batch, seq, head_dim).astype(jnp.bfloat16)
            s = jnp.einsum('bqd,bkd->bqk', qh, k_g[g],
                           preferred_element_type=jnp.float32)   # (B, S, S)
            # scale already folded into wq
            s = s + mask
            m = jnp.max(s, axis=-1, keepdims=True)
            p = jnp.exp(s - m)
            lsum = jnp.sum(p, axis=-1, keepdims=True)
            p = p * pl.reciprocal(lsum, approx=True)
            o = jnp.einsum('bqk,bkd->bqd', p.astype(jnp.bfloat16), v_g[g],
                           preferred_element_type=jnp.float32)   # (B, S, hd)
            head_outs.append(o.reshape(bs, head_dim))

        attn = jnp.concatenate(head_outs, axis=1)            # (BS, H*hd)
        h = h + bdot(attn, wo_ref[l])

        # ---------------- SwiGLU feed-forward ----------------
        hn = rms(h, ffn_norm_ref[l])
        h13 = bdot(hn, w13_ref[l])                           # (BS, 2*hidden)
        h1 = h13[:, :hidden_dim]
        h3 = h13[:, hidden_dim:]
        # silu(x) = x * sigmoid(x); reciprocal on the EUP slot
        gact = h1 * pl.reciprocal(1.0 + jnp.exp(-h1), approx=True)
        h = h + bdot(gact * h3, w2_ref[l])

    # ---------------- final norm + output projection (lane-dense 128 wide) ----------------
    fn = rms(h, norm_w_ref[...])
    logits_ref[...] = bdot(fn, out_w_ref[...])               # (BS, 128) f32


# ---------------- parameters (deterministic, in-script) ----------------
def init_params(key):
    keys = jax.random.split(key, 2 + N_LAYERS)
    half = HEAD_DIM // 2
    params = {}
    params["tok_emb"] = jax.random.normal(keys[0], (VOCAB, DIM), jnp.float32) * 0.1

    out_w = jax.random.normal(keys[1], (DIM, VOCAB), jnp.float32) * 0.05
    out_w = jnp.pad(out_w, ((0, 0), (0, LOGITS_PAD - VOCAB)))   # lane-dense padding
    params["out_w"] = out_w.astype(jnp.bfloat16)
    params["norm_w"] = jnp.ones((1, DIM), jnp.float32)

    # precompute_freqs_cis(head_dim, max_seq_len * 2, theta=rope_base)
    freqs = 1.0 / (ROPE_BASE ** (jnp.arange(0, HEAD_DIM, 2)[:half].astype(jnp.float32)
                                 / HEAD_DIM))
    t = jnp.arange(MAX_SEQ_LEN * 2, dtype=jnp.float32)
    angles = jnp.outer(t, freqs)
    params["rope_cos"] = jnp.cos(angles)
    params["rope_sin"] = jnp.sin(angles)

    # Column permutation turning the interleaved (re, im) RoPE layout into
    # [all-heads real | all-heads imag]; attention scores (hence the output)
    # are invariant to a consistent q/k permutation.
    def deinterleave_perm(nh):
        re = (jnp.arange(nh)[:, None] * HEAD_DIM
              + 2 * jnp.arange(half)[None, :]).reshape(-1)
        return jnp.concatenate([re, re + 1])

    q_perm = deinterleave_perm(N_HEADS)
    k_perm = deinterleave_perm(N_KV_HEADS)
    scale = HEAD_DIM ** -0.5   # folded into wq (RoPE is linear in q, so it commutes)

    wqkv_l, wo_l, w13_l, w2_l, an_l, fn_l = [], [], [], [], [], []
    for li in range(N_LAYERS):
        lk = jax.random.split(keys[2 + li], 7)
        sc = 0.05
        wq = jax.random.normal(lk[0], (DIM, N_HEADS * HEAD_DIM), jnp.float32) * sc
        wk = jax.random.normal(lk[1], (DIM, N_KV_HEADS * HEAD_DIM), jnp.float32) * sc
        wv = jax.random.normal(lk[2], (DIM, N_KV_HEADS * HEAD_DIM), jnp.float32) * sc
        wo = jax.random.normal(lk[3], (N_HEADS * HEAD_DIM, DIM), jnp.float32) * sc
        w1 = jax.random.normal(lk[4], (DIM, HIDDEN_DIM), jnp.float32) * sc
        w3 = jax.random.normal(lk[5], (DIM, HIDDEN_DIM), jnp.float32) * sc
        w2 = jax.random.normal(lk[6], (HIDDEN_DIM, DIM), jnp.float32) * sc
        wqkv_l.append(jnp.concatenate([(wq * scale)[:, q_perm], wk[:, k_perm], wv],
                                      axis=1))
        wo_l.append(wo)
        w13_l.append(jnp.concatenate([w1, w3], axis=1))
        w2_l.append(w2)
        an_l.append(jnp.ones((1, DIM), jnp.float32))
        fn_l.append(jnp.ones((1, DIM), jnp.float32))

    params["wqkv"] = jnp.stack(wqkv_l).astype(jnp.bfloat16)   # (L, D, 64)
    params["wo"] = jnp.stack(wo_l).astype(jnp.bfloat16)       # (L, 32, D)
    params["w13"] = jnp.stack(w13_l).astype(jnp.bfloat16)     # (L, D, 128)
    params["w2"] = jnp.stack(w2_l).astype(jnp.bfloat16)       # (L, 64, D)
    params["attn_norm"] = jnp.stack(an_l)                     # (L, 1, D) f32
    params["ffn_norm"] = jnp.stack(fn_l)                      # (L, 1, D) f32
    return params


# ---------------- forward pass ----------------
def transformer_forward(params, input_ids, positions):
    b, s = input_ids.shape
    bs = b * s
    half = HEAD_DIM // 2

    # glue: token-embedding and RoPE-table gathers (data-dependent) done once in JAX
    h0 = jnp.take(params["tok_emb"], input_ids, axis=0).reshape(bs, DIM)
    cos = jnp.take(params["rope_cos"], positions, axis=0)     # (S, half)
    sin = jnp.take(params["rope_sin"], positions, axis=0)
    cos_q = jnp.tile(jnp.tile(cos, (1, N_HEADS)), (b, 1))     # (B*S, n_heads*half)
    sin_q = jnp.tile(jnp.tile(sin, (1, N_HEADS)), (b, 1))
    cos_k = jnp.tile(jnp.tile(cos, (1, N_KV_HEADS)), (b, 1))  # (B*S, n_kv*half)
    sin_k = jnp.tile(jnp.tile(sin, (1, N_KV_HEADS)), (b, 1))

    # reference mask (seqlen > 1): log(triu(tril(ones, 0), -1)) -> 0 on band, -inf off
    band = jnp.triu(jnp.tril(jnp.ones((s, s), jnp.float32)), k=-1)
    mask = jnp.log(band)

    # TODO(synk): the reference's debug `print(scores.mean())` side effect is omitted.

    kernel = functools.partial(
        _transformer_kernel, eps=NORM_EPS, n_layers=N_LAYERS,
        n_heads=N_HEADS, n_kv_heads=N_KV_HEADS, head_dim=HEAD_DIM,
        hidden_dim=HIDDEN_DIM, batch=b, seq=s)

    qkv_w = N_HEADS * HEAD_DIM + 2 * N_KV_HEADS * HEAD_DIM    # 64

    def full(shape):
        return pl.BlockSpec(shape, lambda i, _n=len(shape): (0,) * _n)

    logits_pad = pl.pallas_call(
        kernel,
        out_shape=jax.ShapeDtypeStruct((bs, LOGITS_PAD), jnp.float32),
        grid=(1,),
        in_specs=[
            full((bs, DIM)),                                  # h0
            full((bs, N_HEADS * half)),                       # cos_q
            full((bs, N_HEADS * half)),                       # sin_q
            full((bs, N_KV_HEADS * half)),                    # cos_k
            full((bs, N_KV_HEADS * half)),                    # sin_k
            full((s, s)),                                     # mask
            full((N_LAYERS, 1, DIM)),                         # attn_norm
            full((N_LAYERS, DIM, qkv_w)),                     # wqkv
            full((N_LAYERS, N_HEADS * HEAD_DIM, DIM)),        # wo
            full((N_LAYERS, 1, DIM)),                         # ffn_norm
            full((N_LAYERS, DIM, 2 * HIDDEN_DIM)),            # w13
            full((N_LAYERS, HIDDEN_DIM, DIM)),                # w2
            full((1, DIM)),                                   # norm_w
            full((DIM, LOGITS_PAD)),                          # out_w (padded)
        ],
        out_specs=full((bs, LOGITS_PAD)),
        compiler_params=pltpu.CompilerParams(
            dimension_semantics=("arbitrary",)),
    )(h0, cos_q, sin_q, cos_k, sin_k, mask,
      params["attn_norm"], params["wqkv"], params["wo"],
      params["ffn_norm"], params["w13"], params["w2"],
      params["norm_w"], params["out_w"])

    return logits_pad[:, :VOCAB].reshape(b, s, VOCAB).astype(jnp.float32)


if __name__ == "__main__":
    key = jax.random.PRNGKey(0)
    pkey, ikey = jax.random.split(key)
    params = init_params(pkey)
    input_ids = jax.random.randint(ikey, (BATCH, SEQ), 0, VOCAB, dtype=jnp.int32)
    positions = jnp.arange(SEQ, dtype=jnp.int32)

    fwd = jax.jit(transformer_forward)
    logits = fwd(params, input_ids, positions)
    jax.block_until_ready(logits)

    assert logits.shape == (BATCH, SEQ, VOCAB), logits.shape
    assert logits.dtype == jnp.float32
    assert bool(jnp.all(jnp.isfinite(logits)))
    print("KERNEL_OK")
</pallas_src>

<mosaic_0001>
module attributes {stable_mosaic.version = 11 : i64} {
  func.func @_transformer_kernel(%arg0: i32, %arg1: memref<16x32xf32, #tpu.memory_space<vmem>>, %arg2: memref<16x16xf32, #tpu.memory_space<vmem>>, %arg3: memref<16x16xf32, #tpu.memory_space<vmem>>, %arg4: memref<16x8xf32, #tpu.memory_space<vmem>>, %arg5: memref<16x8xf32, #tpu.memory_space<vmem>>, %arg6: memref<8x8xf32, #tpu.memory_space<vmem>>, %arg7: memref<2x1x32xf32, #tpu.memory_space<vmem>>, %arg8: memref<2x32x64xbf16, #tpu.memory_space<vmem>>, %arg9: memref<2x32x32xbf16, #tpu.memory_space<vmem>>, %arg10: memref<2x1x32xf32, #tpu.memory_space<vmem>>, %arg11: memref<2x32x128xbf16, #tpu.memory_space<vmem>>, %arg12: memref<2x64x32xbf16, #tpu.memory_space<vmem>>, %arg13: memref<1x32xf32, #tpu.memory_space<vmem>>, %arg14: memref<32x128xbf16, #tpu.memory_space<vmem>>, %arg15: memref<16x128xf32, #tpu.memory_space<vmem>>) attributes {dimension_semantics = [#tpu.dimension_semantics<arbitrary>], iteration_bounds = array<i64: 1>, scalar_prefetch = 0 : i64, scratch_operands = 0 : i64, tpu.core_type = #tpu.core_type<tc>, window_params = [{pipeline_mode = #tpu.pipeline_mode<synchronous>, transform_indices = @transform_0, window_bounds = array<i64: 16, 32>}, {pipeline_mode = #tpu.pipeline_mode<synchronous>, transform_indices = @transform_1, window_bounds = array<i64: 16, 16>}, {pipeline_mode = #tpu.pipeline_mode<synchronous>, transform_indices = @transform_2, window_bounds = array<i64: 16, 16>}, {pipeline_mode = #tpu.pipeline_mode<synchronous>, transform_indices = @transform_3, window_bounds = array<i64: 16, 8>}, {pipeline_mode = #tpu.pipeline_mode<synchronous>, transform_indices = @transform_4, window_bounds = array<i64: 16, 8>}, {pipeline_mode = #tpu.pipeline_mode<synchronous>, transform_indices = @transform_5, window_bounds = array<i64: 8, 8>}, {pipeline_mode = #tpu.pipeline_mode<synchronous>, transform_indices = @transform_6, window_bounds = array<i64: 2, 1, 32>}, {pipeline_mode = #tpu.pipeline_mode<synchronous>, transform_indices = @transform_7, window_bounds = array<i64: 2, 32, 64>}, {pipeline_mode = #tpu.pipeline_mode<synchronous>, transform_indices = @transform_8, window_bounds = array<i64: 2, 32, 32>}, {pipeline_mode = #tpu.pipeline_mode<synchronous>, transform_indices = @transform_9, window_bounds = array<i64: 2, 1, 32>}, {pipeline_mode = #tpu.pipeline_mode<synchronous>, transform_indices = @transform_10, window_bounds = array<i64: 2, 32, 128>}, {pipeline_mode = #tpu.pipeline_mode<synchronous>, transform_indices = @transform_11, window_bounds = array<i64: 2, 64, 32>}, {pipeline_mode = #tpu.pipeline_mode<synchronous>, transform_indices = @transform_12, window_bounds = array<i64: 1, 32>}, {pipeline_mode = #tpu.pipeline_mode<synchronous>, transform_indices = @transform_13, window_bounds = array<i64: 32, 128>}, {pipeline_mode = #tpu.pipeline_mode<synchronous>, transform_indices = @transform_14, window_bounds = array<i64: 16, 128>}]} {
    %c0 = arith.constant 0 : index
    %c0_0 = arith.constant 0 : index
    %0 = vector.load %arg1[%c0, %c0_0] : memref<16x32xf32, #tpu.memory_space<vmem>>, vector<16x32xf32>
    %c0_1 = arith.constant 0 : index
    %c0_2 = arith.constant 0 : index
    %1 = vector.load %arg2[%c0_1, %c0_2] : memref<16x16xf32, #tpu.memory_space<vmem>>, vector<16x16xf32>
    %c0_3 = arith.constant 0 : index
    %c0_4 = arith.constant 0 : index
    %2 = vector.load %arg3[%c0_3, %c0_4] : memref<16x16xf32, #tpu.memory_space<vmem>>, vector<16x16xf32>
    %c0_5 = arith.constant 0 : index
    %c0_6 = arith.constant 0 : index
    %3 = vector.load %arg4[%c0_5, %c0_6] : memref<16x8xf32, #tpu.memory_space<vmem>>, vector<16x8xf32>
    %c0_7 = arith.constant 0 : index
    %c0_8 = arith.constant 0 : index
    %4 = vector.load %arg5[%c0_7, %c0_8] : memref<16x8xf32, #tpu.memory_space<vmem>>, vector<16x8xf32>
    %c0_9 = arith.constant 0 : index
    %c0_10 = arith.constant 0 : index
    %5 = vector.load %arg6[%c0_9, %c0_10] : memref<8x8xf32, #tpu.memory_space<vmem>>, vector<8x8xf32>
    %c0_11 = arith.constant 0 : index
    %c0_12 = arith.constant 0 : index
    %c0_13 = arith.constant 0 : index
    %6 = vector.load %arg7[%c0_11, %c0_12, %c0_13] : memref<2x1x32xf32, #tpu.memory_space<vmem>>, vector<1x1x32xf32>
    %7 = vector.shape_cast %6 : vector<1x1x32xf32> to vector<1x32xf32>
    %8 = arith.mulf %0, %0 : vector<16x32xf32>
    %cst = arith.constant dense<0.000000e+00> : vector<16xf32>
    %9 = vector.multi_reduction <add>, %8, %cst [1] : vector<16x32xf32> to vector<16xf32>
    %10 = vector.shape_cast %9 : vector<16xf32> to vector<16x1xf32>
    %cst_14 = arith.constant 3.200000e+01 : f32
    %11 = vector.broadcast %cst_14 : f32 to vector<16x1xf32>
    %12 = arith.divf %10, %11 : vector<16x1xf32>
    %cst_15 = arith.constant 9.99999997E-7 : f32
    %13 = vector.broadcast %cst_15 : f32 to vector<16x1xf32>
    %14 = arith.addf %12, %13 : vector<16x1xf32>
    %15 = math.rsqrt %14 : vector<16x1xf32>
    %16 = vector.broadcast %15 : vector<16x1xf32> to vector<16x32xf32>
    %17 = arith.mulf %0, %16 : vector<16x32xf32>
    %18 = vector.broadcast %7 : vector<1x32xf32> to vector<16x32xf32>
    %19 = arith.mulf %17, %18 : vector<16x32xf32>
    %c0_16 = arith.constant 0 : index
    %c0_17 = arith.constant 0 : index
    %c0_18 = arith.constant 0 : index
    %20 = vector.load %arg8[%c0_16, %c0_17, %c0_18] : memref<2x32x64xbf16, #tpu.memory_space<vmem>>, vector<1x32x64xbf16>
    %21 = vector.shape_cast %20 : vector<1x32x64xbf16> to vector<32x64xbf16>
    %22 = arith.truncf %19 : vector<16x32xf32> to vector<16x32xbf16>
    %cst_19 = arith.constant dense<0.000000e+00> : vector<16x64xf32>
    %23 = tpu.matmul %22, %21, %cst_19 {dimension_numbers = #tpu.dot_dimension_numbers<[1], [0], [0], [1], [0, 0, 1, 1], [], []>} : vector<16x32xbf16>, vector<32x64xbf16>, vector<16x64xf32> -> vector<16x64xf32>
    %24 = vector.extract_strided_slice %23 {offsets = [0, 0], sizes = [16, 32], strides = [1, 1]} : vector<16x64xf32> to vector<16x32xf32>
    %25 = vector.extract_strided_slice %23 {offsets = [0, 32], sizes = [16, 16], strides = [1, 1]} : vector<16x64xf32> to vector<16x16xf32>
    %26 = vector.extract_strided_slice %23 {offsets = [0, 48], sizes = [16, 16], strides = [1, 1]} : vector<16x64xf32> to vector<16x16xf32>
    %27 = vector.extract_strided_slice %24 {offsets = [0, 0], sizes = [16, 16], strides = [1, 1]} : vector<16x32xf32> to vector<16x16xf32>
    %28 = vector.extract_strided_slice %24 {offsets = [0, 16], sizes = [16, 16], strides = [1, 1]} : vector<16x32xf32> to vector<16x16xf32>
    %29 = vector.extract_strided_slice %25 {offsets = [0, 0], sizes = [16, 8], strides = [1, 1]} : vector<16x16xf32> to vector<16x8xf32>
    %30 = vector.extract_strided_slice %25 {offsets = [0, 8], sizes = [16, 8], strides = [1, 1]} : vector<16x16xf32> to vector<16x8xf32>
    %31 = arith.mulf %27, %1 : vector<16x16xf32>
    %32 = arith.mulf %28, %2 : vector<16x16xf32>
    %33 = arith.subf %31, %32 : vector<16x16xf32>
    %34 = arith.mulf %27, %2 : vector<16x16xf32>
    %35 = arith.mulf %28, %1 : vector<16x16xf32>
    %36 = arith.addf %34, %35 : vector<16x16xf32>
    %37 = arith.mulf %29, %3 : vector<16x8xf32>
    %38 = arith.mulf %30, %4 : vector<16x8xf32>
    %39 = arith.subf %37, %38 : vector<16x8xf32>
    %40 = arith.mulf %29, %4 : vector<16x8xf32>
    %41 = arith.mulf %30, %3 : vector<16x8xf32>
    %42 = arith.addf %40, %41 : vector<16x8xf32>
    %43 = vector.extract_strided_slice %39 {offsets = [0, 0], sizes = [16, 4], strides = [1, 1]} : vector<16x8xf32> to vector<16x4xf32>
    %44 = vector.extract_strided_slice %42 {offsets = [0, 0], sizes = [16, 4], strides = [1, 1]} : vector<16x8xf32> to vector<16x4xf32>
    %45 = tpu.concatenate %43, %44 in 1 : vector<16x4xf32>, vector<16x4xf32> -> vector<16x8xf32>
    %46 = vector.shape_cast %45 : vector<16x8xf32> to vector<2x8x8xf32>
    %47 = arith.truncf %46 : vector<2x8x8xf32> to vector<2x8x8xbf16>
    %48 = vector.extract_strided_slice %26 {offsets = [0, 0], sizes = [16, 8], strides = [1, 1]} : vector<16x16xf32> to vector<16x8xf32>
    %49 = vector.shape_cast %48 : vector<16x8xf32> to vector<2x8x8xf32>
    %50 = arith.truncf %49 : vector<2x8x8xf32> to vector<2x8x8xbf16>
    %51 = vector.extract_strided_slice %39 {offsets = [0, 4], sizes = [16, 4], strides = [1, 1]} : vector<16x8xf32> to vector<16x4xf32>
    %52 = vector.extract_strided_slice %42 {offsets = [0, 4], sizes = [16, 4], strides = [1, 1]} : vector<16x8xf32> to vector<16x4xf32>
    %53 = tpu.concatenate %51, %52 in 1 : vector<16x4xf32>, vector<16x4xf32> -> vector<16x8xf32>
    %54 = vector.shape_cast %53 : vector<16x8xf32> to vector<2x8x8xf32>
    %55 = arith.truncf %54 : vector<2x8x8xf32> to vector<2x8x8xbf16>
    %56 = vector.extract_strided_slice %26 {offsets = [0, 8], sizes = [16, 8], strides = [1, 1]} : vector<16x16xf32> to vector<16x8xf32>
    %57 = vector.shape_cast %56 : vector<16x8xf32> to vector<2x8x8xf32>
    %58 = arith.truncf %57 : vector<2x8x8xf32> to vector<2x8x8xbf16>
    %59 = vector.extract_strided_slice %33 {offsets = [0, 0], sizes = [16, 4], strides = [1, 1]} : vector<16x16xf32> to vector<16x4xf32>
    %60 = vector.extract_strided_slice %36 {offsets = [0, 0], sizes = [16, 4], strides = [1, 1]} : vector<16x16xf32> to vector<16x4xf32>
    %61 = tpu.concatenate %59, %60 in 1 : vector<16x4xf32>, vector<16x4xf32> -> vector<16x8xf32>
    %62 = vector.shape_cast %61 : vector<16x8xf32> to vector<2x8x8xf32>
    %63 = arith.truncf %62 : vector<2x8x8xf32> to vector<2x8x8xbf16>
    "tpu.trace_start"() <{level = 10 : i32, message = "bqd,bkd->bqk"}> : () -> ()
    %cst_20 = arith.constant dense<0.000000e+00> : vector<2x8x8xf32>
    %64 = tpu.matmul %63, %47, %cst_20 {dimension_numbers = #tpu.dot_dimension_numbers<[2], [2], [1], [1], [0, 0, 0, 1, 1, 1], [0], [0]>} : vector<2x8x8xbf16>, vector<2x8x8xbf16>, vector<2x8x8xf32> -> vector<2x8x8xf32>
    "tpu.trace_stop"() : () -> ()
    %65 = vector.shape_cast %5 : vector<8x8xf32> to vector<1x8x8xf32>
    %66 = vector.broadcast %65 : vector<1x8x8xf32> to vector<2x8x8xf32>
    %67 = arith.addf %64, %66 : vector<2x8x8xf32>
    %cst_21 = arith.constant dense<0xFF800000> : vector<2x8xf32>
    %68 = vector.multi_reduction <maximumf>, %67, %cst_21 [2] : vector<2x8x8xf32> to vector<2x8xf32>
    %69 = vector.shape_cast %68 : vector<2x8xf32> to vector<2x8x1xf32>
    %70 = vector.broadcast %69 : vector<2x8x1xf32> to vector<2x8x8xf32>
    %71 = arith.subf %67, %70 : vector<2x8x8xf32>
    %72 = math.exp %71 : vector<2x8x8xf32>
    %cst_22 = arith.constant dense<0.000000e+00> : vector<2x8xf32>
    %73 = vector.multi_reduction <add>, %72, %cst_22 [2] : vector<2x8x8xf32> to vector<2x8xf32>
    %74 = vector.shape_cast %73 : vector<2x8xf32> to vector<2x8x1xf32>
    %75 = tpu.reciprocal %74 {approx = true} : vector<2x8x1xf32> -> vector<2x8x1xf32>
    %76 = vector.broadcast %75 : vector<2x8x1xf32> to vector<2x8x8xf32>
    %77 = arith.mulf %72, %76 : vector<2x8x8xf32>
    %78 = arith.truncf %77 : vector<2x8x8xf32> to vector<2x8x8xbf16>
    "tpu.trace_start"() <{level = 10 : i32, message = "bqk,bkd->bqd"}> : () -> ()
    %cst_23 = arith.constant dense<0.000000e+00> : vector<2x8x8xf32>
    %79 = tpu.matmul %78, %50, %cst_23 {dimension_numbers = #tpu.dot_dimension_numbers<[2], [1], [1], [2], [0, 0, 0, 1, 1, 2], [0], [0]>} : vector<2x8x8xbf16>, vector<2x8x8xbf16>, vector<2x8x8xf32> -> vector<2x8x8xf32>
    "tpu.trace_stop"() : () -> ()
    %80 = vector.shape_cast %79 : vector<2x8x8xf32> to vector<16x8xf32>
    %81 = vector.extract_strided_slice %33 {offsets = [0, 4], sizes = [16, 4], strides = [1, 1]} : vector<16x16xf32> to vector<16x4xf32>
    %82 = vector.extract_strided_slice %36 {offsets = [0, 4], sizes = [16, 4], strides = [1, 1]} : vector<16x16xf32> to vector<16x4xf32>
    %83 = tpu.concatenate %81, %82 in 1 : vector<16x4xf32>, vector<16x4xf32> -> vector<16x8xf32>
    %84 = vector.shape_cast %83 : vector<16x8xf32> to vector<2x8x8xf32>
    %85 = arith.truncf %84 : vector<2x8x8xf32> to vector<2x8x8xbf16>
    "tpu.trace_start"() <{level = 10 : i32, message = "bqd,bkd->bqk"}> : () -> ()
    %cst_24 = arith.constant dense<0.000000e+00> : vector<2x8x8xf32>
    %86 = tpu.matmul %85, %47, %cst_24 {dimension_numbers = #tpu.dot_dimension_numbers<[2], [2], [1], [1], [0, 0, 0, 1, 1, 1], [0], [0]>} : vector<2x8x8xbf16>, vector<2x8x8xbf16>, vector<2x8x8xf32> -> vector<2x8x8xf32>
    "tpu.trace_stop"() : () -> ()
    %87 = vector.shape_cast %5 : vector<8x8xf32> to vector<1x8x8xf32>
    %88 = vector.broadcast %87 : vector<1x8x8xf32> to vector<2x8x8xf32>
    %89 = arith.addf %86, %88 : vector<2x8x8xf32>
    %cst_25 = arith.constant dense<0xFF800000> : vector<2x8xf32>
    %90 = vector.multi_reduction <maximumf>, %89, %cst_25 [2] : vector<2x8x8xf32> to vector<2x8xf32>
    %91 = vector.shape_cast %90 : vector<2x8xf32> to vector<2x8x1xf32>
    %92 = vector.broadcast %91 : vector<2x8x1xf32> to vector<2x8x8xf32>
    %93 = arith.subf %89, %92 : vector<2x8x8xf32>
    %94 = math.exp %93 : vector<2x8x8xf32>
    %cst_26 = arith.constant dense<0.000000e+00> : vector<2x8xf32>
    %95 = vector.multi_reduction <add>, %94, %cst_26 [2] : vector<2x8x8xf32> to vector<2x8xf32>
    %96 = vector.shape_cast %95 : vector<2x8xf32> to vector<2x8x1xf32>
    %97 = tpu.reciprocal %96 {approx = true} : vector<2x8x1xf32> -> vector<2x8x1xf32>
    %98 = vector.broadcast %97 : vector<2x8x1xf32> to vector<2x8x8xf32>
    %99 = arith.mulf %94, %98 : vector<2x8x8xf32>
    %100 = arith.truncf %99 : vector<2x8x8xf32> to vector<2x8x8xbf16>
    "tpu.trace_start"() <{level = 10 : i32, message = "bqk,bkd->bqd"}> : () -> ()
    %cst_27 = arith.constant dense<0.000000e+00> : vector<2x8x8xf32>
    %101 = tpu.matmul %100, %50, %cst_27 {dimension_numbers = #tpu.dot_dimension_numbers<[2], [1], [1], [2], [0, 0, 0, 1, 1, 2], [0], [0]>} : vector<2x8x8xbf16>, vector<2x8x8xbf16>, vector<2x8x8xf32> -> vector<2x8x8xf32>
    "tpu.trace_stop"() : () -> ()
    %102 = vector.shape_cast %101 : vector<2x8x8xf32> to vector<16x8xf32>
    %103 = vector.extract_strided_slice %33 {offsets = [0, 8], sizes = [16, 4], strides = [1, 1]} : vector<16x16xf32> to vector<16x4xf32>
    %104 = vector.extract_strided_slice %36 {offsets = [0, 8], sizes = [16, 4], strides = [1, 1]} : vector<16x16xf32> to vector<16x4xf32>
    %105 = tpu.concatenate %103, %104 in 1 : vector<16x4xf32>, vector<16x4xf32> -> vector<16x8xf32>
    %106 = vector.shape_cast %105 : vector<16x8xf32> to vector<2x8x8xf32>
    %107 = arith.truncf %106 : vector<2x8x8xf32> to vector<2x8x8xbf16>
    "tpu.trace_start"() <{level = 10 : i32, message = "bqd,bkd->bqk"}> : () -> ()
    %cst_28 = arith.constant dense<0.000000e+00> : vector<2x8x8xf32>
    %108 = tpu.matmul %107, %55, %cst_28 {dimension_numbers = #tpu.dot_dimension_numbers<[2], [2], [1], [1], [0, 0, 0, 1, 1, 1], [0], [0]>} : vector<2x8x8xbf16>, vector<2x8x8xbf16>, vector<2x8x8xf32> -> vector<2x8x8xf32>
    "tpu.trace_stop"() : () -> ()
    %109 = vector.shape_cast %5 : vector<8x8xf32> to vector<1x8x8xf32>
    %110 = vector.broadcast %109 : vector<1x8x8xf32> to vector<2x8x8xf32>
    %111 = arith.addf %108, %110 : vector<2x8x8xf32>
    %cst_29 = arith.constant dense<0xFF800000> : vector<2x8xf32>
    %112 = vector.multi_reduction <maximumf>, %111, %cst_29 [2] : vector<2x8x8xf32> to vector<2x8xf32>
    %113 = vector.shape_cast %112 : vector<2x8xf32> to vector<2x8x1xf32>
    %114 = vector.broadcast %113 : vector<2x8x1xf32> to vector<2x8x8xf32>
    %115 = arith.subf %111, %114 : vector<2x8x8xf32>
    %116 = math.exp %115 : vector<2x8x8xf32>
    %cst_30 = arith.constant dense<0.000000e+00> : vector<2x8xf32>
    %117 = vector.multi_reduction <add>, %116, %cst_30 [2] : vector<2x8x8xf32> to vector<2x8xf32>
    %118 = vector.shape_cast %117 : vector<2x8xf32> to vector<2x8x1xf32>
    %119 = tpu.reciprocal %118 {approx = true} : vector<2x8x1xf32> -> vector<2x8x1xf32>
    %120 = vector.broadcast %119 : vector<2x8x1xf32> to vector<2x8x8xf32>
    %121 = arith.mulf %116, %120 : vector<2x8x8xf32>
    %122 = arith.truncf %121 : vector<2x8x8xf32> to vector<2x8x8xbf16>
    "tpu.trace_start"() <{level = 10 : i32, message = "bqk,bkd->bqd"}> : () -> ()
    %cst_31 = arith.constant dense<0.000000e+00> : vector<2x8x8xf32>
    %123 = tpu.matmul %122, %58, %cst_31 {dimension_numbers = #tpu.dot_dimension_numbers<[2], [1], [1], [2], [0, 0, 0, 1, 1, 2], [0], [0]>} : vector<2x8x8xbf16>, vector<2x8x8xbf16>, vector<2x8x8xf32> -> vector<2x8x8xf32>
    "tpu.trace_stop"() : () -> ()
    %124 = vector.shape_cast %123 : vector<2x8x8xf32> to vector<16x8xf32>
    %125 = vector.extract_strided_slice %33 {offsets = [0, 12], sizes = [16, 4], strides = [1, 1]} : vector<16x16xf32> to vector<16x4xf32>
    %126 = vector.extract_strided_slice %36 {offsets = [0, 12], sizes = [16, 4], strides = [1, 1]} : vector<16x16xf32> to vector<16x4xf32>
    %127 = tpu.concatenate %125, %126 in 1 : vector<16x4xf32>, vector<16x4xf32> -> vector<16x8xf32>
    %128 = vector.shape_cast %127 : vector<16x8xf32> to vector<2x8x8xf32>
    %129 = arith.truncf %128 : vector<2x8x8xf32> to vector<2x8x8xbf16>
    "tpu.trace_start"() <{level = 10 : i32, message = "bqd,bkd->bqk"}> : () -> ()
    %cst_32 = arith.constant dense<0.000000e+00> : vector<2x8x8xf32>
    %130 = tpu.matmul %129, %55, %cst_32 {dimension_numbers = #tpu.dot_dimension_numbers<[2], [2], [1], [1], [0, 0, 0, 1, 1, 1], [0], [0]>} : vector<2x8x8xbf16>, vector<2x8x8xbf16>, vector<2x8x8xf32> -> vector<2x8x8xf32>
    "tpu.trace_stop"() : () -> ()
    %131 = vector.shape_cast %5 : vector<8x8xf32> to vector<1x8x8xf32>
    %132 = vector.broadcast %131 : vector<1x8x8xf32> to vector<2x8x8xf32>
    %133 = arith.addf %130, %132 : vector<2x8x8xf32>
    %cst_33 = arith.constant dense<0xFF800000> : vector<2x8xf32>
    %134 = vector.multi_reduction <maximumf>, %133, %cst_33 [2] : vector<2x8x8xf32> to vector<2x8xf32>
    %135 = vector.shape_cast %134 : vector<2x8xf32> to vector<2x8x1xf32>
    %136 = vector.broadcast %135 : vector<2x8x1xf32> to vector<2x8x8xf32>
    %137 = arith.subf %133, %136 : vector<2x8x8xf32>
    %138 = math.exp %137 : vector<2x8x8xf32>
    %cst_34 = arith.constant dense<0.000000e+00> : vector<2x8xf32>
    %139 = vector.multi_reduction <add>, %138, %cst_34 [2] : vector<2x8x8xf32> to vector<2x8xf32>
    %140 = vector.shape_cast %139 : vector<2x8xf32> to vector<2x8x1xf32>
    %141 = tpu.reciprocal %140 {approx = true} : vector<2x8x1xf32> -> vector<2x8x1xf32>
    %142 = vector.broadcast %141 : vector<2x8x1xf32> to vector<2x8x8xf32>
    %143 = arith.mulf %138, %142 : vector<2x8x8xf32>
    %144 = arith.truncf %143 : vector<2x8x8xf32> to vector<2x8x8xbf16>
    "tpu.trace_start"() <{level = 10 : i32, message = "bqk,bkd->bqd"}> : () -> ()
    %cst_35 = arith.constant dense<0.000000e+00> : vector<2x8x8xf32>
    %145 = tpu.matmul %144, %58, %cst_35 {dimension_numbers = #tpu.dot_dimension_numbers<[2], [1], [1], [2], [0, 0, 0, 1, 1, 2], [0], [0]>} : vector<2x8x8xbf16>, vector<2x8x8xbf16>, vector<2x8x8xf32> -> vector<2x8x8xf32>
    "tpu.trace_stop"() : () -> ()
    %146 = vector.shape_cast %145 : vector<2x8x8xf32> to vector<16x8xf32>
    %147 = tpu.concatenate %80, %102, %124, %146 in 1 : vector<16x8xf32>, vector<16x8xf32>, vector<16x8xf32>, vector<16x8xf32> -> vector<16x32xf32>
    %c0_36 = arith.constant 0 : index
    %c0_37 = arith.constant 0 : index
    %c0_38 = arith.constant 0 : index
    %148 = vector.load %arg9[%c0_36, %c0_37, %c0_38] : memref<2x32x32xbf16, #tpu.memory_space<vmem>>, vector<1x32x32xbf16>
    %149 = vector.shape_cast %148 : vector<1x32x32xbf16> to vector<32x32xbf16>
    %150 = arith.truncf %147 : vector<16x32xf32> to vector<16x32xbf16>
    %cst_39 = arith.constant dense<0.000000e+00> : vector<16x32xf32>
    %151 = tpu.matmul %150, %149, %cst_39 {dimension_numbers = #tpu.dot_dimension_numbers<[1], [0], [0], [1], [0, 0, 1, 1], [], []>} : vector<16x32xbf16>, vector<32x32xbf16>, vector<16x32xf32> -> vector<16x32xf32>
    %152 = arith.addf %0, %151 : vector<16x32xf32>
    %c0_40 = arith.constant 0 : index
    %c0_41 = arith.constant 0 : index
    %c0_42 = arith.constant 0 : index
    %153 = vector.load %arg10[%c0_40, %c0_41, %c0_42] : memref<2x1x32xf32, #tpu.memory_space<vmem>>, vector<1x1x32xf32>
    %154 = vector.shape_cast %153 : vector<1x1x32xf32> to vector<1x32xf32>
    %155 = arith.mulf %152, %152 : vector<16x32xf32>
    %cst_43 = arith.constant dense<0.000000e+00> : vector<16xf32>
    %156 = vector.multi_reduction <add>, %155, %cst_43 [1] : vector<16x32xf32> to vector<16xf32>
    %157 = vector.shape_cast %156 : vector<16xf32> to vector<16x1xf32>
    %cst_44 = arith.constant 3.200000e+01 : f32
    %158 = vector.broadcast %cst_44 : f32 to vector<16x1xf32>
    %159 = arith.divf %157, %158 : vector<16x1xf32>
    %cst_45 = arith.constant 9.99999997E-7 : f32
    %160 = vector.broadcast %cst_45 : f32 to vector<16x1xf32>
    %161 = arith.addf %159, %160 : vector<16x1xf32>
    %162 = math.rsqrt %161 : vector<16x1xf32>
    %163 = vector.broadcast %162 : vector<16x1xf32> to vector<16x32xf32>
    %164 = arith.mulf %152, %163 : vector<16x32xf32>
    %165 = vector.broadcast %154 : vector<1x32xf32> to vector<16x32xf32>
    %166 = arith.mulf %164, %165 : vector<16x32xf32>
    %c0_46 = arith.constant 0 : index
    %c0_47 = arith.constant 0 : index
    %c0_48 = arith.constant 0 : index
    %167 = vector.load %arg11[%c0_46, %c0_47, %c0_48] : memref<2x32x128xbf16, #tpu.memory_space<vmem>>, vector<1x32x128xbf16>
    %168 = vector.shape_cast %167 : vector<1x32x128xbf16> to vector<32x128xbf16>
    %169 = arith.truncf %166 : vector<16x32xf32> to vector<16x32xbf16>
    %cst_49 = arith.constant dense<0.000000e+00> : vector<16x128xf32>
    %170 = tpu.matmul %169, %168, %cst_49 {dimension_numbers = #tpu.dot_dimension_numbers<[1], [0], [0], [1], [0, 0, 1, 1], [], []>} : vector<16x32xbf16>, vector<32x128xbf16>, vector<16x128xf32> -> vector<16x128xf32>
    %171 = vector.extract_strided_slice %170 {offsets = [0, 0], sizes = [16, 64], strides = [1, 1]} : vector<16x128xf32> to vector<16x64xf32>
    %172 = vector.extract_strided_slice %170 {offsets = [0, 64], sizes = [16, 64], strides = [1, 1]} : vector<16x128xf32> to vector<16x64xf32>
    %cst_50 = arith.constant 0.000000e+00 : f32
    %173 = vector.broadcast %cst_50 : f32 to vector<16x64xf32>
    %174 = arith.subf %173, %171 : vector<16x64xf32>
    %175 = math.exp %174 : vector<16x64xf32>
    %cst_51 = arith.constant 1.000000e+00 : f32
    %176 = vector.broadcast %cst_51 : f32 to vector<16x64xf32>
    %177 = arith.addf %176, %175 : vector<16x64xf32>
    %178 = tpu.reciprocal %177 {approx = true} : vector<16x64xf32> -> vector<16x64xf32>
    %179 = arith.mulf %171, %178 : vector<16x64xf32>
    %180 = arith.mulf %179, %172 : vector<16x64xf32>
    %c0_52 = arith.constant 0 : index
    %c0_53 = arith.constant 0 : index
    %c0_54 = arith.constant 0 : index
    %181 = vector.load %arg12[%c0_52, %c0_53, %c0_54] : memref<2x64x32xbf16, #tpu.memory_space<vmem>>, vector<1x64x32xbf16>
    %182 = vector.shape_cast %181 : vector<1x64x32xbf16> to vector<64x32xbf16>
    %183 = arith.truncf %180 : vector<16x64xf32> to vector<16x64xbf16>
    %cst_55 = arith.constant dense<0.000000e+00> : vector<16x32xf32>
    %184 = tpu.matmul %183, %182, %cst_55 {dimension_numbers = #tpu.dot_dimension_numbers<[1], [0], [0], [1], [0, 0, 1, 1], [], []>} : vector<16x64xbf16>, vector<64x32xbf16>, vector<16x32xf32> -> vector<16x32xf32>
    %185 = arith.addf %152, %184 : vector<16x32xf32>
    %c1 = arith.constant 1 : index
    %c0_56 = arith.constant 0 : index
    %c0_57 = arith.constant 0 : index
    %186 = vector.load %arg7[%c1, %c0_56, %c0_57] : memref<2x1x32xf32, #tpu.memory_space<vmem>>, vector<1x1x32xf32>
    %187 = vector.shape_cast %186 : vector<1x1x32xf32> to vector<1x32xf32>
    %188 = arith.mulf %185, %185 : vector<16x32xf32>
    %cst_58 = arith.constant dense<0.000000e+00> : vector<16xf32>
    %189 = vector.multi_reduction <add>, %188, %cst_58 [1] : vector<16x32xf32> to vector<16xf32>
    %190 = vector.shape_cast %189 : vector<16xf32> to vector<16x1xf32>
    %cst_59 = arith.constant 3.200000e+01 : f32
    %191 = vector.broadcast %cst_59 : f32 to vector<16x1xf32>
    %192 = arith.divf %190, %191 : vector<16x1xf32>
    %cst_60 = arith.constant 9.99999997E-7 : f32
    %193 = vector.broadcast %cst_60 : f32 to vector<16x1xf32>
    %194 = arith.addf %192, %193 : vector<16x1xf32>
    %195 = math.rsqrt %194 : vector<16x1xf32>
    %196 = vector.broadcast %195 : vector<16x1xf32> to vector<16x32xf32>
    %197 = arith.mulf %185, %196 : vector<16x32xf32>
    %198 = vector.broadcast %187 : vector<1x32xf32> to vector<16x32xf32>
    %199 = arith.mulf %197, %198 : vector<16x32xf32>
    %c1_61 = arith.constant 1 : index
    %c0_62 = arith.constant 0 : index
    %c0_63 = arith.constant 0 : index
    %200 = vector.load %arg8[%c1_61, %c0_62, %c0_63] : memref<2x32x64xbf16, #tpu.memory_space<vmem>>, vector<1x32x64xbf16>
    %201 = vector.shape_cast %200 : vector<1x32x64xbf16> to vector<32x64xbf16>
    %202 = arith.truncf %199 : vector<16x32xf32> to vector<16x32xbf16>
    %cst_64 = arith.constant dense<0.000000e+00> : vector<16x64xf32>
    %203 = tpu.matmul %202, %201, %cst_64 {dimension_numbers = #tpu.dot_dimension_numbers<[1], [0], [0], [1], [0, 0, 1, 1], [], []>} : vector<16x32xbf16>, vector<32x64xbf16>, vector<16x64xf32> -> vector<16x64xf32>
    %204 = vector.extract_strided_slice %203 {offsets = [0, 0], sizes = [16, 32], strides = [1, 1]} : vector<16x64xf32> to vector<16x32xf32>
    %205 = vector.extract_strided_slice %203 {offsets = [0, 32], sizes = [16, 16], strides = [1, 1]} : vector<16x64xf32> to vector<16x16xf32>
    %206 = vector.extract_strided_slice %203 {offsets = [0, 48], sizes = [16, 16], strides = [1, 1]} : vector<16x64xf32> to vector<16x16xf32>
    %207 = vector.extract_strided_slice %204 {offsets = [0, 0], sizes = [16, 16], strides = [1, 1]} : vector<16x32xf32> to vector<16x16xf32>
    %208 = vector.extract_strided_slice %204 {offsets = [0, 16], sizes = [16, 16], strides = [1, 1]} : vector<16x32xf32> to vector<16x16xf32>
    %209 = vector.extract_strided_slice %205 {offsets = [0, 0], sizes = [16, 8], strides = [1, 1]} : vector<16x16xf32> to vector<16x8xf32>
    %210 = vector.extract_strided_slice %205 {offsets = [0, 8], sizes = [16, 8], strides = [1, 1]} : vector<16x16xf32> to vector<16x8xf32>
    %211 = arith.mulf %207, %1 : vector<16x16xf32>
    %212 = arith.mulf %208, %2 : vector<16x16xf32>
    %213 = arith.subf %211, %212 : vector<16x16xf32>
    %214 = arith.mulf %207, %2 : vector<16x16xf32>
    %215 = arith.mulf %208, %1 : vector<16x16xf32>
    %216 = arith.addf %214, %215 : vector<16x16xf32>
    %217 = arith.mulf %209, %3 : vector<16x8xf32>
    %218 = arith.mulf %210, %4 : vector<16x8xf32>
    %219 = arith.subf %217, %218 : vector<16x8xf32>
    %220 = arith.mulf %209, %4 : vector<16x8xf32>
    %221 = arith.mulf %210, %3 : vector<16x8xf32>
    %222 = arith.addf %220, %221 : vector<16x8xf32>
    %223 = vector.extract_strided_slice %219 {offsets = [0, 0], sizes = [16, 4], strides = [1, 1]} : vector<16x8xf32> to vector<16x4xf32>
    %224 = vector.extract_strided_slice %222 {offsets = [0, 0], sizes = [16, 4], strides = [1, 1]} : vector<16x8xf32> to vector<16x4xf32>
    %225 = tpu.concatenate %223, %224 in 1 : vector<16x4xf32>, vector<16x4xf32> -> vector<16x8xf32>
    %226 = vector.shape_cast %225 : vector<16x8xf32> to vector<2x8x8xf32>
    %227 = arith.truncf %226 : vector<2x8x8xf32> to vector<2x8x8xbf16>
    %228 = vector.extract_strided_slice %206 {offsets = [0, 0], sizes = [16, 8], strides = [1, 1]} : vector<16x16xf32> to vector<16x8xf32>
    %229 = vector.shape_cast %228 : vector<16x8xf32> to vector<2x8x8xf32>
    %230 = arith.truncf %229 : vector<2x8x8xf32> to vector<2x8x8xbf16>
    %231 = vector.extract_strided_slice %219 {offsets = [0, 4], sizes = [16, 4], strides = [1, 1]} : vector<16x8xf32> to vector<16x4xf32>
    %232 = vector.extract_strided_slice %222 {offsets = [0, 4], sizes = [16, 4], strides = [1, 1]} : vector<16x8xf32> to vector<16x4xf32>
    %233 = tpu.concatenate %231, %232 in 1 : vector<16x4xf32>, vector<16x4xf32> -> vector<16x8xf32>
    %234 = vector.shape_cast %233 : vector<16x8xf32> to vector<2x8x8xf32>
    %235 = arith.truncf %234 : vector<2x8x8xf32> to vector<2x8x8xbf16>
    %236 = vector.extract_strided_slice %206 {offsets = [0, 8], sizes = [16, 8], strides = [1, 1]} : vector<16x16xf32> to vector<16x8xf32>
    %237 = vector.shape_cast %236 : vector<16x8xf32> to vector<2x8x8xf32>
    %238 = arith.truncf %237 : vector<2x8x8xf32> to vector<2x8x8xbf16>
    %239 = vector.extract_strided_slice %213 {offsets = [0, 0], sizes = [16, 4], strides = [1, 1]} : vector<16x16xf32> to vector<16x4xf32>
    %240 = vector.extract_strided_slice %216 {offsets = [0, 0], sizes = [16, 4], strides = [1, 1]} : vector<16x16xf32> to vector<16x4xf32>
    %241 = tpu.concatenate %239, %240 in 1 : vector<16x4xf32>, vector<16x4xf32> -> vector<16x8xf32>
    %242 = vector.shape_cast %241 : vector<16x8xf32> to vector<2x8x8xf32>
    %243 = arith.truncf %242 : vector<2x8x8xf32> to vector<2x8x8xbf16>
    "tpu.trace_start"() <{level = 10 : i32, message = "bqd,bkd->bqk"}> : () -> ()
    %cst_65 = arith.constant dense<0.000000e+00> : vector<2x8x8xf32>
    %244 = tpu.matmul %243, %227, %cst_65 {dimension_numbers = #tpu.dot_dimension_numbers<[2], [2], [1], [1], [0, 0, 0, 1, 1, 1], [0], [0]>} : vector<2x8x8xbf16>, vector<2x8x8xbf16>, vector<2x8x8xf32> -> vector<2x8x8xf32>
    "tpu.trace_stop"() : () -> ()
    %245 = vector.shape_cast %5 : vector<8x8xf32> to vector<1x8x8xf32>
    %246 = vector.broadcast %245 : vector<1x8x8xf32> to vector<2x8x8xf32>
    %247 = arith.addf %244, %246 : vector<2x8x8xf32>
    %cst_66 = arith.constant dense<0xFF800000> : vector<2x8xf32>
    %248 = vector.multi_reduction <maximumf>, %247, %cst_66 [2] : vector<2x8x8xf32> to vector<2x8xf32>
    %249 = vector.shape_cast %248 : vector<2x8xf32> to vector<2x8x1xf32>
    %250 = vector.broadcast %249 : vector<2x8x1xf32> to vector<2x8x8xf32>
    %251 = arith.subf %247, %250 : vector<2x8x8xf32>
    %252 = math.exp %251 : vector<2x8x8xf32>
    %cst_67 = arith.constant dense<0.000000e+00> : vector<2x8xf32>
    %253 = vector.multi_reduction <add>, %252, %cst_67 [2] : vector<2x8x8xf32> to vector<2x8xf32>
    %254 = vector.shape_cast %253 : vector<2x8xf32> to vector<2x8x1xf32>
    %255 = tpu.reciprocal %254 {approx = true} : vector<2x8x1xf32> -> vector<2x8x1xf32>
    %256 = vector.broadcast %255 : vector<2x8x1xf32> to vector<2x8x8xf32>
    %257 = arith.mulf %252, %256 : vector<2x8x8xf32>
    %258 = arith.truncf %257 : vector<2x8x8xf32> to vector<2x8x8xbf16>
    "tpu.trace_start"() <{level = 10 : i32, message = "bqk,bkd->bqd"}> : () -> ()
    %cst_68 = arith.constant dense<0.000000e+00> : vector<2x8x8xf32>
    %259 = tpu.matmul %258, %230, %cst_68 {dimension_numbers = #tpu.dot_dimension_numbers<[2], [1], [1], [2], [0, 0, 0, 1, 1, 2], [0], [0]>} : vector<2x8x8xbf16>, vector<2x8x8xbf16>, vector<2x8x8xf32> -> vector<2x8x8xf32>
    "tpu.trace_stop"() : () -> ()
    %260 = vector.shape_cast %259 : vector<2x8x8xf32> to vector<16x8xf32>
    %261 = vector.extract_strided_slice %213 {offsets = [0, 4], sizes = [16, 4], strides = [1, 1]} : vector<16x16xf32> to vector<16x4xf32>
    %262 = vector.extract_strided_slice %216 {offsets = [0, 4], sizes = [16, 4], strides = [1, 1]} : vector<16x16xf32> to vector<16x4xf32>
    %263 = tpu.concatenate %261, %262 in 1 : vector<16x4xf32>, vector<16x4xf32> -> vector<16x8xf32>
    %264 = vector.shape_cast %263 : vector<16x8xf32> to vector<2x8x8xf32>
    %265 = arith.truncf %264 : vector<2x8x8xf32> to vector<2x8x8xbf16>
    "tpu.trace_start"() <{level = 10 : i32, message = "bqd,bkd->bqk"}> : () -> ()
    %cst_69 = arith.constant dense<0.000000e+00> : vector<2x8x8xf32>
    %266 = tpu.matmul %265, %227, %cst_69 {dimension_numbers = #tpu.dot_dimension_numbers<[2], [2], [1], [1], [0, 0, 0, 1, 1, 1], [0], [0]>} : vector<2x8x8xbf16>, vector<2x8x8xbf16>, vector<2x8x8xf32> -> vector<2x8x8xf32>
    "tpu.trace_stop"() : () -> ()
    %267 = vector.shape_cast %5 : vector<8x8xf32> to vector<1x8x8xf32>
    %268 = vector.broadcast %267 : vector<1x8x8xf32> to vector<2x8x8xf32>
    %269 = arith.addf %266, %268 : vector<2x8x8xf32>
    %cst_70 = arith.constant dense<0xFF800000> : vector<2x8xf32>
    %270 = vector.multi_reduction <maximumf>, %269, %cst_70 [2] : vector<2x8x8xf32> to vector<2x8xf32>
    %271 = vector.shape_cast %270 : vector<2x8xf32> to vector<2x8x1xf32>
    %272 = vector.broadcast %271 : vector<2x8x1xf32> to vector<2x8x8xf32>
    %273 = arith.subf %269, %272 : vector<2x8x8xf32>
    %274 = math.exp %273 : vector<2x8x8xf32>
    %cst_71 = arith.constant dense<0.000000e+00> : vector<2x8xf32>
    %275 = vector.multi_reduction <add>, %274, %cst_71 [2] : vector<2x8x8xf32> to vector<2x8xf32>
    %276 = vector.shape_cast %275 : vector<2x8xf32> to vector<2x8x1xf32>
    %277 = tpu.reciprocal %276 {approx = true} : vector<2x8x1xf32> -> vector<2x8x1xf32>
    %278 = vector.broadcast %277 : vector<2x8x1xf32> to vector<2x8x8xf32>
    %279 = arith.mulf %274, %278 : vector<2x8x8xf32>
    %280 = arith.truncf %279 : vector<2x8x8xf32> to vector<2x8x8xbf16>
    "tpu.trace_start"() <{level = 10 : i32, message = "bqk,bkd->bqd"}> : () -> ()
    %cst_72 = arith.constant dense<0.000000e+00> : vector<2x8x8xf32>
    %281 = tpu.matmul %280, %230, %cst_72 {dimension_numbers = #tpu.dot_dimension_numbers<[2], [1], [1], [2], [0, 0, 0, 1, 1, 2], [0], [0]>} : vector<2x8x8xbf16>, vector<2x8x8xbf16>, vector<2x8x8xf32> -> vector<2x8x8xf32>
    "tpu.trace_stop"() : () -> ()
    %282 = vector.shape_cast %281 : vector<2x8x8xf32> to vector<16x8xf32>
    %283 = vector.extract_strided_slice %213 {offsets = [0, 8], sizes = [16, 4], strides = [1, 1]} : vector<16x16xf32> to vector<16x4xf32>
    %284 = vector.extract_strided_slice %216 {offsets = [0, 8], sizes = [16, 4], strides = [1, 1]} : vector<16x16xf32> to vector<16x4xf32>
    %285 = tpu.concatenate %283, %284 in 1 : vector<16x4xf32>, vector<16x4xf32> -> vector<16x8xf32>
    %286 = vector.shape_cast %285 : vector<16x8xf32> to vector<2x8x8xf32>
    %287 = arith.truncf %286 : vector<2x8x8xf32> to vector<2x8x8xbf16>
    "tpu.trace_start"() <{level = 10 : i32, message = "bqd,bkd->bqk"}> : () -> ()
    %cst_73 = arith.constant dense<0.000000e+00> : vector<2x8x8xf32>
    %288 = tpu.matmul %287, %235, %cst_73 {dimension_numbers = #tpu.dot_dimension_numbers<[2], [2], [1], [1], [0, 0, 0, 1, 1, 1], [0], [0]>} : vector<2x8x8xbf16>, vector<2x8x8xbf16>, vector<2x8x8xf32> -> vector<2x8x8xf32>
    "tpu.trace_stop"() : () -> ()
    %289 = vector.shape_cast %5 : vector<8x8xf32> to vector<1x8x8xf32>
    %290 = vector.broadcast %289 : vector<1x8x8xf32> to vector<2x8x8xf32>
    %291 = arith.addf %288, %290 : vector<2x8x8xf32>
    %cst_74 = arith.constant dense<0xFF800000> : vector<2x8xf32>
    %292 = vector.multi_reduction <maximumf>, %291, %cst_74 [2] : vector<2x8x8xf32> to vector<2x8xf32>
    %293 = vector.shape_cast %292 : vector<2x8xf32> to vector<2x8x1xf32>
    %294 = vector.broadcast %293 : vector<2x8x1xf32> to vector<2x8x8xf32>
    %295 = arith.subf %291, %294 : vector<2x8x8xf32>
    %296 = math.exp %295 : vector<2x8x8xf32>
    %cst_75 = arith.constant dense<0.000000e+00> : vector<2x8xf32>
    %297 = vector.multi_reduction <add>, %296, %cst_75 [2] : vector<2x8x8xf32> to vector<2x8xf32>
    %298 = vector.shape_cast %297 : vector<2x8xf32> to vector<2x8x1xf32>
    %299 = tpu.reciprocal %298 {approx = true} : vector<2x8x1xf32> -> vector<2x8x1xf32>
    %300 = vector.broadcast %299 : vector<2x8x1xf32> to vector<2x8x8xf32>
    %301 = arith.mulf %296, %300 : vector<2x8x8xf32>
    %302 = arith.truncf %301 : vector<2x8x8xf32> to vector<2x8x8xbf16>
    "tpu.trace_start"() <{level = 10 : i32, message = "bqk,bkd->bqd"}> : () -> ()
    %cst_76 = arith.constant dense<0.000000e+00> : vector<2x8x8xf32>
    %303 = tpu.matmul %302, %238, %cst_76 {dimension_numbers = #tpu.dot_dimension_numbers<[2], [1], [1], [2], [0, 0, 0, 1, 1, 2], [0], [0]>} : vector<2x8x8xbf16>, vector<2x8x8xbf16>, vector<2x8x8xf32> -> vector<2x8x8xf32>
    "tpu.trace_stop"() : () -> ()
    %304 = vector.shape_cast %303 : vector<2x8x8xf32> to vector<16x8xf32>
    %305 = vector.extract_strided_slice %213 {offsets = [0, 12], sizes = [16, 4], strides = [1, 1]} : vector<16x16xf32> to vector<16x4xf32>
    %306 = vector.extract_strided_slice %216 {offsets = [0, 12], sizes = [16, 4], strides = [1, 1]} : vector<16x16xf32> to vector<16x4xf32>
    %307 = tpu.concatenate %305, %306 in 1 : vector<16x4xf32>, vector<16x4xf32> -> vector<16x8xf32>
    %308 = vector.shape_cast %307 : vector<16x8xf32> to vector<2x8x8xf32>
    %309 = arith.truncf %308 : vector<2x8x8xf32> to vector<2x8x8xbf16>
    "tpu.trace_start"() <{level = 10 : i32, message = "bqd,bkd->bqk"}> : () -> ()
    %cst_77 = arith.constant dense<0.000000e+00> : vector<2x8x8xf32>
    %310 = tpu.matmul %309, %235, %cst_77 {dimension_numbers = #tpu.dot_dimension_numbers<[2], [2], [1], [1], [0, 0, 0, 1, 1, 1], [0], [0]>} : vector<2x8x8xbf16>, vector<2x8x8xbf16>, vector<2x8x8xf32> -> vector<2x8x8xf32>
    "tpu.trace_stop"() : () -> ()
    %311 = vector.shape_cast %5 : vector<8x8xf32> to vector<1x8x8xf32>
    %312 = vector.broadcast %311 : vector<1x8x8xf32> to vector<2x8x8xf32>
    %313 = arith.addf %310, %312 : vector<2x8x8xf32>
    %cst_78 = arith.constant dense<0xFF800000> : vector<2x8xf32>
    %314 = vector.multi_reduction <maximumf>, %313, %cst_78 [2] : vector<2x8x8xf32> to vector<2x8xf32>
    %315 = vector.shape_cast %314 : vector<2x8xf32> to vector<2x8x1xf32>
    %316 = vector.broadcast %315 : vector<2x8x1xf32> to vector<2x8x8xf32>
    %317 = arith.subf %313, %316 : vector<2x8x8xf32>
    %318 = math.exp %317 : vector<2x8x8xf32>
    %cst_79 = arith.constant dense<0.000000e+00> : vector<2x8xf32>
    %319 = vector.multi_reduction <add>, %318, %cst_79 [2] : vector<2x8x8xf32> to vector<2x8xf32>
    %320 = vector.shape_cast %319 : vector<2x8xf32> to vector<2x8x1xf32>
    %321 = tpu.reciprocal %320 {approx = true} : vector<2x8x1xf32> -> vector<2x8x1xf32>
    %322 = vector.broadcast %321 : vector<2x8x1xf32> to vector<2x8x8xf32>
    %323 = arith.mulf %318, %322 : vector<2x8x8xf32>
    %324 = arith.truncf %323 : vector<2x8x8xf32> to vector<2x8x8xbf16>
    "tpu.trace_start"() <{level = 10 : i32, message = "bqk,bkd->bqd"}> : () -> ()
    %cst_80 = arith.constant dense<0.000000e+00> : vector<2x8x8xf32>
    %325 = tpu.matmul %324, %238, %cst_80 {dimension_numbers = #tpu.dot_dimension_numbers<[2], [1], [1], [2], [0, 0, 0, 1, 1, 2], [0], [0]>} : vector<2x8x8xbf16>, vector<2x8x8xbf16>, vector<2x8x8xf32> -> vector<2x8x8xf32>
    "tpu.trace_stop"() : () -> ()
    %326 = vector.shape_cast %325 : vector<2x8x8xf32> to vector<16x8xf32>
    %327 = tpu.concatenate %260, %282, %304, %326 in 1 : vector<16x8xf32>, vector<16x8xf32>, vector<16x8xf32>, vector<16x8xf32> -> vector<16x32xf32>
    %c1_81 = arith.constant 1 : index
    %c0_82 = arith.constant 0 : index
    %c0_83 = arith.constant 0 : index
    %328 = vector.load %arg9[%c1_81, %c0_82, %c0_83] : memref<2x32x32xbf16, #tpu.memory_space<vmem>>, vector<1x32x32xbf16>
    %329 = vector.shape_cast %328 : vector<1x32x32xbf16> to vector<32x32xbf16>
    %330 = arith.truncf %327 : vector<16x32xf32> to vector<16x32xbf16>
    %cst_84 = arith.constant dense<0.000000e+00> : vector<16x32xf32>
    %331 = tpu.matmul %330, %329, %cst_84 {dimension_numbers = #tpu.dot_dimension_numbers<[1], [0], [0], [1], [0, 0, 1, 1], [], []>} : vector<16x32xbf16>, vector<32x32xbf16>, vector<16x32xf32> -> vector<16x32xf32>
    %332 = arith.addf %185, %331 : vector<16x32xf32>
    %c1_85 = arith.constant 1 : index
    %c0_86 = arith.constant 0 : index
    %c0_87 = arith.constant 0 : index
    %333 = vector.load %arg10[%c1_85, %c0_86, %c0_87] : memref<2x1x32xf32, #tpu.memory_space<vmem>>, vector<1x1x32xf32>
    %334 = vector.shape_cast %333 : vector<1x1x32xf32> to vector<1x32xf32>
    %335 = arith.mulf %332, %332 : vector<16x32xf32>
    %cst_88 = arith.constant dense<0.000000e+00> : vector<16xf32>
    %336 = vector.multi_reduction <add>, %335, %cst_88 [1] : vector<16x32xf32> to vector<16xf32>
    %337 = vector.shape_cast %336 : vector<16xf32> to vector<16x1xf32>
    %cst_89 = arith.constant 3.200000e+01 : f32
    %338 = vector.broadcast %cst_89 : f32 to vector<16x1xf32>
    %339 = arith.divf %337, %338 : vector<16x1xf32>
    %cst_90 = arith.constant 9.99999997E-7 : f32
    %340 = vector.broadcast %cst_90 : f32 to vector<16x1xf32>
    %341 = arith.addf %339, %340 : vector<16x1xf32>
    %342 = math.rsqrt %341 : vector<16x1xf32>
    %343 = vector.broadcast %342 : vector<16x1xf32> to vector<16x32xf32>
    %344 = arith.mulf %332, %343 : vector<16x32xf32>
    %345 = vector.broadcast %334 : vector<1x32xf32> to vector<16x32xf32>
    %346 = arith.mulf %344, %345 : vector<16x32xf32>
    %c1_91 = arith.constant 1 : index
    %c0_92 = arith.constant 0 : index
    %c0_93 = arith.constant 0 : index
    %347 = vector.load %arg11[%c1_91, %c0_92, %c0_93] : memref<2x32x128xbf16, #tpu.memory_space<vmem>>, vector<1x32x128xbf16>
    %348 = vector.shape_cast %347 : vector<1x32x128xbf16> to vector<32x128xbf16>
    %349 = arith.truncf %346 : vector<16x32xf32> to vector<16x32xbf16>
    %cst_94 = arith.constant dense<0.000000e+00> : vector<16x128xf32>
    %350 = tpu.matmul %349, %348, %cst_94 {dimension_numbers = #tpu.dot_dimension_numbers<[1], [0], [0], [1], [0, 0, 1, 1], [], []>} : vector<16x32xbf16>, vector<32x128xbf16>, vector<16x128xf32> -> vector<16x128xf32>
    %351 = vector.extract_strided_slice %350 {offsets = [0, 0], sizes = [16, 64], strides = [1, 1]} : vector<16x128xf32> to vector<16x64xf32>
    %352 = vector.extract_strided_slice %350 {offsets = [0, 64], sizes = [16, 64], strides = [1, 1]} : vector<16x128xf32> to vector<16x64xf32>
    %cst_95 = arith.constant 0.000000e+00 : f32
    %353 = vector.broadcast %cst_95 : f32 to vector<16x64xf32>
    %354 = arith.subf %353, %351 : vector<16x64xf32>
    %355 = math.exp %354 : vector<16x64xf32>
    %cst_96 = arith.constant 1.000000e+00 : f32
    %356 = vector.broadcast %cst_96 : f32 to vector<16x64xf32>
    %357 = arith.addf %356, %355 : vector<16x64xf32>
    %358 = tpu.reciprocal %357 {approx = true} : vector<16x64xf32> -> vector<16x64xf32>
    %359 = arith.mulf %351, %358 : vector<16x64xf32>
    %360 = arith.mulf %359, %352 : vector<16x64xf32>
    %c1_97 = arith.constant 1 : index
    %c0_98 = arith.constant 0 : index
    %c0_99 = arith.constant 0 : index
    %361 = vector.load %arg12[%c1_97, %c0_98, %c0_99] : memref<2x64x32xbf16, #tpu.memory_space<vmem>>, vector<1x64x32xbf16>
    %362 = vector.shape_cast %361 : vector<1x64x32xbf16> to vector<64x32xbf16>
    %363 = arith.truncf %360 : vector<16x64xf32> to vector<16x64xbf16>
    %cst_100 = arith.constant dense<0.000000e+00> : vector<16x32xf32>
    %364 = tpu.matmul %363, %362, %cst_100 {dimension_numbers = #tpu.dot_dimension_numbers<[1], [0], [0], [1], [0, 0, 1, 1], [], []>} : vector<16x64xbf16>, vector<64x32xbf16>, vector<16x32xf32> -> vector<16x32xf32>
    %365 = arith.addf %332, %364 : vector<16x32xf32>
    %c0_101 = arith.constant 0 : index
    %c0_102 = arith.constant 0 : index
    %366 = vector.load %arg13[%c0_101, %c0_102] : memref<1x32xf32, #tpu.memory_space<vmem>>, vector<1x32xf32>
    %367 = arith.mulf %365, %365 : vector<16x32xf32>
    %cst_103 = arith.constant dense<0.000000e+00> : vector<16xf32>
    %368 = vector.multi_reduction <add>, %367, %cst_103 [1] : vector<16x32xf32> to vector<16xf32>
    %369 = vector.shape_cast %368 : vector<16xf32> to vector<16x1xf32>
    %cst_104 = arith.constant 3.200000e+01 : f32
    %370 = vector.broadcast %cst_104 : f32 to vector<16x1xf32>
    %371 = arith.divf %369, %370 : vector<16x1xf32>
    %cst_105 = arith.constant 9.99999997E-7 : f32
    %372 = vector.broadcast %cst_105 : f32 to vector<16x1xf32>
    %373 = arith.addf %371, %372 : vector<16x1xf32>
    %374 = math.rsqrt %373 : vector<16x1xf32>
    %375 = vector.broadcast %374 : vector<16x1xf32> to vector<16x32xf32>
    %376 = arith.mulf %365, %375 : vector<16x32xf32>
    %377 = vector.broadcast %366 : vector<1x32xf32> to vector<16x32xf32>
    %378 = arith.mulf %376, %377 : vector<16x32xf32>
    %c0_106 = arith.constant 0 : index
    %c0_107 = arith.constant 0 : index
    %379 = vector.load %arg14[%c0_106, %c0_107] : memref<32x128xbf16, #tpu.memory_space<vmem>>, vector<32x128xbf16>
    %380 = arith.truncf %378 : vector<16x32xf32> to vector<16x32xbf16>
    %cst_108 = arith.constant dense<0.000000e+00> : vector<16x128xf32>
    %381 = tpu.matmul %380, %379, %cst_108 {dimension_numbers = #tpu.dot_dimension_numbers<[1], [0], [0], [1], [0, 0, 1, 1], [], []>} : vector<16x32xbf16>, vector<32x128xbf16>, vector<16x128xf32> -> vector<16x128xf32>
    %c0_109 = arith.constant 0 : index
    %c0_110 = arith.constant 0 : index
    %382 = vector.load %arg15[%c0_109, %c0_110] : memref<16x128xf32, #tpu.memory_space<vmem>>, vector<16x128xf32>
    tpu.vector_store %arg15[%c0_109, %c0_110], %381 {strides = array<i32>} : memref<16x128xf32, #tpu.memory_space<vmem>>, vector<16x128xf32>,
    return
  }
  func.func @transform_0(%arg0: i32) -> (i32, i32) {
    %c0_i32 = arith.constant 0 : i32
    %c0_i32_0 = arith.constant 0 : i32
    %c0_i32_1 = arith.constant 0 : i32
    return %c0_i32, %c0_i32_0 : i32, i32
  }
  func.func @transform_1(%arg0: i32) -> (i32, i32) {
    %c0_i32 = arith.constant 0 : i32
    %c0_i32_0 = arith.constant 0 : i32
    %c0_i32_1 = arith.constant 0 : i32
    return %c0_i32, %c0_i32_0 : i32, i32
  }
  func.func @transform_2(%arg0: i32) -> (i32, i32) {
    %c0_i32 = arith.constant 0 : i32
    %c0_i32_0 = arith.constant 0 : i32
    %c0_i32_1 = arith.constant 0 : i32
    return %c0_i32, %c0_i32_0 : i32, i32
  }
  func.func @transform_3(%arg0: i32) -> (i32, i32) {
    %c0_i32 = arith.constant 0 : i32
    %c0_i32_0 = arith.constant 0 : i32
    %c0_i32_1 = arith.constant 0 : i32
    return %c0_i32, %c0_i32_0 : i32, i32
  }
  func.func @transform_4(%arg0: i32) -> (i32, i32) {
    %c0_i32 = arith.constant 0 : i32
    %c0_i32_0 = arith.constant 0 : i32
    %c0_i32_1 = arith.constant 0 : i32
    return %c0_i32, %c0_i32_0 : i32, i32
  }
  func.func @transform_5(%arg0: i32) -> (i32, i32) {
    %c0_i32 = arith.constant 0 : i32
    %c0_i32_0 = arith.constant 0 : i32
    %c0_i32_1 = arith.constant 0 : i32
    return %c0_i32, %c0_i32_0 : i32, i32
  }
  func.func @transform_6(%arg0: i32) -> (i32, i32, i32) {
    %c0_i32 = arith.constant 0 : i32
    %c0_i32_0 = arith.constant 0 : i32
    %c0_i32_1 = arith.constant 0 : i32
    %c0_i32_2 = arith.constant 0 : i32
    return %c0_i32, %c0_i32_0, %c0_i32_1 : i32, i32, i32
  }
  func.func @transform_7(%arg0: i32) -> (i32, i32, i32) {
    %c0_i32 = arith.constant 0 : i32
    %c0_i32_0 = arith.constant 0 : i32
    %c0_i32_1 = arith.constant 0 : i32
    %c0_i32_2 = arith.constant 0 : i32
    return %c0_i32, %c0_i32_0, %c0_i32_1 : i32, i32, i32
  }
  func.func @transform_8(%arg0: i32) -> (i32, i32, i32) {
    %c0_i32 = arith.constant 0 : i32
    %c0_i32_0 = arith.constant 0 : i32
    %c0_i32_1 = arith.constant 0 : i32
    %c0_i32_2 = arith.constant 0 : i32
    return %c0_i32, %c0_i32_0, %c0_i32_1 : i32, i32, i32
  }
  func.func @transform_9(%arg0: i32) -> (i32, i32, i32) {
    %c0_i32 = arith.constant 0 : i32
    %c0_i32_0 = arith.constant 0 : i32
    %c0_i32_1 = arith.constant 0 : i32
    %c0_i32_2 = arith.constant 0 : i32
    return %c0_i32, %c0_i32_0, %c0_i32_1 : i32, i32, i32
  }
  func.func @transform_10(%arg0: i32) -> (i32, i32, i32) {
    %c0_i32 = arith.constant 0 : i32
    %c0_i32_0 = arith.constant 0 : i32
    %c0_i32_1 = arith.constant 0 : i32
    %c0_i32_2 = arith.constant 0 : i32
    return %c0_i32, %c0_i32_0, %c0_i32_1 : i32, i32, i32
  }
  func.func @transform_11(%arg0: i32) -> (i32, i32, i32) {
    %c0_i32 = arith.constant 0 : i32
    %c0_i32_0 = arith.constant 0 : i32
    %c0_i32_1 = arith.constant 0 : i32
    %c0_i32_2 = arith.constant 0 : i32
    return %c0_i32, %c0_i32_0, %c0_i32_1 : i32, i32, i32
  }
  func.func @transform_12(%arg0: i32) -> (i32, i32) {
    %c0_i32 = arith.constant 0 : i32
    %c0_i32_0 = arith.constant 0 : i32
    %c0_i32_1 = arith.constant 0 : i32
    return %c0_i32, %c0_i32_0 : i32, i32
  }
  func.func @transform_13(%arg0: i32) -> (i32, i32) {
    %c0_i32 = arith.constant 0 : i32
    %c0_i32_0 = arith.constant 0 : i32
    %c0_i32_1 = arith.constant 0 : i32
    return %c0_i32, %c0_i32_0 : i32, i32
  }
  func.func @transform_14(%arg0: i32) -> (i32, i32) {
    %c0_i32 = arith.constant 0 : i32
    %c0_i32_0 = arith.constant 0 : i32
    %c0_i32_1 = arith.constant 0 : i32
    return %c0_i32, %c0_i32_0 : i32, i32
  }
}

</mosaic_0001>

<llo_original>
// kernel: transformer_forward.1
$region0: #{transformer_forward.1}
  #allocation0 [shape = 'u32[]', space=smem, size = 0x4, offset = 0x4, fixed_abs, tag = 'smem constant byte address 0x4 - core index']
  #allocation1 [shape = 'u32[144,128]{1,0:T(1,128)}', space=vmem, size = 0x12000, scoped, tag = 'internal scratch']
  %s0 = inlined_call_operand.vmem [shape: f32[16,32], index: 0, kind: input, shape index: {}]
  %s1 = inlined_call_operand.vmem [shape: f32[16,16], index: 1, kind: input, shape index: {}]
  %s2 = inlined_call_operand.vmem [shape: f32[16,16], index: 2, kind: input, shape index: {}]
  %s3 = inlined_call_operand.vmem [shape: f32[16,8], index: 3, kind: input, shape index: {}]
  %s4 = inlined_call_operand.vmem [shape: f32[16,8], index: 4, kind: input, shape index: {}]
  %s5 = inlined_call_operand.vmem [shape: f32[8,8], index: 5, kind: input, shape index: {}]
  %s6 = inlined_call_operand.vmem [shape: f32[2,1,32], index: 6, kind: input, shape index: {}]
  %s7 = inlined_call_operand.vmem [shape: bf16[2,32,64], index: 7, kind: input, shape index: {}]
  %s8 = inlined_call_operand.vmem [shape: bf16[2,32,32], index: 8, kind: input, shape index: {}]
  %s9 = inlined_call_operand.vmem [shape: f32[2,1,32], index: 9, kind: input, shape index: {}]
  %s10 = inlined_call_operand.vmem [shape: bf16[2,32,128], index: 10, kind: input, shape index: {}]
  %s11 = inlined_call_operand.vmem [shape: bf16[2,64,32], index: 11, kind: input, shape index: {}]
  %s12 = inlined_call_operand.vmem [shape: f32[1,32], index: 12, kind: input, shape index: {}]
  %s13 = inlined_call_operand.vmem [shape: bf16[32,128], index: 13, kind: input, shape index: {}]
  %s14 = inlined_call_operand.vmem [shape: f32[16,128], index: 14, kind: output, shape index: {}]
  %s15 = sld [smem:[#allocation0]]
  $region66: #{transformer_forward.1} parent=0
    _
  %s17 = ssub.s32 1, %s15
  %s18 = scalar_select 0, %s17, %s15
  // Predicated region
  $region2: #{transformer_forward.1} parent=0 // pred_check
    _
  $region3: #{transformer_forward.1} parent=0 // pred_check_branch
    %20 = sbr.rel (0) target = $region5
  $region4: #{transformer_forward.1} parent=0 // pred_region
    _
  $region5: #{transformer_forward.1} parent=0 // pred_fallthru
    _
  // Predicated region
  $region6: #{transformer_forward.1} parent=0 // pred_check
    _
  $region7: #{transformer_forward.1} parent=0 // pred_check_branch
    %22 = sbr.rel (0) target = $region9
  $region8: #{transformer_forward.1} parent=0 // pred_region
    _
  $region9: #{transformer_forward.1} parent=0 // pred_fallthru
    _
  // Predicated region
  $region10: #{transformer_forward.1} parent=0 // pred_check
    _
  $region11: #{transformer_forward.1} parent=0 // pred_check_branch
    %24 = sbr.rel (0) target = $region13
  $region12: #{transformer_forward.1} parent=0 // pred_region
    _
  $region13: #{transformer_forward.1} parent=0 // pred_fallthru
    _
  // Predicated region
  $region14: #{transformer_forward.1} parent=0 // pred_check
    _
  $region15: #{transformer_forward.1} parent=0 // pred_check_branch
    %26 = sbr.rel (0) target = $region17
  $region16: #{transformer_forward.1} parent=0 // pred_region
    _
  $region17: #{transformer_forward.1} parent=0 // pred_fallthru
    _
  // Predicated region
  $region18: #{transformer_forward.1} parent=0 // pred_check
    _
  $region19: #{transformer_forward.1} parent=0 // pred_check_branch
    %28 = sbr.rel (0) target = $region21
  $region20: #{transformer_forward.1} parent=0 // pred_region
    _
  $region21: #{transformer_forward.1} parent=0 // pred_fallthru
    _
  // Predicated region
  $region22: #{transformer_forward.1} parent=0 // pred_check
    _
  $region23: #{transformer_forward.1} parent=0 // pred_check_branch
    %30 = sbr.rel (0) target = $region25
  $region24: #{transformer_forward.1} parent=0 // pred_region
    _
  $region25: #{transformer_forward.1} parent=0 // pred_fallthru
    _
  // Predicated region
  $region26: #{transformer_forward.1} parent=0 // pred_check
    _
  $region27: #{transformer_forward.1} parent=0 // pred_check_branch
    %32 = sbr.rel (0) target = $region29
  $region28: #{transformer_forward.1} parent=0 // pred_region
    _
  $region29: #{transformer_forward.1} parent=0 // pred_fallthru
    _
  // Predicated region
  $region30: #{transformer_forward.1} parent=0 // pred_check
    _
  $region31: #{transformer_forward.1} parent=0 // pred_check_branch
    %34 = sbr.rel (0) target = $region33
  $region32: #{transformer_forward.1} parent=0 // pred_region
    _
  $region33: #{transformer_forward.1} parent=0 // pred_fallthru
    _
  // Predicated region
  $region34: #{transformer_forward.1} parent=0 // pred_check
    _
  $region35: #{transformer_forward.1} parent=0 // pred_check_branch
    %36 = sbr.rel (0) target = $region37
  $region36: #{transformer_forward.1} parent=0 // pred_region
    _
  $region37: #{transformer_forward.1} parent=0 // pred_fallthru
    _
  // Predicated region
  $region38: #{transformer_forward.1} parent=0 // pred_check
    _
  $region39: #{transformer_forward.1} parent=0 // pred_check_branch
    %38 = sbr.rel (0) target = $region41
  $region40: #{transformer_forward.1} parent=0 // pred_region
    _
  $region41: #{transformer_forward.1} parent=0 // pred_fallthru
    _
  // Predicated region
  $region42: #{transformer_forward.1} parent=0 // pred_check
    _
  $region43: #{transformer_forward.1} parent=0 // pred_check_branch
    %40 = sbr.rel (0) target = $region45
  $region44: #{transformer_forward.1} parent=0 // pred_region
    _
  $region45: #{transformer_forward.1} parent=0 // pred_fallthru
    _
  // Predicated region
  $region46: #{transformer_forward.1} parent=0 // pred_check
    _
  $region47: #{transformer_forward.1} parent=0 // pred_check_branch
    %42 = sbr.rel (0) target = $region49
  $region48: #{transformer_forward.1} parent=0 // pred_region
    _
  $region49: #{transformer_forward.1} parent=0 // pred_fallthru
    _
  // Predicated region
  $region50: #{transformer_forward.1} parent=0 // pred_check
    _
  $region51: #{transformer_forward.1} parent=0 // pred_check_branch
    %44 = sbr.rel (0) target = $region53
  $region52: #{transformer_forward.1} parent=0 // pred_region
    _
  $region53: #{transformer_forward.1} parent=0 // pred_fallthru
    _
  // Predicated region
  $region54: #{transformer_forward.1} parent=0 // pred_check
    _
  $region55: #{transformer_forward.1} parent=0 // pred_check_branch
    %46 = sbr.rel (0) target = $region57
  $region56: #{transformer_forward.1} parent=0 // pred_region
    _
  $region57: #{transformer_forward.1} parent=0 // pred_fallthru
    _
  %v48 = vld [vmem:[%s0] sm:$0xff]
  %v49 = vld [vmem:[%s0 + $0x8] sm:$0xff]
  %v50 = vld [vmem:[%s1] sm:$0xff]
  %v51 = vld [vmem:[%s1 + $0x8] sm:$0xff]
  %v52 = vld [vmem:[%s2] sm:$0xff]
  %v53 = vld [vmem:[%s2 + $0x8] sm:$0xff]
  %v54 = vld [vmem:[%s3] sm:$0xff]
  %v55 = vld [vmem:[%s3 + $0x8] sm:$0xff]
  %v56 = vld [vmem:[%s4] sm:$0xff]
  %v57 = vld [vmem:[%s4 + $0x8] sm:$0xff]
  %v58 = vld [vmem:[%s5] sm:$0xff]
  %v59 = vld [vmem:[%s6] sm:$0x1]
  %v60 = vmul.f32 %v48, %v48
  %v61 = vmul.f32 %v49, %v49
  %vm62 = vcmask 261120
  %v63 = vsel %vm62, %v60, 0.0
  %64 = vadd.xlane.f32.xlu0 %v63
  %v65 = vpop.xlane.xlu0 %64
  %v66 = vsel %vm62, %v61, 0.0
  %67 = vadd.xlane.f32.xlu0 %v66
  %v68 = vpop.xlane.xlu0 %67
  %v69 = vrcp.pop 32.0
  %v70 = vmul.f32 %v65, %v69
  %v71 = vmul.f32 %v68, %v69
  %v72 = vadd.f32 %v70, 1e-06
  %v73 = vadd.f32 %v71, 1e-06
  %v74 = vrsqrt.pop %v72
  %v75 = vrsqrt.pop %v73
  %v76 = vmul.f32 %v48, %v74
  %v77 = vmul.f32 %v49, %v75
  %v79 = vlaneseq
  %v80 = vshrl.u32 %v79, 7
  %v81 = vsub.s32 0, %v80
  %v82 = vrot.slane %v59, %v81
  %v84 = vmul.f32 %v76, %v82
  %v85 = vmul.f32 %v77, %v82
  %v86 = vld [vmem:[%s7] sm:$0xf]
  %v87 = vld [vmem:[%s7 + $0x4] sm:$0xf]
  %v88 = vld [vmem:[%s7 + $0x8] sm:$0xf]
  %v89 = vld [vmem:[%s7 + $0xc] sm:$0xf]
  %v90 = vpack.c.bf16 %v85, %v84
  %v95 = vunpack.c.l.b16 %v86
  %v96 = vunpack.c.l.b16 %v87
  %v97 = vunpack.c.l.b16 %v88
  %v98 = vunpack.c.l.b16 %v89
  %v99 = vpack.c.b16 %v96, %v95
  %v100 = vpack.c.b16 %v98, %v97
  %v104 = vsel %vm62, %v90, 0
  %106 = vmatprep.subr.bf16.mxu0 0
  %107 = vmatpush1.bf16.msra.mxu0 %v99
  %108 = vmatprep.subr.bf16.mxu0 0
  %109 = vmatpush1.bf16.msra.mxu0 %v100
  %110 = vmatprep.subr.bf16.mxu0 0
  %111 = vmatpush1.bf16.msra.mxu0 0
  %112 = vmatprep.subr.bf16.mxu0 0
  %113 = vmatpush1.bf16.msra.mxu0 0
  %114 = vmatprep.subr.bf16.mxu0 0
  %115 = vmatpush1.bf16.msra.mxu0 0
  %116 = vmatprep.subr.bf16.mxu0 0
  %117 = vmatpush1.bf16.msra.mxu0 0
  %118 = vmatprep.subr.bf16.mxu0 0
  %119 = vmatpush1.bf16.msra.mxu0 0
  %120 = vmatprep.subr.bf16.mxu0 0
  %121 = vmatpush1.bf16.msra.mxu0 0
  %122 = vmatprep.subr.bf16.mxu0 0
  %123 = vmatpush1.bf16.msra.mxu0 0
  %124 = vmatprep.subr.bf16.mxu0 0
  %125 = vmatpush1.bf16.msra.mxu0 0
  %126 = vmatprep.subr.bf16.mxu0 0
  %127 = vmatpush1.bf16.msra.mxu0 0
  %128 = vmatprep.subr.bf16.mxu0 0
  %129 = vmatpush1.bf16.msra.mxu0 0
  %130 = vmatprep.subr.bf16.mxu0 0
  %131 = vmatpush1.bf16.msra.mxu0 0
  %132 = vmatprep.subr.bf16.mxu0 0
  %133 = vmatpush1.bf16.msra.mxu0 0
  %134 = vmatprep.subr.bf16.mxu0 0
  %135 = vmatpush1.bf16.msra.mxu0 0
  %136 = vmatprep.subr.bf16.mxu0 0
  %137 = vmatpush1.bf16.msra.mxu0 0
  %138 = vmatprep.mubr.bf16.mxu0 0
  %139 = vmatmul.mubr.bf16.gmra.mrb[0].mxu0 %v104
  %v140 = vpop.f32.mrb[0].mxu0
  %v141 = vadd.f32 0.0, %v140
  %v142 = vpop.f32.mrb[0].mxu0
  %v143 = vpop.f32.mrb[0].mxu0
  %v144 = vadd.f32 0.0, %v143
  %v145 = vpop.f32.mrb[0].mxu0
  %146 = vdwg.mxu0
  %v147 = vmul.f32 %v141, %v50
  %v148 = vmul.f32 %v144, %v51
  %151 = vrot.lane.b32.xlu0 %v52, 16
  %v152 = vpop.permute.xlu0 %151
  %153 = vrot.lane.b32.xlu0 %v53, 16
  %v154 = vpop.permute.xlu0 %153
  %v157 = vmul.f32 %v141, %v152
  %v158 = vmul.f32 %v144, %v154
  %161 = vrot.lane.b32.xlu0 %v157, 112
  %v162 = vpop.permute.xlu0 %161
  %163 = vrot.lane.b32.xlu0 %v158, 112
  %v164 = vpop.permute.xlu0 %163
  %v167 = vsub.f32 %v147, %v162
  %v168 = vsub.f32 %v148, %v164
  %v169 = vmul.f32 %v141, %v52
  %v170 = vmul.f32 %v144, %v53
  %173 = vrot.lane.b32.xlu0 %v50, 16
  %v174 = vpop.permute.xlu0 %173
  %175 = vrot.lane.b32.xlu0 %v51, 16
  %v176 = vpop.permute.xlu0 %175
  %v179 = vmul.f32 %v141, %v174
  %v180 = vmul.f32 %v144, %v176
  %183 = vrot.lane.b32.xlu0 %v179, 112
  %v184 = vpop.permute.xlu0 %183
  %185 = vrot.lane.b32.xlu0 %v180, 112
  %v186 = vpop.permute.xlu0 %185
  %v189 = vadd.f32 %v169, %v184
  %v190 = vadd.f32 %v170, %v186
  %193 = vrot.lane.b32.xlu0 %v54, 32
  %v194 = vpop.permute.xlu0 %193
  %195 = vrot.lane.b32.xlu0 %v55, 32
  %v196 = vpop.permute.xlu0 %195
  %v199 = vmul.f32 %v141, %v194
  %v200 = vmul.f32 %v144, %v196
  %203 = vrot.lane.b32.xlu0 %v56, 40
  %v204 = vpop.permute.xlu0 %203
  %205 = vrot.lane.b32.xlu0 %v57, 40
  %v206 = vpop.permute.xlu0 %205
  %v209 = vmul.f32 %v141, %v204
  %v210 = vmul.f32 %v144, %v206
  %213 = vrot.lane.b32.xlu0 %v209, 120
  %v214 = vpop.permute.xlu0 %213
  %215 = vrot.lane.b32.xlu0 %v210, 120
  %v216 = vpop.permute.xlu0 %215
  %v219 = vsub.f32 %v199, %v214
  %v220 = vsub.f32 %v200, %v216
  %221 = vrot.lane.b32.xlu0 %v56, 32
  %v222 = vpop.permute.xlu0 %221
  %223 = vrot.lane.b32.xlu0 %v57, 32
  %v224 = vpop.permute.xlu0 %223
  %v227 = vmul.f32 %v141, %v222
  %v228 = vmul.f32 %v144, %v224
  %229 = vrot.lane.b32.xlu0 %v54, 40
  %v230 = vpop.permute.xlu0 %229
  %231 = vrot.lane.b32.xlu0 %v55, 40
  %v232 = vpop.permute.xlu0 %231
  %v235 = vmul.f32 %v141, %v230
  %v236 = vmul.f32 %v144, %v232
  %239 = vrot.lane.b32.xlu0 %v235, 120
  %v240 = vpop.permute.xlu0 %239
  %241 = vrot.lane.b32.xlu0 %v236, 120
  %v242 = vpop.permute.xlu0 %241
  %v245 = vadd.f32 %v227, %v240
  %v246 = vadd.f32 %v228, %v242
  %249 = vrot.lane.b32.xlu0 %v219, 96
  %v250 = vpop.permute.xlu0 %249
  %251 = vrot.lane.b32.xlu0 %v220, 96
  %v252 = vpop.permute.xlu0 %251
  %257 = vrot.lane.b32.xlu0 %v245, 100
  %v258 = vpop.permute.xlu0 %257
  %259 = vrot.lane.b32.xlu0 %v246, 100
  %v260 = vpop.permute.xlu0 %259
  %vm263 = vcmask 31744
  %v264 = vsel %vm263, %v250, %v258
  %v265 = vsel %vm263, %v252, %v260
  %v266 = vpack.c.bf16 %v264, %v264
  %v267 = vpack.c.bf16 %v265, %v265
  %v268 = vpack.c.bf16 %v141, %v141
  %v269 = vpack.c.bf16 %v144, %v144
  %270 = vrot.lane.b32.xlu0 %v219, 92
  %v271 = vpop.permute.xlu0 %270
  %272 = vrot.lane.b32.xlu0 %v220, 92
  %v273 = vpop.permute.xlu0 %272
  %276 = vrot.lane.b32.xlu0 %v245, 96
  %v277 = vpop.permute.xlu0 %276
  %278 = vrot.lane.b32.xlu0 %v246, 96
  %v279 = vpop.permute.xlu0 %278
  %v282 = vsel %vm263, %v271, %v277
  %v283 = vsel %vm263, %v273, %v279
  %v284 = vpack.c.bf16 %v282, %v282
  %v285 = vpack.c.bf16 %v283, %v283
  %288 = vrot.lane.b32.xlu0 %v189, 4
  %v289 = vpop.permute.xlu0 %288
  %290 = vrot.lane.b32.xlu0 %v190, 4
  %v291 = vpop.permute.xlu0 %290
  %v294 = vsel %vm263, %v167, %v289
  %v295 = vsel %vm263, %v168, %v291
  %v296 = vpack.c.bf16 %v294, %v294
  %v297 = vpack.c.bf16 %v295, %v295
  %vm298 = vcmask 64512
  %v300 = vsel %vm298, %v296, 0
  %v303 = vsel %vm298, %v266, 0
  %305 = vmatprep.subr.bf16.mxu0 0
  %306 = vmatpush1.bf16.xpose.msra.mxu0 %v303
  %307 = vmatprep.subr.bf16.mxu0 0
  %308 = vmatpush1.bf16.xpose.msra.mxu0 0
  %309 = vmatprep.subr.bf16.mxu0 0
  %310 = vmatpush1.bf16.xpose.msra.mxu0 0
  %311 = vmatprep.subr.bf16.mxu0 0
  %312 = vmatpush1.bf16.xpose.msra.mxu0 0
  %313 = vmatprep.subr.bf16.mxu0 0
  %314 = vmatpush1.bf16.xpose.msra.mxu0 0
  %315 = vmatprep.subr.bf16.mxu0 0
  %316 = vmatpush1.bf16.xpose.msra.mxu0 0
  %317 = vmatprep.subr.bf16.mxu0 0
  %318 = vmatpush1.bf16.xpose.msra.mxu0 0
  %319 = vmatprep.subr.bf16.mxu0 0
  %320 = vmatpush1.bf16.xpose.msra.mxu0 0
  %321 = vmatprep.subr.bf16.mxu0 0
  %322 = vmatpush1.bf16.xpose.msra.mxu0 0
  %323 = vmatprep.subr.bf16.mxu0 0
  %324 = vmatpush1.bf16.xpose.msra.mxu0 0
  %325 = vmatprep.subr.bf16.mxu0 0
  %326 = vmatpush1.bf16.xpose.msra.mxu0 0
  %327 = vmatprep.subr.bf16.mxu0 0
  %328 = vmatpush1.bf16.xpose.msra.mxu0 0
  %329 = vmatprep.subr.bf16.mxu0 0
  %330 = vmatpush1.bf16.xpose.msra.mxu0 0
  %331 = vmatprep.subr.bf16.mxu0 0
  %332 = vmatpush1.bf16.xpose.msra.mxu0 0
  %333 = vmatprep.subr.bf16.mxu0 0
  %334 = vmatpush1.bf16.xpose.msra.mxu0 0
  %335 = vmatprep.subr.bf16.mxu0 0
  %336 = vmatpush1.bf16.xpose.msra.mxu0 0
  %337 = vmatprep.mubr.bf16.mxu0 0
  %338 = vmatmul.mubr.bf16.gmra.mrb[0].mxu0 %v300
  %v339 = vpop.f32.mrb[0].mxu0
  %v340 = vadd.f32 %v58, %v339
  %v341 = vpop.f32.mrb[0].mxu0
  %v342 = vpop.f32.mrb[0].mxu0
  %v343 = vpop.f32.mrb[0].mxu0
  %344 = vdwg.mxu0
  %v346 = vsel %vm298, %v297, 0
  %v349 = vsel %vm298, %v267, 0
  %351 = vmatprep.subr.bf16.mxu0 0
  %352 = vmatpush1.bf16.xpose.msra.mxu0 %v349
  %353 = vmatprep.subr.bf16.mxu0 0
  %354 = vmatpush1.bf16.xpose.msra.mxu0 0
  %355 = vmatprep.subr.bf16.mxu0 0
  %356 = vmatpush1.bf16.xpose.msra.mxu0 0
  %357 = vmatprep.subr.bf16.mxu0 0
  %358 = vmatpush1.bf16.xpose.msra.mxu0 0
  %359 = vmatprep.subr.bf16.mxu0 0
  %360 = vmatpush1.bf16.xpose.msra.mxu0 0
  %361 = vmatprep.subr.bf16.mxu0 0
  %362 = vmatpush1.bf16.xpose.msra.mxu0 0
  %363 = vmatprep.subr.bf16.mxu0 0
  %364 = vmatpush1.bf16.xpose.msra.mxu0 0
  %365 = vmatprep.subr.bf16.mxu0 0
  %366 = vmatpush1.bf16.xpose.msra.mxu0 0
  %367 = vmatprep.subr.bf16.mxu0 0
  %368 = vmatpush1.bf16.xpose.msra.mxu0 0
  %369 = vmatprep.subr.bf16.mxu0 0
  %370 = vmatpush1.bf16.xpose.msra.mxu0 0
  %371 = vmatprep.subr.bf16.mxu0 0
  %372 = vmatpush1.bf16.xpose.msra.mxu0 0
  %373 = vmatprep.subr.bf16.mxu0 0
  %374 = vmatpush1.bf16.xpose.msra.mxu0 0
  %375 = vmatprep.subr.bf16.mxu0 0
  %376 = vmatpush1.bf16.xpose.msra.mxu0 0
  %377 = vmatprep.subr.bf16.mxu0 0
  %378 = vmatpush1.bf16.xpose.msra.mxu0 0
  %379 = vmatprep.subr.bf16.mxu0 0
  %380 = vmatpush1.bf16.xpose.msra.mxu0 0
  %381 = vmatprep.subr.bf16.mxu0 0
  %382 = vmatpush1.bf16.xpose.msra.mxu0 0
  %383 = vmatprep.mubr.bf16.mxu0 0
  %384 = vmatmul.mubr.bf16.gmra.mrb[0].mxu0 %v346
  %v385 = vpop.f32.mrb[0].mxu0
  %v386 = vadd.f32 %v58, %v385
  %v387 = vpop.f32.mrb[0].mxu0
  %v388 = vpop.f32.mrb[0].mxu0
  %v389 = vpop.f32.mrb[0].mxu0
  %390 = vdwg.mxu0
  %v391 = vsel %vm298, %v340, -inf
  %392 = vmax.xlane.f32.xlu0 %v391
  %v393 = vpop.xlane.xlu0 %392
  %v394 = vsel %vm298, %v386, -inf
  %395 = vmax.xlane.f32.xlu0 %v394
  %v396 = vpop.xlane.xlu0 %395
  %v397 = vsub.f32 %v340, %v393
  %v398 = vsub.f32 %v386, %v396
  %v399 = vmul.f32 %v397, 1.442695
  %v400 = vpow.pop %v399
  %v401 = vmul.f32 %v398, 1.442695
  %v402 = vpow.pop %v401
  %v403 = vsel %vm298, %v400, 0.0
  %404 = vadd.xlane.f32.xlu0 %v403
  %v405 = vpop.xlane.xlu0 %404
  %v406 = vsel %vm298, %v402, 0.0
  %407 = vadd.xlane.f32.xlu0 %v406
  %v408 = vpop.xlane.xlu0 %407
  %v409 = vrcp.pop %v405
  %v410 = vrcp.pop %v408
  %v411 = vmul.f32 %v400, %v409
  %v412 = vmul.f32 %v402, %v410
  %v413 = vpack.c.bf16 %v411, %v411
  %v414 = vpack.c.bf16 %v412, %v412
  %416 = vrot.lane.b32.xlu0 %v268, 80
  %v417 = vpop.permute.xlu0 %416
  %v419 = vsel %vm298, %v413, 0
  %vm421 = vcmask 1043456
  %v423 = vsel %vm421, %v417, 0
  %425 = vmatprep.subr.bf16.mxu0 0
  %426 = vmatpush1.bf16.msra.mxu0 %v423
  %427 = vmatprep.subr.bf16.mxu0 0
  %428 = vmatpush1.bf16.msra.mxu0 0
  %429 = vmatprep.subr.bf16.mxu0 0
  %430 = vmatpush1.bf16.msra.mxu0 0
  %431 = vmatprep.subr.bf16.mxu0 0
  %432 = vmatpush1.bf16.msra.mxu0 0
  %433 = vmatprep.subr.bf16.mxu0 0
  %434 = vmatpush1.bf16.msra.mxu0 0
  %435 = vmatprep.subr.bf16.mxu0 0
  %436 = vmatpush1.bf16.msra.mxu0 0
  %437 = vmatprep.subr.bf16.mxu0 0
  %438 = vmatpush1.bf16.msra.mxu0 0
  %439 = vmatprep.subr.bf16.mxu0 0
  %440 = vmatpush1.bf16.msra.mxu0 0
  %441 = vmatprep.subr.bf16.mxu0 0
  %442 = vmatpush1.bf16.msra.mxu0 0
  %443 = vmatprep.subr.bf16.mxu0 0
  %444 = vmatpush1.bf16.msra.mxu0 0
  %445 = vmatprep.subr.bf16.mxu0 0
  %446 = vmatpush1.bf16.msra.mxu0 0
  %447 = vmatprep.subr.bf16.mxu0 0
  %448 = vmatpush1.bf16.msra.mxu0 0
  %449 = vmatprep.subr.bf16.mxu0 0
  %450 = vmatpush1.bf16.msra.mxu0 0
  %451 = vmatprep.subr.bf16.mxu0 0
  %452 = vmatpush1.bf16.msra.mxu0 0
  %453 = vmatprep.subr.bf16.mxu0 0
  %454 = vmatpush1.bf16.msra.mxu0 0
  %455 = vmatprep.subr.bf16.mxu0 0
  %456 = vmatpush1.bf16.msra.mxu0 0
  %457 = vmatprep.mubr.bf16.mxu0 0
  %458 = vmatmul.mubr.bf16.gmra.mrb[0].mxu0 %v419
  %v459 = vpop.f32.mrb[0].mxu0
  %v460 = vadd.f32 0.0, %v459
  %v461 = vpop.f32.mrb[0].mxu0
  %v462 = vpop.f32.mrb[0].mxu0
  %v463 = vpop.f32.mrb[0].mxu0
  %464 = vdwg.mxu0
  %466 = vrot.lane.b32.xlu0 %v269, 80
  %v467 = vpop.permute.xlu0 %466
  %v469 = vsel %vm298, %v414, 0
  %v472 = vsel %vm421, %v467, 0
  %474 = vmatprep.subr.bf16.mxu0 0
  %475 = vmatpush1.bf16.msra.mxu0 %v472
  %476 = vmatprep.subr.bf16.mxu0 0
  %477 = vmatpush1.bf16.msra.mxu0 0
  %478 = vmatprep.subr.bf16.mxu0 0
  %479 = vmatpush1.bf16.msra.mxu0 0
  %480 = vmatprep.subr.bf16.mxu0 0
  %481 = vmatpush1.bf16.msra.mxu0 0
  %482 = vmatprep.subr.bf16.mxu0 0
  %483 = vmatpush1.bf16.msra.mxu0 0
  %484 = vmatprep.subr.bf16.mxu0 0
  %485 = vmatpush1.bf16.msra.mxu0 0
  %486 = vmatprep.subr.bf16.mxu0 0
  %487 = vmatpush1.bf16.msra.mxu0 0
  %488 = vmatprep.subr.bf16.mxu0 0
  %489 = vmatpush1.bf16.msra.mxu0 0
  %490 = vmatprep.subr.bf16.mxu0 0
  %491 = vmatpush1.bf16.msra.mxu0 0
  %492 = vmatprep.subr.bf16.mxu0 0
  %493 = vmatpush1.bf16.msra.mxu0 0
  %494 = vmatprep.subr.bf16.mxu0 0
  %495 = vmatpush1.bf16.msra.mxu0 0
  %496 = vmatprep.subr.bf16.mxu0 0
  %497 = vmatpush1.bf16.msra.mxu0 0
  %498 = vmatprep.subr.bf16.mxu0 0
  %499 = vmatpush1.bf16.msra.mxu0 0
  %500 = vmatprep.subr.bf16.mxu0 0
  %501 = vmatpush1.bf16.msra.mxu0 0
  %502 = vmatprep.subr.bf16.mxu0 0
  %503 = vmatpush1.bf16.msra.mxu0 0
  %504 = vmatprep.subr.bf16.mxu0 0
  %505 = vmatpush1.bf16.msra.mxu0 0
  %506 = vmatprep.mubr.bf16.mxu0 0
  %507 = vmatmul.mubr.bf16.gmra.mrb[0].mxu0 %v469
  %v508 = vpop.f32.mrb[0].mxu0
  %v509 = vadd.f32 0.0, %v508
  %v510 = vpop.f32.mrb[0].mxu0
  %v511 = vpop.f32.mrb[0].mxu0
  %v512 = vpop.f32.mrb[0].mxu0
  %513 = vdwg.mxu0
  %516 = vrot.lane.b32.xlu0 %v167, 124
  %v517 = vpop.permute.xlu0 %516
  %518 = vrot.lane.b32.xlu0 %v168, 124
  %v519 = vpop.permute.xlu0 %518
  %v522 = vsel %vm263, %v517, %v189
  %v523 = vsel %vm263, %v519, %v190
  %v524 = vpack.c.bf16 %v522, %v522
  %v525 = vpack.c.bf16 %v523, %v523
  %v527 = vsel %vm298, %v524, 0
  %529 = vmatprep.subr.bf16.mxu0 0
  %530 = vmatpush1.bf16.xpose.msra.mxu0 %v303
  %531 = vmatprep.subr.bf16.mxu0 0
  %532 = vmatpush1.bf16.xpose.msra.mxu0 0
  %533 = vmatprep.subr.bf16.mxu0 0
  %534 = vmatpush1.bf16.xpose.msra.mxu0 0
  %535 = vmatprep.subr.bf16.mxu0 0
  %536 = vmatpush1.bf16.xpose.msra.mxu0 0
  %537 = vmatprep.subr.bf16.mxu0 0
  %538 = vmatpush1.bf16.xpose.msra.mxu0 0
  %539 = vmatprep.subr.bf16.mxu0 0
  %540 = vmatpush1.bf16.xpose.msra.mxu0 0
  %541 = vmatprep.subr.bf16.mxu0 0
  %542 = vmatpush1.bf16.xpose.msra.mxu0 0
  %543 = vmatprep.subr.bf16.mxu0 0
  %544 = vmatpush1.bf16.xpose.msra.mxu0 0
  %545 = vmatprep.subr.bf16.mxu0 0
  %546 = vmatpush1.bf16.xpose.msra.mxu0 0
  %547 = vmatprep.subr.bf16.mxu0 0
  %548 = vmatpush1.bf16.xpose.msra.mxu0 0
  %549 = vmatprep.subr.bf16.mxu0 0
  %550 = vmatpush1.bf16.xpose.msra.mxu0 0
  %551 = vmatprep.subr.bf16.mxu0 0
  %552 = vmatpush1.bf16.xpose.msra.mxu0 0
  %553 = vmatprep.subr.bf16.mxu0 0
  %554 = vmatpush1.bf16.xpose.msra.mxu0 0
  %555 = vmatprep.subr.bf16.mxu0 0
  %556 = vmatpush1.bf16.xpose.msra.mxu0 0
  %557 = vmatprep.subr.bf16.mxu0 0
  %558 = vmatpush1.bf16.xpose.msra.mxu0 0
  %559 = vmatprep.subr.bf16.mxu0 0
  %560 = vmatpush1.bf16.xpose.msra.mxu0 0
  %561 = vmatprep.mubr.bf16.mxu0 0
  %562 = vmatmul.mubr.bf16.gmra.mrb[0].mxu0 %v527
  %v563 = vpop.f32.mrb[0].mxu0
  %v564 = vadd.f32 %v58, %v563
  %v565 = vpop.f32.mrb[0].mxu0
  %v566 = vpop.f32.mrb[0].mxu0
  %v567 = vpop.f32.mrb[0].mxu0
  %568 = vdwg.mxu0
  %v570 = vsel %vm298, %v525, 0
  %572 = vmatprep.subr.bf16.mxu0 0
  %573 = vmatpush1.bf16.xpose.msra.mxu0 %v349
  %574 = vmatprep.subr.bf16.mxu0 0
  %575 = vmatpush1.bf16.xpose.msra.mxu0 0
  %576 = vmatprep.subr.bf16.mxu0 0
  %577 = vmatpush1.bf16.xpose.msra.mxu0 0
  %578 = vmatprep.subr.bf16.mxu0 0
  %579 = vmatpush1.bf16.xpose.msra.mxu0 0
  %580 = vmatprep.subr.bf16.mxu0 0
  %581 = vmatpush1.bf16.xpose.msra.mxu0 0
  %582 = vmatprep.subr.bf16.mxu0 0
  %583 = vmatpush1.bf16.xpose.msra.mxu0 0
  %584 = vmatprep.subr.bf16.mxu0 0
  %585 = vmatpush1.bf16.xpose.msra.mxu0 0
  %586 = vmatprep.subr.bf16.mxu0 0
  %587 = vmatpush1.bf16.xpose.msra.mxu0 0
  %588 = vmatprep.subr.bf16.mxu0 0
  %589 = vmatpush1.bf16.xpose.msra.mxu0 0
  %590 = vmatprep.subr.bf16.mxu0 0
  %591 = vmatpush1.bf16.xpose.msra.mxu0 0
  %592 = vmatprep.subr.bf16.mxu0 0
  %593 = vmatpush1.bf16.xpose.msra.mxu0 0
  %594 = vmatprep.subr.bf16.mxu0 0
  %595 = vmatpush1.bf16.xpose.msra.mxu0 0
  %596 = vmatprep.subr.bf16.mxu0 0
  %597 = vmatpush1.bf16.xpose.msra.mxu0 0
  %598 = vmatprep.subr.bf16.mxu0 0
  %599 = vmatpush1.bf16.xpose.msra.mxu0 0
  %600 = vmatprep.subr.bf16.mxu0 0
  %601 = vmatpush1.bf16.xpose.msra.mxu0 0
  %602 = vmatprep.subr.bf16.mxu0 0
  %603 = vmatpush1.bf16.xpose.msra.mxu0 0
  %604 = vmatprep.mubr.bf16.mxu0 0
  %605 = vmatmul.mubr.bf16.gmra.mrb[0].mxu0 %v570
  %v606 = vpop.f32.mrb[0].mxu0
  %v607 = vadd.f32 %v58, %v606
  %v608 = vpop.f32.mrb[0].mxu0
  %v609 = vpop.f32.mrb[0].mxu0
  %v610 = vpop.f32.mrb[0].mxu0
  %611 = vdwg.mxu0
  %v612 = vsel %vm298, %v564, -inf
  %613 = vmax.xlane.f32.xlu0 %v612
  %v614 = vpop.xlane.xlu0 %613
  %v615 = vsel %vm298, %v607, -inf
  %616 = vmax.xlane.f32.xlu0 %v615
  %v617 = vpop.xlane.xlu0 %616
  %v618 = vsub.f32 %v564, %v614
  %v619 = vsub.f32 %v607, %v617
  %v620 = vmul.f32 %v618, 1.442695
  %v621 = vpow.pop %v620
  %v622 = vmul.f32 %v619, 1.442695
  %v623 = vpow.pop %v622
  %v624 = vsel %vm298, %v621, 0.0
  %625 = vadd.xlane.f32.xlu0 %v624
  %v626 = vpop.xlane.xlu0 %625
  %v627 = vsel %vm298, %v623, 0.0
  %628 = vadd.xlane.f32.xlu0 %v627
  %v629 = vpop.xlane.xlu0 %628
  %v630 = vrcp.pop %v626
  %v631 = vrcp.pop %v629
  %v632 = vmul.f32 %v621, %v630
  %v633 = vmul.f32 %v623, %v631
  %v634 = vpack.c.bf16 %v632, %v632
  %v635 = vpack.c.bf16 %v633, %v633
  %v637 = vsel %vm298, %v634, 0
  %639 = vmatprep.subr.bf16.mxu0 0
  %640 = vmatpush1.bf16.msra.mxu0 %v423
  %641 = vmatprep.subr.bf16.mxu0 0
  %642 = vmatpush1.bf16.msra.mxu0 0
  %643 = vmatprep.subr.bf16.mxu0 0
  %644 = vmatpush1.bf16.msra.mxu0 0
  %645 = vmatprep.subr.bf16.mxu0 0
  %646 = vmatpush1.bf16.msra.mxu0 0
  %647 = vmatprep.subr.bf16.mxu0 0
  %648 = vmatpush1.bf16.msra.mxu0 0
  %649 = vmatprep.subr.bf16.mxu0 0
  %650 = vmatpush1.bf16.msra.mxu0 0
  %651 = vmatprep.subr.bf16.mxu0 0
  %652 = vmatpush1.bf16.msra.mxu0 0
  %653 = vmatprep.subr.bf16.mxu0 0
  %654 = vmatpush1.bf16.msra.mxu0 0
  %655 = vmatprep.subr.bf16.mxu0 0
  %656 = vmatpush1.bf16.msra.mxu0 0
  %657 = vmatprep.subr.bf16.mxu0 0
  %658 = vmatpush1.bf16.msra.mxu0 0
  %659 = vmatprep.subr.bf16.mxu0 0
  %660 = vmatpush1.bf16.msra.mxu0 0
  %661 = vmatprep.subr.bf16.mxu0 0
  %662 = vmatpush1.bf16.msra.mxu0 0
  %663 = vmatprep.subr.bf16.mxu0 0
  %664 = vmatpush1.bf16.msra.mxu0 0
  %665 = vmatprep.subr.bf16.mxu0 0
  %666 = vmatpush1.bf16.msra.mxu0 0
  %667 = vmatprep.subr.bf16.mxu0 0
  %668 = vmatpush1.bf16.msra.mxu0 0
  %669 = vmatprep.subr.bf16.mxu0 0
  %670 = vmatpush1.bf16.msra.mxu0 0
  %671 = vmatprep.mubr.bf16.mxu0 0
  %672 = vmatmul.mubr.bf16.gmra.mrb[0].mxu0 %v637
  %v673 = vpop.f32.mrb[0].mxu0
  %v674 = vadd.f32 0.0, %v673
  %v675 = vpop.f32.mrb[0].mxu0
  %v676 = vpop.f32.mrb[0].mxu0
  %v677 = vpop.f32.mrb[0].mxu0
  %678 = vdwg.mxu0
  %v680 = vsel %vm298, %v635, 0
  %682 = vmatprep.subr.bf16.mxu0 0
  %683 = vmatpush1.bf16.msra.mxu0 %v472
  %684 = vmatprep.subr.bf16.mxu0 0
  %685 = vmatpush1.bf16.msra.mxu0 0
  %686 = vmatprep.subr.bf16.mxu0 0
  %687 = vmatpush1.bf16.msra.mxu0 0
  %688 = vmatprep.subr.bf16.mxu0 0
  %689 = vmatpush1.bf16.msra.mxu0 0
  %690 = vmatprep.subr.bf16.mxu0 0
  %691 = vmatpush1.bf16.msra.mxu0 0
  %692 = vmatprep.subr.bf16.mxu0 0
  %693 = vmatpush1.bf16.msra.mxu0 0
  %694 = vmatprep.subr.bf16.mxu0 0
  %695 = vmatpush1.bf16.msra.mxu0 0
  %696 = vmatprep.subr.bf16.mxu0 0
  %697 = vmatpush1.bf16.msra.mxu0 0
  %698 = vmatprep.subr.bf16.mxu0 0
  %699 = vmatpush1.bf16.msra.mxu0 0
  %700 = vmatprep.subr.bf16.mxu0 0
  %701 = vmatpush1.bf16.msra.mxu0 0
  %702 = vmatprep.subr.bf16.mxu0 0
  %703 = vmatpush1.bf16.msra.mxu0 0
  %704 = vmatprep.subr.bf16.mxu0 0
  %705 = vmatpush1.bf16.msra.mxu0 0
  %706 = vmatprep.subr.bf16.mxu0 0
  %707 = vmatpush1.bf16.msra.mxu0 0
  %708 = vmatprep.subr.bf16.mxu0 0
  %709 = vmatpush1.bf16.msra.mxu0 0
  %710 = vmatprep.subr.bf16.mxu0 0
  %711 = vmatpush1.bf16.msra.mxu0 0
  %712 = vmatprep.subr.bf16.mxu0 0
  %713 = vmatpush1.bf16.msra.mxu0 0
  %714 = vmatprep.mubr.bf16.mxu0 0
  %715 = vmatmul.mubr.bf16.gmra.mrb[0].mxu0 %v680
  %v716 = vpop.f32.mrb[0].mxu0
  %v717 = vadd.f32 0.0, %v716
  %v718 = vpop.f32.mrb[0].mxu0
  %v719 = vpop.f32.mrb[0].mxu0
  %v720 = vpop.f32.mrb[0].mxu0
  %721 = vdwg.mxu0
  %722 = vrot.lane.b32.xlu0 %v167, 120
  %v723 = vpop.permute.xlu0 %722
  %724 = vrot.lane.b32.xlu0 %v168, 120
  %v725 = vpop.permute.xlu0 %724
  %728 = vrot.lane.b32.xlu0 %v189, 124
  %v729 = vpop.permute.xlu0 %728
  %730 = vrot.lane.b32.xlu0 %v190, 124
  %v731 = vpop.permute.xlu0 %730
  %v734 = vsel %vm263, %v723, %v729
  %v735 = vsel %vm263, %v725, %v731
  %v736 = vpack.c.bf16 %v734, %v734
  %v737 = vpack.c.bf16 %v735, %v735
  %v739 = vsel %vm298, %v736, 0
  %v742 = vsel %vm298, %v284, 0
  %744 = vmatprep.subr.bf16.mxu0 0
  %745 = vmatpush1.bf16.xpose.msra.mxu0 %v742
  %746 = vmatprep.subr.bf16.mxu0 0
  %747 = vmatpush1.bf16.xpose.msra.mxu0 0
  %748 = vmatprep.subr.bf16.mxu0 0
  %749 = vmatpush1.bf16.xpose.msra.mxu0 0
  %750 = vmatprep.subr.bf16.mxu0 0
  %751 = vmatpush1.bf16.xpose.msra.mxu0 0
  %752 = vmatprep.subr.bf16.mxu0 0
  %753 = vmatpush1.bf16.xpose.msra.mxu0 0
  %754 = vmatprep.subr.bf16.mxu0 0
  %755 = vmatpush1.bf16.xpose.msra.mxu0 0
  %756 = vmatprep.subr.bf16.mxu0 0
  %757 = vmatpush1.bf16.xpose.msra.mxu0 0
  %758 = vmatprep.subr.bf16.mxu0 0
  %759 = vmatpush1.bf16.xpose.msra.mxu0 0
  %760 = vmatprep.subr.bf16.mxu0 0
  %761 = vmatpush1.bf16.xpose.msra.mxu0 0
  %762 = vmatprep.subr.bf16.mxu0 0
  %763 = vmatpush1.bf16.xpose.msra.mxu0 0
  %764 = vmatprep.subr.bf16.mxu0 0
  %765 = vmatpush1.bf16.xpose.msra.mxu0 0
  %766 = vmatprep.subr.bf16.mxu0 0
  %767 = vmatpush1.bf16.xpose.msra.mxu0 0
  %768 = vmatprep.subr.bf16.mxu0 0
  %769 = vmatpush1.bf16.xpose.msra.mxu0 0
  %770 = vmatprep.subr.bf16.mxu0 0
  %771 = vmatpush1.bf16.xpose.msra.mxu0 0
  %772 = vmatprep.subr.bf16.mxu0 0
  %773 = vmatpush1.bf16.xpose.msra.mxu0 0
  %774 = vmatprep.subr.bf16.mxu0 0
  %775 = vmatpush1.bf16.xpose.msra.mxu0 0
  %776 = vmatprep.mubr.bf16.mxu0 0
  %777 = vmatmul.mubr.bf16.gmra.mrb[0].mxu0 %v739
  %v778 = vpop.f32.mrb[0].mxu0
  %v779 = vadd.f32 %v58, %v778
  %v780 = vpop.f32.mrb[0].mxu0
  %v781 = vpop.f32.mrb[0].mxu0
  %v782 = vpop.f32.mrb[0].mxu0
  %783 = vdwg.mxu0
  %v785 = vsel %vm298, %v737, 0
  %v788 = vsel %vm298, %v285, 0
  %790 = vmatprep.subr.bf16.mxu0 0
  %791 = vmatpush1.bf16.xpose.msra.mxu0 %v788
  %792 = vmatprep.subr.bf16.mxu0 0
  %793 = vmatpush1.bf16.xpose.msra.mxu0 0
  %794 = vmatprep.subr.bf16.mxu0 0
  %795 = vmatpush1.bf16.xpose.msra.mxu0 0
  %796 = vmatprep.subr.bf16.mxu0 0
  %797 = vmatpush1.bf16.xpose.msra.mxu0 0
  %798 = vmatprep.subr.bf16.mxu0 0
  %799 = vmatpush1.bf16.xpose.msra.mxu0 0
  %800 = vmatprep.subr.bf16.mxu0 0
  %801 = vmatpush1.bf16.xpose.msra.mxu0 0
  %802 = vmatprep.subr.bf16.mxu0 0
  %803 = vmatpush1.bf16.xpose.msra.mxu0 0
  %804 = vmatprep.subr.bf16.mxu0 0
  %805 = vmatpush1.bf16.xpose.msra.mxu0 0
  %806 = vmatprep.subr.bf16.mxu0 0
  %807 = vmatpush1.bf16.xpose.msra.mxu0 0
  %808 = vmatprep.subr.bf16.mxu0 0
  %809 = vmatpush1.bf16.xpose.msra.mxu0 0
  %810 = vmatprep.subr.bf16.mxu0 0
  %811 = vmatpush1.bf16.xpose.msra.mxu0 0
  %812 = vmatprep.subr.bf16.mxu0 0
  %813 = vmatpush1.bf16.xpose.msra.mxu0 0
  %814 = vmatprep.subr.bf16.mxu0 0
  %815 = vmatpush1.bf16.xpose.msra.mxu0 0
  %816 = vmatprep.subr.bf16.mxu0 0
  %817 = vmatpush1.bf16.xpose.msra.mxu0 0
  %818 = vmatprep.subr.bf16.mxu0 0
  %819 = vmatpush1.bf16.xpose.msra.mxu0 0
  %820 = vmatprep.subr.bf16.mxu0 0
  %821 = vmatpush1.bf16.xpose.msra.mxu0 0
  %822 = vmatprep.mubr.bf16.mxu0 0
  %823 = vmatmul.mubr.bf16.gmra.mrb[0].mxu0 %v785
  %v824 = vpop.f32.mrb[0].mxu0
  %v825 = vadd.f32 %v58, %v824
  %v826 = vpop.f32.mrb[0].mxu0
  %v827 = vpop.f32.mrb[0].mxu0
  %v828 = vpop.f32.mrb[0].mxu0
  %829 = vdwg.mxu0
  %v830 = vsel %vm298, %v779, -inf
  %831 = vmax.xlane.f32.xlu0 %v830
  %v832 = vpop.xlane.xlu0 %831
  %v833 = vsel %vm298, %v825, -inf
  %834 = vmax.xlane.f32.xlu0 %v833
  %v835 = vpop.xlane.xlu0 %834
  %v836 = vsub.f32 %v779, %v832
  %v837 = vsub.f32 %v825, %v835
  %v838 = vmul.f32 %v836, 1.442695
  %v839 = vpow.pop %v838
  %v840 = vmul.f32 %v837, 1.442695
  %v841 = vpow.pop %v840
  %v842 = vsel %vm298, %v839, 0.0
  %843 = vadd.xlane.f32.xlu0 %v842
  %v844 = vpop.xlane.xlu0 %843
  %v845 = vsel %vm298, %v841, 0.0
  %846 = vadd.xlane.f32.xlu0 %v845
  %v847 = vpop.xlane.xlu0 %846
  %v848 = vrcp.pop %v844
  %v849 = vrcp.pop %v847
  %v850 = vmul.f32 %v839, %v848
  %v851 = vmul.f32 %v841, %v849
  %v852 = vpack.c.bf16 %v850, %v850
  %v853 = vpack.c.bf16 %v851, %v851
  %854 = vrot.lane.b32.xlu0 %v268, 72
  %v855 = vpop.permute.xlu0 %854
  %v857 = vsel %vm298, %v852, 0
  %v860 = vsel %vm421, %v855, 0
  %862 = vmatprep.subr.bf16.mxu0 0
  %863 = vmatpush1.bf16.msra.mxu0 %v860
  %864 = vmatprep.subr.bf16.mxu0 0
  %865 = vmatpush1.bf16.msra.mxu0 0
  %866 = vmatprep.subr.bf16.mxu0 0
  %867 = vmatpush1.bf16.msra.mxu0 0
  %868 = vmatprep.subr.bf16.mxu0 0
  %869 = vmatpush1.bf16.msra.mxu0 0
  %870 = vmatprep.subr.bf16.mxu0 0
  %871 = vmatpush1.bf16.msra.mxu0 0
  %872 = vmatprep.subr.bf16.mxu0 0
  %873 = vmatpush1.bf16.msra.mxu0 0
  %874 = vmatprep.subr.bf16.mxu0 0
  %875 = vmatpush1.bf16.msra.mxu0 0
  %876 = vmatprep.subr.bf16.mxu0 0
  %877 = vmatpush1.bf16.msra.mxu0 0
  %878 = vmatprep.subr.bf16.mxu0 0
  %879 = vmatpush1.bf16.msra.mxu0 0
  %880 = vmatprep.subr.bf16.mxu0 0
  %881 = vmatpush1.bf16.msra.mxu0 0
  %882 = vmatprep.subr.bf16.mxu0 0
  %883 = vmatpush1.bf16.msra.mxu0 0
  %884 = vmatprep.subr.bf16.mxu0 0
  %885 = vmatpush1.bf16.msra.mxu0 0
  %886 = vmatprep.subr.bf16.mxu0 0
  %887 = vmatpush1.bf16.msra.mxu0 0
  %888 = vmatprep.subr.bf16.mxu0 0
  %889 = vmatpush1.bf16.msra.mxu0 0
  %890 = vmatprep.subr.bf16.mxu0 0
  %891 = vmatpush1.bf16.msra.mxu0 0
  %892 = vmatprep.subr.bf16.mxu0 0
  %893 = vmatpush1.bf16.msra.mxu0 0
  %894 = vmatprep.mubr.bf16.mxu0 0
  %895 = vmatmul.mubr.bf16.gmra.mrb[0].mxu0 %v857
  %v896 = vpop.f32.mrb[0].mxu0
  %v897 = vadd.f32 0.0, %v896
  %v898 = vpop.f32.mrb[0].mxu0
  %v899 = vpop.f32.mrb[0].mxu0
  %v900 = vpop.f32.mrb[0].mxu0
  %901 = vdwg.mxu0
  %902 = vrot.lane.b32.xlu0 %v269, 72
  %v903 = vpop.permute.xlu0 %902
  %v905 = vsel %vm298, %v853, 0
  %v908 = vsel %vm421, %v903, 0
  %910 = vmatprep.subr.bf16.mxu0 0
  %911 = vmatpush1.bf16.msra.mxu0 %v908
  %912 = vmatprep.subr.bf16.mxu0 0
  %913 = vmatpush1.bf16.msra.mxu0 0
  %914 = vmatprep.subr.bf16.mxu0 0
  %915 = vmatpush1.bf16.msra.mxu0 0
  %916 = vmatprep.subr.bf16.mxu0 0
  %917 = vmatpush1.bf16.msra.mxu0 0
  %918 = vmatprep.subr.bf16.mxu0 0
  %919 = vmatpush1.bf16.msra.mxu0 0
  %920 = vmatprep.subr.bf16.mxu0 0
  %921 = vmatpush1.bf16.msra.mxu0 0
  %922 = vmatprep.subr.bf16.mxu0 0
  %923 = vmatpush1.bf16.msra.mxu0 0
  %924 = vmatprep.subr.bf16.mxu0 0
  %925 = vmatpush1.bf16.msra.mxu0 0
  %926 = vmatprep.subr.bf16.mxu0 0
  %927 = vmatpush1.bf16.msra.mxu0 0
  %928 = vmatprep.subr.bf16.mxu0 0
  %929 = vmatpush1.bf16.msra.mxu0 0
  %930 = vmatprep.subr.bf16.mxu0 0
  %931 = vmatpush1.bf16.msra.mxu0 0
  %932 = vmatprep.subr.bf16.mxu0 0
  %933 = vmatpush1.bf16.msra.mxu0 0
  %934 = vmatprep.subr.bf16.mxu0 0
  %935 = vmatpush1.bf16.msra.mxu0 0
  %936 = vmatprep.subr.bf16.mxu0 0
  %937 = vmatpush1.bf16.msra.mxu0 0
  %938 = vmatprep.subr.bf16.mxu0 0
  %939 = vmatpush1.bf16.msra.mxu0 0
  %940 = vmatprep.subr.bf16.mxu0 0
  %941 = vmatpush1.bf16.msra.mxu0 0
  %942 = vmatprep.mubr.bf16.mxu0 0
  %943 = vmatmul.mubr.bf16.gmra.mrb[0].mxu0 %v905
  %v944 = vpop.f32.mrb[0].mxu0
  %v945 = vadd.f32 0.0, %v944
  %v946 = vpop.f32.mrb[0].mxu0
  %v947 = vpop.f32.mrb[0].mxu0
  %v948 = vpop.f32.mrb[0].mxu0
  %949 = vdwg.mxu0
  %950 = vrot.lane.b32.xlu0 %v167, 116
  %v951 = vpop.permute.xlu0 %950
  %952 = vrot.lane.b32.xlu0 %v168, 116
  %v953 = vpop.permute.xlu0 %952
  %956 = vrot.lane.b32.xlu0 %v189, 120
  %v957 = vpop.permute.xlu0 %956
  %958 = vrot.lane.b32.xlu0 %v190, 120
  %v959 = vpop.permute.xlu0 %958
  %v962 = vsel %vm263, %v951, %v957
  %v963 = vsel %vm263, %v953, %v959
  %v964 = vpack.c.bf16 %v962, %v962
  %v965 = vpack.c.bf16 %v963, %v963
  %v967 = vsel %vm298, %v964, 0
  %969 = vmatprep.subr.bf16.mxu0 0
  %970 = vmatpush1.bf16.xpose.msra.mxu0 %v742
  %971 = vmatprep.subr.bf16.mxu0 0
  %972 = vmatpush1.bf16.xpose.msra.mxu0 0
  %973 = vmatprep.subr.bf16.mxu0 0
  %974 = vmatpush1.bf16.xpose.msra.mxu0 0
  %975 = vmatprep.subr.bf16.mxu0 0
  %976 = vmatpush1.bf16.xpose.msra.mxu0 0
  %977 = vmatprep.subr.bf16.mxu0 0
  %978 = vmatpush1.bf16.xpose.msra.mxu0 0
  %979 = vmatprep.subr.bf16.mxu0 0
  %980 = vmatpush1.bf16.xpose.msra.mxu0 0
  %981 = vmatprep.subr.bf16.mxu0 0
  %982 = vmatpush1.bf16.xpose.msra.mxu0 0
  %983 = vmatprep.subr.bf16.mxu0 0
  %984 = vmatpush1.bf16.xpose.msra.mxu0 0
  %985 = vmatprep.subr.bf16.mxu0 0
  %986 = vmatpush1.bf16.xpose.msra.mxu0 0
  %987 = vmatprep.subr.bf16.mxu0 0
  %988 = vmatpush1.bf16.xpose.msra.mxu0 0
  %989 = vmatprep.subr.bf16.mxu0 0
  %990 = vmatpush1.bf16.xpose.msra.mxu0 0
  %991 = vmatprep.subr.bf16.mxu0 0
  %992 = vmatpush1.bf16.xpose.msra.mxu0 0
  %993 = vmatprep.subr.bf16.mxu0 0
  %994 = vmatpush1.bf16.xpose.msra.mxu0 0
  %995 = vmatprep.subr.bf16.mxu0 0
  %996 = vmatpush1.bf16.xpose.msra.mxu0 0
  %997 = vmatprep.subr.bf16.mxu0 0
  %998 = vmatpush1.bf16.xpose.msra.mxu0 0
  %999 = vmatprep.subr.bf16.mxu0 0
  %1000 = vmatpush1.bf16.xpose.msra.mxu0 0
  %1001 = vmatprep.mubr.bf16.mxu0 0
  %1002 = vmatmul.mubr.bf16.gmra.mrb[0].mxu0 %v967
  %v1003 = vpop.f32.mrb[0].mxu0
  %v1004 = vadd.f32 %v58, %v1003
  %v1005 = vpop.f32.mrb[0].mxu0
  %v1006 = vpop.f32.mrb[0].mxu0
  %v1007 = vpop.f32.mrb[0].mxu0
  %1008 = vdwg.mxu0
  %v1010 = vsel %vm298, %v965, 0
  %1012 = vmatprep.subr.bf16.mxu0 0
  %1013 = vmatpush1.bf16.xpose.msra.mxu0 %v788
  %1014 = vmatprep.subr.bf16.mxu0 0
  %1015 = vmatpush1.bf16.xpose.msra.mxu0 0
  %1016 = vmatprep.subr.bf16.mxu0 0
  %1017 = vmatpush1.bf16.xpose.msra.mxu0 0
  %1018 = vmatprep.subr.bf16.mxu0 0
  %1019 = vmatpush1.bf16.xpose.msra.mxu0 0
  %1020 = vmatprep.subr.bf16.mxu0 0
  %1021 = vmatpush1.bf16.xpose.msra.mxu0 0
  %1022 = vmatprep.subr.bf16.mxu0 0
  %1023 = vmatpush1.bf16.xpose.msra.mxu0 0
  %1024 = vmatprep.subr.bf16.mxu0 0
  %1025 = vmatpush1.bf16.xpose.msra.mxu0 0
  %1026 = vmatprep.subr.bf16.mxu0 0
  %1027 = vmatpush1.bf16.xpose.msra.mxu0 0
  %1028 = vmatprep.subr.bf16.mxu0 0
  %1029 = vmatpush1.bf16.xpose.msra.mxu0 0
  %1030 = vmatprep.subr.bf16.mxu0 0
  %1031 = vmatpush1.bf16.xpose.msra.mxu0 0
  %1032 = vmatprep.subr.bf16.mxu0 0
  %1033 = vmatpush1.bf16.xpose.msra.mxu0 0
  %1034 = vmatprep.subr.bf16.mxu0 0
  %1035 = vmatpush1.bf16.xpose.msra.mxu0 0
  %1036 = vmatprep.subr.bf16.mxu0 0
  %1037 = vmatpush1.bf16.xpose.msra.mxu0 0
  %1038 = vmatprep.subr.bf16.mxu0 0
  %1039 = vmatpush1.bf16.xpose.msra.mxu0 0
  %1040 = vmatprep.subr.bf16.mxu0 0
  %1041 = vmatpush1.bf16.xpose.msra.mxu0 0
  %1042 = vmatprep.subr.bf16.mxu0 0
  %1043 = vmatpush1.bf16.xpose.msra.mxu0 0
  %1044 = vmatprep.mubr.bf16.mxu0 0
  %1045 = vmatmul.mubr.bf16.gmra.mrb[0].mxu0 %v1010
  %v1046 = vpop.f32.mrb[0].mxu0
  %v1047 = vadd.f32 %v58, %v1046
  %v1048 = vpop.f32.mrb[0].mxu0
  %v1049 = vpop.f32.mrb[0].mxu0
  %v1050 = vpop.f32.mrb[0].mxu0
  %1051 = vdwg.mxu0
  %v1052 = vsel %vm298, %v1004, -inf
  %1053 = vmax.xlane.f32.xlu0 %v1052
  %v1054 = vpop.xlane.xlu0 %1053
  %v1055 = vsel %vm298, %v1047, -inf
  %1056 = vmax.xlane.f32.xlu0 %v1055
  %v1057 = vpop.xlane.xlu0 %1056
  %v1058 = vsub.f32 %v1004, %v1054
  %v1059 = vsub.f32 %v1047, %v1057
  %v1060 = vmul.f32 %v1058, 1.442695
  %v1061 = vpow.pop %v1060
  %v1062 = vmul.f32 %v1059, 1.442695
  %v1063 = vpow.pop %v1062
  %v1064 = vsel %vm298, %v1061, 0.0
  %1065 = vadd.xlane.f32.xlu0 %v1064
  %v1066 = vpop.xlane.xlu0 %1065
  %v1067 = vsel %vm298, %v1063, 0.0
  %1068 = vadd.xlane.f32.xlu0 %v1067
  %v1069 = vpop.xlane.xlu0 %1068
  %v1070 = vrcp.pop %v1066
  %v1071 = vrcp.pop %v1069
  %v1072 = vmul.f32 %v1061, %v1070
  %v1073 = vmul.f32 %v1063, %v1071
  %v1074 = vpack.c.bf16 %v1072, %v1072
  %v1075 = vpack.c.bf16 %v1073, %v1073
  %v1077 = vsel %vm298, %v1074, 0
  %1079 = vmatprep.subr.bf16.mxu0 0
  %1080 = vmatpush1.bf16.msra.mxu0 %v860
  %1081 = vmatprep.subr.bf16.mxu0 0
  %1082 = vmatpush1.bf16.msra.mxu0 0
  %1083 = vmatprep.subr.bf16.mxu0 0
  %1084 = vmatpush1.bf16.msra.mxu0 0
  %1085 = vmatprep.subr.bf16.mxu0 0
  %1086 = vmatpush1.bf16.msra.mxu0 0
  %1087 = vmatprep.subr.bf16.mxu0 0
  %1088 = vmatpush1.bf16.msra.mxu0 0
  %1089 = vmatprep.subr.bf16.mxu0 0
  %1090 = vmatpush1.bf16.msra.mxu0 0
  %1091 = vmatprep.subr.bf16.mxu0 0
  %1092 = vmatpush1.bf16.msra.mxu0 0
  %1093 = vmatprep.subr.bf16.mxu0 0
  %1094 = vmatpush1.bf16.msra.mxu0 0
  %1095 = vmatprep.subr.bf16.mxu0 0
  %1096 = vmatpush1.bf16.msra.mxu0 0
  %1097 = vmatprep.subr.bf16.mxu0 0
  %1098 = vmatpush1.bf16.msra.mxu0 0
  %1099 = vmatprep.subr.bf16.mxu0 0
  %1100 = vmatpush1.bf16.msra.mxu0 0
  %1101 = vmatprep.subr.bf16.mxu0 0
  %1102 = vmatpush1.bf16.msra.mxu0 0
  %1103 = vmatprep.subr.bf16.mxu0 0
  %1104 = vmatpush1.bf16.msra.mxu0 0
  %1105 = vmatprep.subr.bf16.mxu0 0
  %1106 = vmatpush1.bf16.msra.mxu0 0
  %1107 = vmatprep.subr.bf16.mxu0 0
  %1108 = vmatpush1.bf16.msra.mxu0 0
  %1109 = vmatprep.subr.bf16.mxu0 0
  %1110 = vmatpush1.bf16.msra.mxu0 0
  %1111 = vmatprep.mubr.bf16.mxu0 0
  %1112 = vmatmul.mubr.bf16.gmra.mrb[0].mxu0 %v1077
  %v1113 = vpop.f32.mrb[0].mxu0
  %v1114 = vadd.f32 0.0, %v1113
  %v1115 = vpop.f32.mrb[0].mxu0
  %v1116 = vpop.f32.mrb[0].mxu0
  %v1117 = vpop.f32.mrb[0].mxu0
  %1118 = vdwg.mxu0
  %v1120 = vsel %vm298, %v1075, 0
  %1122 = vmatprep.subr.bf16.mxu0 0
  %1123 = vmatpush1.bf16.msra.mxu0 %v908
  %1124 = vmatprep.subr.bf16.mxu0 0
  %1125 = vmatpush1.bf16.msra.mxu0 0
  %1126 = vmatprep.subr.bf16.mxu0 0
  %1127 = vmatpush1.bf16.msra.mxu0 0
  %1128 = vmatprep.subr.bf16.mxu0 0
  %1129 = vmatpush1.bf16.msra.mxu0 0
  %1130 = vmatprep.subr.bf16.mxu0 0
  %1131 = vmatpush1.bf16.msra.mxu0 0
  %1132 = vmatprep.subr.bf16.mxu0 0
  %1133 = vmatpush1.bf16.msra.mxu0 0
  %1134 = vmatprep.subr.bf16.mxu0 0
  %1135 = vmatpush1.bf16.msra.mxu0 0
  %1136 = vmatprep.subr.bf16.mxu0 0
  %1137 = vmatpush1.bf16.msra.mxu0 0
  %1138 = vmatprep.subr.bf16.mxu0 0
  %1139 = vmatpush1.bf16.msra.mxu0 0
  %1140 = vmatprep.subr.bf16.mxu0 0
  %1141 = vmatpush1.bf16.msra.mxu0 0
  %1142 = vmatprep.subr.bf16.mxu0 0
  %1143 = vmatpush1.bf16.msra.mxu0 0
  %1144 = vmatprep.subr.bf16.mxu0 0
  %1145 = vmatpush1.bf16.msra.mxu0 0
  %1146 = vmatprep.subr.bf16.mxu0 0
  %1147 = vmatpush1.bf16.msra.mxu0 0
  %1148 = vmatprep.subr.bf16.mxu0 0
  %1149 = vmatpush1.bf16.msra.mxu0 0
  %1150 = vmatprep.subr.bf16.mxu0 0
  %1151 = vmatpush1.bf16.msra.mxu0 0
  %1152 = vmatprep.subr.bf16.mxu0 0
  %1153 = vmatpush1.bf16.msra.mxu0 0
  %1154 = vmatprep.mubr.bf16.mxu0 0
  %1155 = vmatmul.mubr.bf16.gmra.mrb[0].mxu0 %v1120
  %v1156 = vpop.f32.mrb[0].mxu0
  %v1157 = vadd.f32 0.0, %v1156
  %v1158 = vpop.f32.mrb[0].mxu0
  %v1159 = vpop.f32.mrb[0].mxu0
  %v1160 = vpop.f32.mrb[0].mxu0
  %1161 = vdwg.mxu0
  %1164 = vrot.lane.b32.xlu0 %v674, 8
  %v1165 = vpop.permute.xlu0 %1164
  %1166 = vrot.lane.b32.xlu0 %v717, 8
  %v1167 = vpop.permute.xlu0 %1166
  %1172 = vrot.lane.b32.xlu0 %v897, 16
  %v1173 = vpop.permute.xlu0 %1172
  %1174 = vrot.lane.b32.xlu0 %v945, 16
  %v1175 = vpop.permute.xlu0 %1174
  %1180 = vrot.lane.b32.xlu0 %v1114, 24
  %v1181 = vpop.permute.xlu0 %1180
  %1182 = vrot.lane.b32.xlu0 %v1157, 24
  %v1183 = vpop.permute.xlu0 %1182
  %v1186 = vsel %vm298, %v460, %v1165
  %v1187 = vsel %vm298, %v509, %v1167
  %vm1188 = vcmask 130048
  %v1189 = vsel %vm1188, %v1186, %v1173
  %v1190 = vsel %vm1188, %v1187, %v1175
  %vm1191 = vcmask 195584
  %v1192 = vsel %vm1191, %v1189, %v1181
  %v1193 = vsel %vm1191, %v1190, %v1183
  %v1194 = vld [vmem:[%s8] sm:$0xf]
  %v1195 = vld [vmem:[%s8 + $0x4] sm:$0xf]
  %v1196 = vld [vmem:[%s8 + $0x8] sm:$0xf]
  %v1197 = vld [vmem:[%s8 + $0xc] sm:$0xf]
  %v1198 = vpack.c.bf16 %v1193, %v1192
  %v1203 = vunpack.c.l.b16 %v1194
  %v1204 = vunpack.c.l.b16 %v1195
  %v1205 = vunpack.c.l.b16 %v1196
  %v1206 = vunpack.c.l.b16 %v1197
  %v1207 = vpack.c.b16 %v1204, %v1203
  %v1208 = vpack.c.b16 %v1206, %v1205
  %v1212 = vsel %vm62, %v1198, 0
  %1214 = vmatprep.subr.bf16.mxu0 0
  %1215 = vmatpush1.bf16.msra.mxu0 %v1207
  %1216 = vmatprep.subr.bf16.mxu0 0
  %1217 = vmatpush1.bf16.msra.mxu0 %v1208
  %1218 = vmatprep.subr.bf16.mxu0 0
  %1219 = vmatpush1.bf16.msra.mxu0 0
  %1220 = vmatprep.subr.bf16.mxu0 0
  %1221 = vmatpush1.bf16.msra.mxu0 0
  %1222 = vmatprep.subr.bf16.mxu0 0
  %1223 = vmatpush1.bf16.msra.mxu0 0
  %1224 = vmatprep.subr.bf16.mxu0 0
  %1225 = vmatpush1.bf16.msra.mxu0 0
  %1226 = vmatprep.subr.bf16.mxu0 0
  %1227 = vmatpush1.bf16.msra.mxu0 0
  %1228 = vmatprep.subr.bf16.mxu0 0
  %1229 = vmatpush1.bf16.msra.mxu0 0
  %1230 = vmatprep.subr.bf16.mxu0 0
  %1231 = vmatpush1.bf16.msra.mxu0 0
  %1232 = vmatprep.subr.bf16.mxu0 0
  %1233 = vmatpush1.bf16.msra.mxu0 0
  %1234 = vmatprep.subr.bf16.mxu0 0
  %1235 = vmatpush1.bf16.msra.mxu0 0
  %1236 = vmatprep.subr.bf16.mxu0 0
  %1237 = vmatpush1.bf16.msra.mxu0 0
  %1238 = vmatprep.subr.bf16.mxu0 0
  %1239 = vmatpush1.bf16.msra.mxu0 0
  %1240 = vmatprep.subr.bf16.mxu0 0
  %1241 = vmatpush1.bf16.msra.mxu0 0
  %1242 = vmatprep.subr.bf16.mxu0 0
  %1243 = vmatpush1.bf16.msra.mxu0 0
  %1244 = vmatprep.subr.bf16.mxu0 0
  %1245 = vmatpush1.bf16.msra.mxu0 0
  %1246 = vmatprep.mubr.bf16.mxu0 0
  %1247 = vmatmul.mubr.bf16.gmra.mrb[0].mxu0 %v1212
  %v1248 = vpop.f32.mrb[0].mxu0
  %v1249 = vadd.f32 0.0, %v1248
  %v1250 = vpop.f32.mrb[0].mxu0
  %v1251 = vpop.f32.mrb[0].mxu0
  %v1252 = vadd.f32 0.0, %v1251
  %v1253 = vpop.f32.mrb[0].mxu0
  %1254 = vdwg.mxu0
  %v1255 = vadd.f32 %v48, %v1249
  %v1256 = vadd.f32 %v49, %v1252
  %v1257 = vld [vmem:[%s9] sm:$0x1]
  %v1258 = vmul.f32 %v1255, %v1255
  %v1259 = vmul.f32 %v1256, %v1256
  %v1260 = vsel %vm62, %v1258, 0.0
  %1261 = vadd.xlane.f32.xlu0 %v1260
  %v1262 = vpop.xlane.xlu0 %1261
  %v1263 = vsel %vm62, %v1259, 0.0
  %1264 = vadd.xlane.f32.xlu0 %v1263
  %v1265 = vpop.xlane.xlu0 %1264
  %v1266 = vmul.f32 %v1262, %v69
  %v1267 = vmul.f32 %v1265, %v69
  %v1268 = vadd.f32 %v1266, 1e-06
  %v1269 = vadd.f32 %v1267, 1e-06
  %v1270 = vrsqrt.pop %v1268
  %v1271 = vrsqrt.pop %v1269
  %v1272 = vmul.f32 %v1255, %v1270
  %v1273 = vmul.f32 %v1256, %v1271
  %v1275 = vlaneseq
  %v1276 = vshrl.u32 %v1275, 7
  %v1277 = vsub.s32 0, %v1276
  %v1278 = vrot.slane %v1257, %v1277
  %v1280 = vmul.f32 %v1272, %v1278
  %v1281 = vmul.f32 %v1273, %v1278
  %v1282 = vld [vmem:[%s10] sm:$0xf]
  %v1283 = vld [vmem:[%s10 + $0x4] sm:$0xf]
  %v1284 = vld [vmem:[%s10 + $0x8] sm:$0xf]
  %v1285 = vld [vmem:[%s10 + $0xc] sm:$0xf]
  %v1286 = vpack.c.bf16 %v1281, %v1280
  %v1291 = vunpack.c.l.b16 %v1282
  %v1292 = vunpack.c.l.b16 %v1283
  %v1293 = vunpack.c.l.b16 %v1284
  %v1294 = vunpack.c.l.b16 %v1285
  %v1295 = vpack.c.b16 %v1292, %v1291
  %v1296 = vpack.c.b16 %v1294, %v1293
  %v1300 = vsel %vm62, %v1286, 0
  %1302 = vmatprep.subr.bf16.mxu0 0
  %1303 = vmatpush1.bf16.msra.mxu0 %v1295
  %1304 = vmatprep.subr.bf16.mxu0 0
  %1305 = vmatpush1.bf16.msra.mxu0 %v1296
  %1306 = vmatprep.subr.bf16.mxu0 0
  %1307 = vmatpush1.bf16.msra.mxu0 0
  %1308 = vmatprep.subr.bf16.mxu0 0
  %1309 = vmatpush1.bf16.msra.mxu0 0
  %1310 = vmatprep.subr.bf16.mxu0 0
  %1311 = vmatpush1.bf16.msra.mxu0 0
  %1312 = vmatprep.subr.bf16.mxu0 0
  %1313 = vmatpush1.bf16.msra.mxu0 0
  %1314 = vmatprep.subr.bf16.mxu0 0
  %1315 = vmatpush1.bf16.msra.mxu0 0
  %1316 = vmatprep.subr.bf16.mxu0 0
  %1317 = vmatpush1.bf16.msra.mxu0 0
  %1318 = vmatprep.subr.bf16.mxu0 0
  %1319 = vmatpush1.bf16.msra.mxu0 0
  %1320 = vmatprep.subr.bf16.mxu0 0
  %1321 = vmatpush1.bf16.msra.mxu0 0
  %1322 = vmatprep.subr.bf16.mxu0 0
  %1323 = vmatpush1.bf16.msra.mxu0 0
  %1324 = vmatprep.subr.bf16.mxu0 0
  %1325 = vmatpush1.bf16.msra.mxu0 0
  %1326 = vmatprep.subr.bf16.mxu0 0
  %1327 = vmatpush1.bf16.msra.mxu0 0
  %1328 = vmatprep.subr.bf16.mxu0 0
  %1329 = vmatpush1.bf16.msra.mxu0 0
  %1330 = vmatprep.subr.bf16.mxu0 0
  %1331 = vmatpush1.bf16.msra.mxu0 0
  %1332 = vmatprep.subr.bf16.mxu0 0
  %1333 = vmatpush1.bf16.msra.mxu0 0
  %1334 = vmatprep.mubr.bf16.mxu0 0
  %1335 = vmatmul.mubr.bf16.gmra.mrb[0].mxu0 %v1300
  %v1336 = vpop.f32.mrb[0].mxu0
  %v1337 = vadd.f32 0.0, %v1336
  %v1338 = vpop.f32.mrb[0].mxu0
  %v1339 = vpop.f32.mrb[0].mxu0
  %v1340 = vadd.f32 0.0, %v1339
  %v1341 = vpop.f32.mrb[0].mxu0
  %1342 = vdwg.mxu0
  %v1343 = vsub.f32 0.0, %v1337
  %v1344 = vsub.f32 0.0, %v1340
  %v1345 = vmul.f32 %v1343, 1.442695
  %v1346 = vpow.pop %v1345
  %v1347 = vmul.f32 %v1344, 1.442695
  %v1348 = vpow.pop %v1347
  %v1349 = vadd.f32 %v1346, 1.0
  %v1350 = vadd.f32 %v1348, 1.0
  %v1351 = vrcp.pop %v1349
  %v1352 = vrcp.pop %v1350
  %v1353 = vmul.f32 %v1337, %v1351
  %v1354 = vmul.f32 %v1340, %v1352
  %1357 = vrot.lane.b32.xlu0 %v1337, 64
  %v1358 = vpop.permute.xlu0 %1357
  %1359 = vrot.lane.b32.xlu0 %v1340, 64
  %v1360 = vpop.permute.xlu0 %1359
  %v1363 = vmul.f32 %v1353, %v1358
  %v1364 = vmul.f32 %v1354, %v1360
  %v1365 = vld [vmem:[%s11] sm:$0xf]
  %v1366 = vld [vmem:[%s11 + $0x4] sm:$0xf]
  %v1367 = vld [vmem:[%s11 + $0x8] sm:$0xf]
  %v1368 = vld [vmem:[%s11 + $0xc] sm:$0xf]
  %v1369 = vld [vmem:[%s11 + $0x10] sm:$0xf]
  %v1370 = vld [vmem:[%s11 + $0x14] sm:$0xf]
  %v1371 = vld [vmem:[%s11 + $0x18] sm:$0xf]
  %v1372 = vld [vmem:[%s11 + $0x1c] sm:$0xf]
  %v1373 = vpack.c.bf16 %v1364, %v1363
  %v1382 = vunpack.c.l.b16 %v1365
  %v1383 = vunpack.c.l.b16 %v1366
  %v1384 = vunpack.c.l.b16 %v1367
  %v1385 = vunpack.c.l.b16 %v1368
  %v1386 = vunpack.c.l.b16 %v1369
  %v1387 = vunpack.c.l.b16 %v1370
  %v1388 = vunpack.c.l.b16 %v1371
  %v1389 = vunpack.c.l.b16 %v1372
  %v1390 = vpack.c.b16 %v1383, %v1382
  %v1391 = vpack.c.b16 %v1385, %v1384
  %v1392 = vpack.c.b16 %v1387, %v1386
  %v1393 = vpack.c.b16 %v1389, %v1388
  %vm1398 = vcmask 523264
  %v1400 = vsel %vm1398, %v1373, 0
  %1402 = vmatprep.subr.bf16.mxu0 0
  %1403 = vmatpush1.bf16.msra.mxu0 %v1390
  %1404 = vmatprep.subr.bf16.mxu0 0
  %1405 = vmatpush1.bf16.msra.mxu0 %v1391
  %1406 = vmatprep.subr.bf16.mxu0 0
  %1407 = vmatpush1.bf16.msra.mxu0 %v1392
  %1408 = vmatprep.subr.bf16.mxu0 0
  %1409 = vmatpush1.bf16.msra.mxu0 %v1393
  %1410 = vmatprep.subr.bf16.mxu0 0
  %1411 = vmatpush1.bf16.msra.mxu0 0
  %1412 = vmatprep.subr.bf16.mxu0 0
  %1413 = vmatpush1.bf16.msra.mxu0 0
  %1414 = vmatprep.subr.bf16.mxu0 0
  %1415 = vmatpush1.bf16.msra.mxu0 0
  %1416 = vmatprep.subr.bf16.mxu0 0
  %1417 = vmatpush1.bf16.msra.mxu0 0
  %1418 = vmatprep.subr.bf16.mxu0 0
  %1419 = vmatpush1.bf16.msra.mxu0 0
  %1420 = vmatprep.subr.bf16.mxu0 0
  %1421 = vmatpush1.bf16.msra.mxu0 0
  %1422 = vmatprep.subr.bf16.mxu0 0
  %1423 = vmatpush1.bf16.msra.mxu0 0
  %1424 = vmatprep.subr.bf16.mxu0 0
  %1425 = vmatpush1.bf16.msra.mxu0 0
  %1426 = vmatprep.subr.bf16.mxu0 0
  %1427 = vmatpush1.bf16.msra.mxu0 0
  %1428 = vmatprep.subr.bf16.mxu0 0
  %1429 = vmatpush1.bf16.msra.mxu0 0
  %1430 = vmatprep.subr.bf16.mxu0 0
  %1431 = vmatpush1.bf16.msra.mxu0 0
  %1432 = vmatprep.subr.bf16.mxu0 0
  %1433 = vmatpush1.bf16.msra.mxu0 0
  %1434 = vmatprep.mubr.bf16.mxu0 0
  %1435 = vmatmul.mubr.bf16.gmra.mrb[0].mxu0 %v1400
  %v1436 = vpop.f32.mrb[0].mxu0
  %v1437 = vadd.f32 0.0, %v1436
  %v1438 = vpop.f32.mrb[0].mxu0
  %v1439 = vpop.f32.mrb[0].mxu0
  %v1440 = vadd.f32 0.0, %v1439
  %v1441 = vpop.f32.mrb[0].mxu0
  %1442 = vdwg.mxu0
  %v1443 = vadd.f32 %v1255, %v1437
  %v1444 = vadd.f32 %v1256, %v1440
  %s1445 = scalar_lea.vmem %s6, 1
  %v1446 = vld [vmem:[%s1445] sm:$0x1]
  %v1447 = vmul.f32 %v1443, %v1443
  %v1448 = vmul.f32 %v1444, %v1444
  %v1449 = vsel %vm62, %v1447, 0.0
  %1450 = vadd.xlane.f32.xlu0 %v1449
  %v1451 = vpop.xlane.xlu0 %1450
  %v1452 = vsel %vm62, %v1448, 0.0
  %1453 = vadd.xlane.f32.xlu0 %v1452
  %v1454 = vpop.xlane.xlu0 %1453
  %v1455 = vmul.f32 %v1451, %v69
  %v1456 = vmul.f32 %v1454, %v69
  %v1457 = vadd.f32 %v1455, 1e-06
  %v1458 = vadd.f32 %v1456, 1e-06
  %v1459 = vrsqrt.pop %v1457
  %v1460 = vrsqrt.pop %v1458
  %v1461 = vmul.f32 %v1443, %v1459
  %v1462 = vmul.f32 %v1444, %v1460
  %v1464 = vlaneseq
  %v1465 = vshrl.u32 %v1464, 7
  %v1466 = vsub.s32 0, %v1465
  %v1467 = vrot.slane %v1446, %v1466
  %v1469 = vmul.f32 %v1461, %v1467
  %v1470 = vmul.f32 %v1462, %v1467
  %s1471 = scalar_lea.vmem %s7, 16
  %v1472 = vld [vmem:[%s1471] sm:$0xf]
  %v1473 = vld [vmem:[%s1471 + $0x4] sm:$0xf]
  %v1474 = vld [vmem:[%s1471 + $0x8] sm:$0xf]
  %v1475 = vld [vmem:[%s1471 + $0xc] sm:$0xf]
  %v1476 = vpack.c.bf16 %v1470, %v1469
  %v1481 = vunpack.c.l.b16 %v1472
  %v1482 = vunpack.c.l.b16 %v1473
  %v1483 = vunpack.c.l.b16 %v1474
  %v1484 = vunpack.c.l.b16 %v1475
  %v1485 = vpack.c.b16 %v1482, %v1481
  %v1486 = vpack.c.b16 %v1484, %v1483
  %v1490 = vsel %vm62, %v1476, 0
  %1492 = vmatprep.subr.bf16.mxu0 0
  %1493 = vmatpush1.bf16.msra.mxu0 %v1485
  %1494 = vmatprep.subr.bf16.mxu0 0
  %1495 = vmatpush1.bf16.msra.mxu0 %v1486
  %1496 = vmatprep.subr.bf16.mxu0 0
  %1497 = vmatpush1.bf16.msra.mxu0 0
  %1498 = vmatprep.subr.bf16.mxu0 0
  %1499 = vmatpush1.bf16.msra.mxu0 0
  %1500 = vmatprep.subr.bf16.mxu0 0
  %1501 = vmatpush1.bf16.msra.mxu0 0
  %1502 = vmatprep.subr.bf16.mxu0 0
  %1503 = vmatpush1.bf16.msra.mxu0 0
  %1504 = vmatprep.subr.bf16.mxu0 0
  %1505 = vmatpush1.bf16.msra.mxu0 0
  %1506 = vmatprep.subr.bf16.mxu0 0
  %1507 = vmatpush1.bf16.msra.mxu0 0
  %1508 = vmatprep.subr.bf16.mxu0 0
  %1509 = vmatpush1.bf16.msra.mxu0 0
  %1510 = vmatprep.subr.bf16.mxu0 0
  %1511 = vmatpush1.bf16.msra.mxu0 0
  %1512 = vmatprep.subr.bf16.mxu0 0
  %1513 = vmatpush1.bf16.msra.mxu0 0
  %1514 = vmatprep.subr.bf16.mxu0 0
  %1515 = vmatpush1.bf16.msra.mxu0 0
  %1516 = vmatprep.subr.bf16.mxu0 0
  %1517 = vmatpush1.bf16.msra.mxu0 0
  %1518 = vmatprep.subr.bf16.mxu0 0
  %1519 = vmatpush1.bf16.msra.mxu0 0
  %1520 = vmatprep.subr.bf16.mxu0 0
  %1521 = vmatpush1.bf16.msra.mxu0 0
  %1522 = vmatprep.subr.bf16.mxu0 0
  %1523 = vmatpush1.bf16.msra.mxu0 0
  %1524 = vmatprep.mubr.bf16.mxu0 0
  %1525 = vmatmul.mubr.bf16.gmra.mrb[0].mxu0 %v1490
  %v1526 = vpop.f32.mrb[0].mxu0
  %v1527 = vadd.f32 0.0, %v1526
  %v1528 = vpop.f32.mrb[0].mxu0
  %v1529 = vpop.f32.mrb[0].mxu0
  %v1530 = vadd.f32 0.0, %v1529
  %v1531 = vpop.f32.mrb[0].mxu0
  %1532 = vdwg.mxu0
  %v1533 = vmul.f32 %v1527, %v50
  %v1534 = vmul.f32 %v1530, %v51
  %v1535 = vmul.f32 %v1527, %v152
  %v1536 = vmul.f32 %v1530, %v154
  %1539 = vrot.lane.b32.xlu0 %v1535, 112
  %v1540 = vpop.permute.xlu0 %1539
  %1541 = vrot.lane.b32.xlu0 %v1536, 112
  %v1542 = vpop.permute.xlu0 %1541
  %v1545 = vsub.f32 %v1533, %v1540
  %v1546 = vsub.f32 %v1534, %v1542
  %v1547 = vmul.f32 %v1527, %v52
  %v1548 = vmul.f32 %v1530, %v53
  %v1549 = vmul.f32 %v1527, %v174
  %v1550 = vmul.f32 %v1530, %v176
  %1553 = vrot.lane.b32.xlu0 %v1549, 112
  %v1554 = vpop.permute.xlu0 %1553
  %1555 = vrot.lane.b32.xlu0 %v1550, 112
  %v1556 = vpop.permute.xlu0 %1555
  %v1559 = vadd.f32 %v1547, %v1554
  %v1560 = vadd.f32 %v1548, %v1556
  %v1561 = vmul.f32 %v1527, %v194
  %v1562 = vmul.f32 %v1530, %v196
  %v1563 = vmul.f32 %v1527, %v204
  %v1564 = vmul.f32 %v1530, %v206
  %1567 = vrot.lane.b32.xlu0 %v1563, 120
  %v1568 = vpop.permute.xlu0 %1567
  %1569 = vrot.lane.b32.xlu0 %v1564, 120
  %v1570 = vpop.permute.xlu0 %1569
  %v1573 = vsub.f32 %v1561, %v1568
  %v1574 = vsub.f32 %v1562, %v1570
  %v1575 = vmul.f32 %v1527, %v222
  %v1576 = vmul.f32 %v1530, %v224
  %v1577 = vmul.f32 %v1527, %v230
  %v1578 = vmul.f32 %v1530, %v232
  %1581 = vrot.lane.b32.xlu0 %v1577, 120
  %v1582 = vpop.permute.xlu0 %1581
  %1583 = vrot.lane.b32.xlu0 %v1578, 120
  %v1584 = vpop.permute.xlu0 %1583
  %v1587 = vadd.f32 %v1575, %v1582
  %v1588 = vadd.f32 %v1576, %v1584
  %1591 = vrot.lane.b32.xlu0 %v1573, 96
  %v1592 = vpop.permute.xlu0 %1591
  %1593 = vrot.lane.b32.xlu0 %v1574, 96
  %v1594 = vpop.permute.xlu0 %1593
  %1599 = vrot.lane.b32.xlu0 %v1587, 100
  %v1600 = vpop.permute.xlu0 %1599
  %1601 = vrot.lane.b32.xlu0 %v1588, 100
  %v1602 = vpop.permute.xlu0 %1601
  %v1605 = vsel %vm263, %v1592, %v1600
  %v1606 = vsel %vm263, %v1594, %v1602
  %v1607 = vpack.c.bf16 %v1605, %v1605
  %v1608 = vpack.c.bf16 %v1606, %v1606
  %v1609 = vpack.c.bf16 %v1527, %v1527
  %v1610 = vpack.c.bf16 %v1530, %v1530
  %1611 = vrot.lane.b32.xlu0 %v1573, 92
  %v1612 = vpop.permute.xlu0 %1611
  %1613 = vrot.lane.b32.xlu0 %v1574, 92
  %v1614 = vpop.permute.xlu0 %1613
  %1617 = vrot.lane.b32.xlu0 %v1587, 96
  %v1618 = vpop.permute.xlu0 %1617
  %1619 = vrot.lane.b32.xlu0 %v1588, 96
  %v1620 = vpop.permute.xlu0 %1619
  %v1623 = vsel %vm263, %v1612, %v1618
  %v1624 = vsel %vm263, %v1614, %v1620
  %v1625 = vpack.c.bf16 %v1623, %v1623
  %v1626 = vpack.c.bf16 %v1624, %v1624
  %1629 = vrot.lane.b32.xlu0 %v1559, 4
  %v1630 = vpop.permute.xlu0 %1629
  %1631 = vrot.lane.b32.xlu0 %v1560, 4
  %v1632 = vpop.permute.xlu0 %1631
  %v1635 = vsel %vm263, %v1545, %v1630
  %v1636 = vsel %vm263, %v1546, %v1632
  %v1637 = vpack.c.bf16 %v1635, %v1635
  %v1638 = vpack.c.bf16 %v1636, %v1636
  %v1640 = vsel %vm298, %v1637, 0
  %v1643 = vsel %vm298, %v1607, 0
  %1645 = vmatprep.subr.bf16.mxu0 0
  %1646 = vmatpush1.bf16.xpose.msra.mxu0 %v1643
  %1647 = vmatprep.subr.bf16.mxu0 0
  %1648 = vmatpush1.bf16.xpose.msra.mxu0 0
  %1649 = vmatprep.subr.bf16.mxu0 0
  %1650 = vmatpush1.bf16.xpose.msra.mxu0 0
  %1651 = vmatprep.subr.bf16.mxu0 0
  %1652 = vmatpush1.bf16.xpose.msra.mxu0 0
  %1653 = vmatprep.subr.bf16.mxu0 0
  %1654 = vmatpush1.bf16.xpose.msra.mxu0 0
  %1655 = vmatprep.subr.bf16.mxu0 0
  %1656 = vmatpush1.bf16.xpose.msra.mxu0 0
  %1657 = vmatprep.subr.bf16.mxu0 0
  %1658 = vmatpush1.bf16.xpose.msra.mxu0 0
  %1659 = vmatprep.subr.bf16.mxu0 0
  %1660 = vmatpush1.bf16.xpose.msra.mxu0 0
  %1661 = vmatprep.subr.bf16.mxu0 0
  %1662 = vmatpush1.bf16.xpose.msra.mxu0 0
  %1663 = vmatprep.subr.bf16.mxu0 0
  %1664 = vmatpush1.bf16.xpose.msra.mxu0 0
  %1665 = vmatprep.subr.bf16.mxu0 0
  %1666 = vmatpush1.bf16.xpose.msra.mxu0 0
  %1667 = vmatprep.subr.bf16.mxu0 0
  %1668 = vmatpush1.bf16.xpose.msra.mxu0 0
  %1669 = vmatprep.subr.bf16.mxu0 0
  %1670 = vmatpush1.bf16.xpose.msra.mxu0 0
  %1671 = vmatprep.subr.bf16.mxu0 0
  %1672 = vmatpush1.bf16.xpose.msra.mxu0 0
  %1673 = vmatprep.subr.bf16.mxu0 0
  %1674 = vmatpush1.bf16.xpose.msra.mxu0 0
  %1675 = vmatprep.subr.bf16.mxu0 0
  %1676 = vmatpush1.bf16.xpose.msra.mxu0 0
  %1677 = vmatprep.mubr.bf16.mxu0 0
  %1678 = vmatmul.mubr.bf16.gmra.mrb[0].mxu0 %v1640
  %v1679 = vpop.f32.mrb[0].mxu0
  %v1680 = vadd.f32 %v58, %v1679
  %v1681 = vpop.f32.mrb[0].mxu0
  %v1682 = vpop.f32.mrb[0].mxu0
  %v1683 = vpop.f32.mrb[0].mxu0
  %1684 = vdwg.mxu0
  %v1686 = vsel %vm298, %v1638, 0
  %v1689 = vsel %vm298, %v1608, 0
  %1691 = vmatprep.subr.bf16.mxu0 0
  %1692 = vmatpush1.bf16.xpose.msra.mxu0 %v1689
  %1693 = vmatprep.subr.bf16.mxu0 0
  %1694 = vmatpush1.bf16.xpose.msra.mxu0 0
  %1695 = vmatprep.subr.bf16.mxu0 0
  %1696 = vmatpush1.bf16.xpose.msra.mxu0 0
  %1697 = vmatprep.subr.bf16.mxu0 0
  %1698 = vmatpush1.bf16.xpose.msra.mxu0 0
  %1699 = vmatprep.subr.bf16.mxu0 0
  %1700 = vmatpush1.bf16.xpose.msra.mxu0 0
  %1701 = vmatprep.subr.bf16.mxu0 0
  %1702 = vmatpush1.bf16.xpose.msra.mxu0 0
  %1703 = vmatprep.subr.bf16.mxu0 0
  %1704 = vmatpush1.bf16.xpose.msra.mxu0 0
  %1705 = vmatprep.subr.bf16.mxu0 0
  %1706 = vmatpush1.bf16.xpose.msra.mxu0 0
  %1707 = vmatprep.subr.bf16.mxu0 0
  %1708 = vmatpush1.bf16.xpose.msra.mxu0 0
  %1709 = vmatprep.subr.bf16.mxu0 0
  %1710 = vmatpush1.bf16.xpose.msra.mxu0 0
  %1711 = vmatprep.subr.bf16.mxu0 0
  %1712 = vmatpush1.bf16.xpose.msra.mxu0 0
  %1713 = vmatprep.subr.bf16.mxu0 0
  %1714 = vmatpush1.bf16.xpose.msra.mxu0 0
  %1715 = vmatprep.subr.bf16.mxu0 0
  %1716 = vmatpush1.bf16.xpose.msra.mxu0 0
  %1717 = vmatprep.subr.bf16.mxu0 0
  %1718 = vmatpush1.bf16.xpose.msra.mxu0 0
  %1719 = vmatprep.subr.bf16.mxu0 0
  %1720 = vmatpush1.bf16.xpose.msra.mxu0 0
  %1721 = vmatprep.subr.bf16.mxu0 0
  %1722 = vmatpush1.bf16.xpose.msra.mxu0 0
  %1723 = vmatprep.mubr.bf16.mxu0 0
  %1724 = vmatmul.mubr.bf16.gmra.mrb[0].mxu0 %v1686
  %v1725 = vpop.f32.mrb[0].mxu0
  %v1726 = vadd.f32 %v58, %v1725
  %v1727 = vpop.f32.mrb[0].mxu0
  %v1728 = vpop.f32.mrb[0].mxu0
  %v1729 = vpop.f32.mrb[0].mxu0
  %1730 = vdwg.mxu0
  %v1731 = vsel %vm298, %v1680, -inf
  %1732 = vmax.xlane.f32.xlu0 %v1731
  %v1733 = vpop.xlane.xlu0 %1732
  %v1734 = vsel %vm298, %v1726, -inf
  %1735 = vmax.xlane.f32.xlu0 %v1734
  %v1736 = vpop.xlane.xlu0 %1735
  %v1737 = vsub.f32 %v1680, %v1733
  %v1738 = vsub.f32 %v1726, %v1736
  %v1739 = vmul.f32 %v1737, 1.442695
  %v1740 = vpow.pop %v1739
  %v1741 = vmul.f32 %v1738, 1.442695
  %v1742 = vpow.pop %v1741
  %v1743 = vsel %vm298, %v1740, 0.0
  %1744 = vadd.xlane.f32.xlu0 %v1743
  %v1745 = vpop.xlane.xlu0 %1744
  %v1746 = vsel %vm298, %v1742, 0.0
  %1747 = vadd.xlane.f32.xlu0 %v1746
  %v1748 = vpop.xlane.xlu0 %1747
  %v1749 = vrcp.pop %v1745
  %v1750 = vrcp.pop %v1748
  %v1751 = vmul.f32 %v1740, %v1749
  %v1752 = vmul.f32 %v1742, %v1750
  %v1753 = vpack.c.bf16 %v1751, %v1751
  %v1754 = vpack.c.bf16 %v1752, %v1752
  %1756 = vrot.lane.b32.xlu0 %v1609, 80
  %v1757 = vpop.permute.xlu0 %1756
  %v1759 = vsel %vm298, %v1753, 0
  %v1762 = vsel %vm421, %v1757, 0
  %1764 = vmatprep.subr.bf16.mxu0 0
  %1765 = vmatpush1.bf16.msra.mxu0 %v1762
  %1766 = vmatprep.subr.bf16.mxu0 0
  %1767 = vmatpush1.bf16.msra.mxu0 0
  %1768 = vmatprep.subr.bf16.mxu0 0
  %1769 = vmatpush1.bf16.msra.mxu0 0
  %1770 = vmatprep.subr.bf16.mxu0 0
  %1771 = vmatpush1.bf16.msra.mxu0 0
  %1772 = vmatprep.subr.bf16.mxu0 0
  %1773 = vmatpush1.bf16.msra.mxu0 0
  %1774 = vmatprep.subr.bf16.mxu0 0
  %1775 = vmatpush1.bf16.msra.mxu0 0
  %1776 = vmatprep.subr.bf16.mxu0 0
  %1777 = vmatpush1.bf16.msra.mxu0 0
  %1778 = vmatprep.subr.bf16.mxu0 0
  %1779 = vmatpush1.bf16.msra.mxu0 0
  %1780 = vmatprep.subr.bf16.mxu0 0
  %1781 = vmatpush1.bf16.msra.mxu0 0
  %1782 = vmatprep.subr.bf16.mxu0 0
  %1783 = vmatpush1.bf16.msra.mxu0 0
  %1784 = vmatprep.subr.bf16.mxu0 0
  %1785 = vmatpush1.bf16.msra.mxu0 0
  %1786 = vmatprep.subr.bf16.mxu0 0
  %1787 = vmatpush1.bf16.msra.mxu0 0
  %1788 = vmatprep.subr.bf16.mxu0 0
  %1789 = vmatpush1.bf16.msra.mxu0 0
  %1790 = vmatprep.subr.bf16.mxu0 0
  %1791 = vmatpush1.bf16.msra.mxu0 0
  %1792 = vmatprep.subr.bf16.mxu0 0
  %1793 = vmatpush1.bf16.msra.mxu0 0
  %1794 = vmatprep.subr.bf16.mxu0 0
  %1795 = vmatpush1.bf16.msra.mxu0 0
  %1796 = vmatprep.mubr.bf16.mxu0 0
  %1797 = vmatmul.mubr.bf16.gmra.mrb[0].mxu0 %v1759
  %v1798 = vpop.f32.mrb[0].mxu0
  %v1799 = vadd.f32 0.0, %v1798
  %v1800 = vpop.f32.mrb[0].mxu0
  %v1801 = vpop.f32.mrb[0].mxu0
  %v1802 = vpop.f32.mrb[0].mxu0
  %1803 = vdwg.mxu0
  %1805 = vrot.lane.b32.xlu0 %v1610, 80
  %v1806 = vpop.permute.xlu0 %1805
  %v1808 = vsel %vm298, %v1754, 0
  %v1811 = vsel %vm421, %v1806, 0
  %1813 = vmatprep.subr.bf16.mxu0 0
  %1814 = vmatpush1.bf16.msra.mxu0 %v1811
  %1815 = vmatprep.subr.bf16.mxu0 0
  %1816 = vmatpush1.bf16.msra.mxu0 0
  %1817 = vmatprep.subr.bf16.mxu0 0
  %1818 = vmatpush1.bf16.msra.mxu0 0
  %1819 = vmatprep.subr.bf16.mxu0 0
  %1820 = vmatpush1.bf16.msra.mxu0 0
  %1821 = vmatprep.subr.bf16.mxu0 0
  %1822 = vmatpush1.bf16.msra.mxu0 0
  %1823 = vmatprep.subr.bf16.mxu0 0
  %1824 = vmatpush1.bf16.msra.mxu0 0
  %1825 = vmatprep.subr.bf16.mxu0 0
  %1826 = vmatpush1.bf16.msra.mxu0 0
  %1827 = vmatprep.subr.bf16.mxu0 0
  %1828 = vmatpush1.bf16.msra.mxu0 0
  %1829 = vmatprep.subr.bf16.mxu0 0
  %1830 = vmatpush1.bf16.msra.mxu0 0
  %1831 = vmatprep.subr.bf16.mxu0 0
  %1832 = vmatpush1.bf16.msra.mxu0 0
  %1833 = vmatprep.subr.bf16.mxu0 0
  %1834 = vmatpush1.bf16.msra.mxu0 0
  %1835 = vmatprep.subr.bf16.mxu0 0
  %1836 = vmatpush1.bf16.msra.mxu0 0
  %1837 = vmatprep.subr.bf16.mxu0 0
  %1838 = vmatpush1.bf16.msra.mxu0 0
  %1839 = vmatprep.subr.bf16.mxu0 0
  %1840 = vmatpush1.bf16.msra.mxu0 0
  %1841 = vmatprep.subr.bf16.mxu0 0
  %1842 = vmatpush1.bf16.msra.mxu0 0
  %1843 = vmatprep.subr.bf16.mxu0 0
  %1844 = vmatpush1.bf16.msra.mxu0 0
  %1845 = vmatprep.mubr.bf16.mxu0 0
  %1846 = vmatmul.mubr.bf16.gmra.mrb[0].mxu0 %v1808
  %v1847 = vpop.f32.mrb[0].mxu0
  %v1848 = vadd.f32 0.0, %v1847
  %v1849 = vpop.f32.mrb[0].mxu0
  %v1850 = vpop.f32.mrb[0].mxu0
  %v1851 = vpop.f32.mrb[0].mxu0
  %1852 = vdwg.mxu0
  %1855 = vrot.lane.b32.xlu0 %v1545, 124
  %v1856 = vpop.permute.xlu0 %1855
  %1857 = vrot.lane.b32.xlu0 %v1546, 124
  %v1858 = vpop.permute.xlu0 %1857
  %v1861 = vsel %vm263, %v1856, %v1559
  %v1862 = vsel %vm263, %v1858, %v1560
  %v1863 = vpack.c.bf16 %v1861, %v1861
  %v1864 = vpack.c.bf16 %v1862, %v1862
  %v1866 = vsel %vm298, %v1863, 0
  %1868 = vmatprep.subr.bf16.mxu0 0
  %1869 = vmatpush1.bf16.xpose.msra.mxu0 %v1643
  %1870 = vmatprep.subr.bf16.mxu0 0
  %1871 = vmatpush1.bf16.xpose.msra.mxu0 0
  %1872 = vmatprep.subr.bf16.mxu0 0
  %1873 = vmatpush1.bf16.xpose.msra.mxu0 0
  %1874 = vmatprep.subr.bf16.mxu0 0
  %1875 = vmatpush1.bf16.xpose.msra.mxu0 0
  %1876 = vmatprep.subr.bf16.mxu0 0
  %1877 = vmatpush1.bf16.xpose.msra.mxu0 0
  %1878 = vmatprep.subr.bf16.mxu0 0
  %1879 = vmatpush1.bf16.xpose.msra.mxu0 0
  %1880 = vmatprep.subr.bf16.mxu0 0
  %1881 = vmatpush1.bf16.xpose.msra.mxu0 0
  %1882 = vmatprep.subr.bf16.mxu0 0
  %1883 = vmatpush1.bf16.xpose.msra.mxu0 0
  %1884 = vmatprep.subr.bf16.mxu0 0
  %1885 = vmatpush1.bf16.xpose.msra.mxu0 0
  %1886 = vmatprep.subr.bf16.mxu0 0
  %1887 = vmatpush1.bf16.xpose.msra.mxu0 0
  %1888 = vmatprep.subr.bf16.mxu0 0
  %1889 = vmatpush1.bf16.xpose.msra.mxu0 0
  %1890 = vmatprep.subr.bf16.mxu0 0
  %1891 = vmatpush1.bf16.xpose.msra.mxu0 0
  %1892 = vmatprep.subr.bf16.mxu0 0
  %1893 = vmatpush1.bf16.xpose.msra.mxu0 0
  %1894 = vmatprep.subr.bf16.mxu0 0
  %1895 = vmatpush1.bf16.xpose.msra.mxu0 0
  %1896 = vmatprep.subr.bf16.mxu0 0
  %1897 = vmatpush1.bf16.xpose.msra.mxu0 0
  %1898 = vmatprep.subr.bf16.mxu0 0
  %1899 = vmatpush1.bf16.xpose.msra.mxu0 0
  %1900 = vmatprep.mubr.bf16.mxu0 0
  %1901 = vmatmul.mubr.bf16.gmra.mrb[0].mxu0 %v1866
  %v1902 = vpop.f32.mrb[0].mxu0
  %v1903 = vadd.f32 %v58, %v1902
  %v1904 = vpop.f32.mrb[0].mxu0
  %v1905 = vpop.f32.mrb[0].mxu0
  %v1906 = vpop.f32.mrb[0].mxu0
  %1907 = vdwg.mxu0
  %v1909 = vsel %vm298, %v1864, 0
  %1911 = vmatprep.subr.bf16.mxu0 0
  %1912 = vmatpush1.bf16.xpose.msra.mxu0 %v1689
  %1913 = vmatprep.subr.bf16.mxu0 0
  %1914 = vmatpush1.bf16.xpose.msra.mxu0 0
  %1915 = vmatprep.subr.bf16.mxu0 0
  %1916 = vmatpush1.bf16.xpose.msra.mxu0 0
  %1917 = vmatprep.subr.bf16.mxu0 0
  %1918 = vmatpush1.bf16.xpose.msra.mxu0 0
  %1919 = vmatprep.subr.bf16.mxu0 0
  %1920 = vmatpush1.bf16.xpose.msra.mxu0 0
  %1921 = vmatprep.subr.bf16.mxu0 0
  %1922 = vmatpush1.bf16.xpose.msra.mxu0 0
  %1923 = vmatprep.subr.bf16.mxu0 0
  %1924 = vmatpush1.bf16.xpose.msra.mxu0 0
  %1925 = vmatprep.subr.bf16.mxu0 0
  %1926 = vmatpush1.bf16.xpose.msra.mxu0 0
  %1927 = vmatprep.subr.bf16.mxu0 0
  %1928 = vmatpush1.bf16.xpose.msra.mxu0 0
  %1929 = vmatprep.subr.bf16.mxu0 0
  %1930 = vmatpush1.bf16.xpose.msra.mxu0 0
  %1931 = vmatprep.subr.bf16.mxu0 0
  %1932 = vmatpush1.bf16.xpose.msra.mxu0 0
  %1933 = vmatprep.subr.bf16.mxu0 0
  %1934 = vmatpush1.bf16.xpose.msra.mxu0 0
  %1935 = vmatprep.subr.bf16.mxu0 0
  %1936 = vmatpush1.bf16.xpose.msra.mxu0 0
  %1937 = vmatprep.subr.bf16.mxu0 0
  %1938 = vmatpush1.bf16.xpose.msra.mxu0 0
  %1939 = vmatprep.subr.bf16.mxu0 0
  %1940 = vmatpush1.bf16.xpose.msra.mxu0 0
  %1941 = vmatprep.subr.bf16.mxu0 0
  %1942 = vmatpush1.bf16.xpose.msra.mxu0 0
  %1943 = vmatprep.mubr.bf16.mxu0 0
  %1944 = vmatmul.mubr.bf16.gmra.mrb[0].mxu0 %v1909
  %v1945 = vpop.f32.mrb[0].mxu0
  %v1946 = vadd.f32 %v58, %v1945
  %v1947 = vpop.f32.mrb[0].mxu0
  %v1948 = vpop.f32.mrb[0].mxu0
  %v1949 = vpop.f32.mrb[0].mxu0
  %1950 = vdwg.mxu0
  %v1951 = vsel %vm298, %v1903, -inf
  %1952 = vmax.xlane.f32.xlu0 %v1951
  %v1953 = vpop.xlane.xlu0 %1952
  %v1954 = vsel %vm298, %v1946, -inf
  %1955 = vmax.xlane.f32.xlu0 %v1954
  %v1956 = vpop.xlane.xlu0 %1955
  %v1957 = vsub.f32 %v1903, %v1953
  %v1958 = vsub.f32 %v1946, %v1956
  %v1959 = vmul.f32 %v1957, 1.442695
  %v1960 = vpow.pop %v1959
  %v1961 = vmul.f32 %v1958, 1.442695
  %v1962 = vpow.pop %v1961
  %v1963 = vsel %vm298, %v1960, 0.0
  %1964 = vadd.xlane.f32.xlu0 %v1963
  %v1965 = vpop.xlane.xlu0 %1964
  %v1966 = vsel %vm298, %v1962, 0.0
  %1967 = vadd.xlane.f32.xlu0 %v1966
  %v1968 = vpop.xlane.xlu0 %1967
  %v1969 = vrcp.pop %v1965
  %v1970 = vrcp.pop %v1968
  %v1971 = vmul.f32 %v1960, %v1969
  %v1972 = vmul.f32 %v1962, %v1970
  %v1973 = vpack.c.bf16 %v1971, %v1971
  %v1974 = vpack.c.bf16 %v1972, %v1972
  %v1976 = vsel %vm298, %v1973, 0
  %1978 = vmatprep.subr.bf16.mxu0 0
  %1979 = vmatpush1.bf16.msra.mxu0 %v1762
  %1980 = vmatprep.subr.bf16.mxu0 0
  %1981 = vmatpush1.bf16.msra.mxu0 0
  %1982 = vmatprep.subr.bf16.mxu0 0
  %1983 = vmatpush1.bf16.msra.mxu0 0
  %1984 = vmatprep.subr.bf16.mxu0 0
  %1985 = vmatpush1.bf16.msra.mxu0 0
  %1986 = vmatprep.subr.bf16.mxu0 0
  %1987 = vmatpush1.bf16.msra.mxu0 0
  %1988 = vmatprep.subr.bf16.mxu0 0
  %1989 = vmatpush1.bf16.msra.mxu0 0
  %1990 = vmatprep.subr.bf16.mxu0 0
  %1991 = vmatpush1.bf16.msra.mxu0 0
  %1992 = vmatprep.subr.bf16.mxu0 0
  %1993 = vmatpush1.bf16.msra.mxu0 0
  %1994 = vmatprep.subr.bf16.mxu0 0
  %1995 = vmatpush1.bf16.msra.mxu0 0
  %1996 = vmatprep.subr.bf16.mxu0 0
  %1997 = vmatpush1.bf16.msra.mxu0 0
  %1998 = vmatprep.subr.bf16.mxu0 0
  %1999 = vmatpush1.bf16.msra.mxu0 0
  %2000 = vmatprep.subr.bf16.mxu0 0
  %2001 = vmatpush1.bf16.msra.mxu0 0
  %2002 = vmatprep.subr.bf16.mxu0 0
  %2003 = vmatpush1.bf16.msra.mxu0 0
  %2004 = vmatprep.subr.bf16.mxu0 0
  %2005 = vmatpush1.bf16.msra.mxu0 0
  %2006 = vmatprep.subr.bf16.mxu0 0
  %2007 = vmatpush1.bf16.msra.mxu0 0
  %2008 = vmatprep.subr.bf16.mxu0 0
  %2009 = vmatpush1.bf16.msra.mxu0 0
  %2010 = vmatprep.mubr.bf16.mxu0 0
  %2011 = vmatmul.mubr.bf16.gmra.mrb[0].mxu0 %v1976
  %v2012 = vpop.f32.mrb[0].mxu0
  %v2013 = vadd.f32 0.0, %v2012
  %v2014 = vpop.f32.mrb[0].mxu0
  %v2015 = vpop.f32.mrb[0].mxu0
  %v2016 = vpop.f32.mrb[0].mxu0
  %2017 = vdwg.mxu0
  %v2019 = vsel %vm298, %v1974, 0
  %2021 = vmatprep.subr.bf16.mxu0 0
  %2022 = vmatpush1.bf16.msra.mxu0 %v1811
  %2023 = vmatprep.subr.bf16.mxu0 0
  %2024 = vmatpush1.bf16.msra.mxu0 0
  %2025 = vmatprep.subr.bf16.mxu0 0
  %2026 = vmatpush1.bf16.msra.mxu0 0
  %2027 = vmatprep.subr.bf16.mxu0 0
  %2028 = vmatpush1.bf16.msra.mxu0 0
  %2029 = vmatprep.subr.bf16.mxu0 0
  %2030 = vmatpush1.bf16.msra.mxu0 0
  %2031 = vmatprep.subr.bf16.mxu0 0
  %2032 = vmatpush1.bf16.msra.mxu0 0
  %2033 = vmatprep.subr.bf16.mxu0 0
  %2034 = vmatpush1.bf16.msra.mxu0 0
  %2035 = vmatprep.subr.bf16.mxu0 0
  %2036 = vmatpush1.bf16.msra.mxu0 0
  %2037 = vmatprep.subr.bf16.mxu0 0
  %2038 = vmatpush1.bf16.msra.mxu0 0
  %2039 = vmatprep.subr.bf16.mxu0 0
  %2040 = vmatpush1.bf16.msra.mxu0 0
  %2041 = vmatprep.subr.bf16.mxu0 0
  %2042 = vmatpush1.bf16.msra.mxu0 0
  %2043 = vmatprep.subr.bf16.mxu0 0
  %2044 = vmatpush1.bf16.msra.mxu0 0
  %2045 = vmatprep.subr.bf16.mxu0 0
  %2046 = vmatpush1.bf16.msra.mxu0 0
  %2047 = vmatprep.subr.bf16.mxu0 0
  %2048 = vmatpush1.bf16.msra.mxu0 0
  %2049 = vmatprep.subr.bf16.mxu0 0
  %2050 = vmatpush1.bf16.msra.mxu0 0
  %2051 = vmatprep.subr.bf16.mxu0 0
  %2052 = vmatpush1.bf16.msra.mxu0 0
  %2053 = vmatprep.mubr.bf16.mxu0 0
  %2054 = vmatmul.mubr.bf16.gmra.mrb[0].mxu0 %v2019
  %v2055 = vpop.f32.mrb[0].mxu0
  %v2056 = vadd.f32 0.0, %v2055
  %v2057 = vpop.f32.mrb[0].mxu0
  %v2058 = vpop.f32.mrb[0].mxu0
  %v2059 = vpop.f32.mrb[0].mxu0
  %2060 = vdwg.mxu0
  %2061 = vrot.lane.b32.xlu0 %v1545, 120
  %v2062 = vpop.permute.xlu0 %2061
  %2063 = vrot.lane.b32.xlu0 %v1546, 120
  %v2064 = vpop.permute.xlu0 %2063
  %2067 = vrot.lane.b32.xlu0 %v1559, 124
  %v2068 = vpop.permute.xlu0 %2067
  %2069 = vrot.lane.b32.xlu0 %v1560, 124
  %v2070 = vpop.permute.xlu0 %2069
  %v2073 = vsel %vm263, %v2062, %v2068
  %v2074 = vsel %vm263, %v2064, %v2070
  %v2075 = vpack.c.bf16 %v2073, %v2073
  %v2076 = vpack.c.bf16 %v2074, %v2074
  %v2078 = vsel %vm298, %v2075, 0
  %v2081 = vsel %vm298, %v1625, 0
  %2083 = vmatprep.subr.bf16.mxu0 0
  %2084 = vmatpush1.bf16.xpose.msra.mxu0 %v2081
  %2085 = vmatprep.subr.bf16.mxu0 0
  %2086 = vmatpush1.bf16.xpose.msra.mxu0 0
  %2087 = vmatprep.subr.bf16.mxu0 0
  %2088 = vmatpush1.bf16.xpose.msra.mxu0 0
  %2089 = vmatprep.subr.bf16.mxu0 0
  %2090 = vmatpush1.bf16.xpose.msra.mxu0 0
  %2091 = vmatprep.subr.bf16.mxu0 0
  %2092 = vmatpush1.bf16.xpose.msra.mxu0 0
  %2093 = vmatprep.subr.bf16.mxu0 0
  %2094 = vmatpush1.bf16.xpose.msra.mxu0 0
  %2095 = vmatprep.subr.bf16.mxu0 0
  %2096 = vmatpush1.bf16.xpose.msra.mxu0 0
  %2097 = vmatprep.subr.bf16.mxu0 0
  %2098 = vmatpush1.bf16.xpose.msra.mxu0 0
  %2099 = vmatprep.subr.bf16.mxu0 0
  %2100 = vmatpush1.bf16.xpose.msra.mxu0 0
  %2101 = vmatprep.subr.bf16.mxu0 0
  %2102 = vmatpush1.bf16.xpose.msra.mxu0 0
  %2103 = vmatprep.subr.bf16.mxu0 0
  %2104 = vmatpush1.bf16.xpose.msra.mxu0 0
  %2105 = vmatprep.subr.bf16.mxu0 0
  %2106 = vmatpush1.bf16.xpose.msra.mxu0 0
  %2107 = vmatprep.subr.bf16.mxu0 0
  %2108 = vmatpush1.bf16.xpose.msra.mxu0 0
  %2109 = vmatprep.subr.bf16.mxu0 0
  %2110 = vmatpush1.bf16.xpose.msra.mxu0 0
  %2111 = vmatprep.subr.bf16.mxu0 0
  %2112 = vmatpush1.bf16.xpose.msra.mxu0 0
  %2113 = vmatprep.subr.bf16.mxu0 0
  %2114 = vmatpush1.bf16.xpose.msra.mxu0 0
  %2115 = vmatprep.mubr.bf16.mxu0 0
  %2116 = vmatmul.mubr.bf16.gmra.mrb[0].mxu0 %v2078
  %v2117 = vpop.f32.mrb[0].mxu0
  %v2118 = vadd.f32 %v58, %v2117
  %v2119 = vpop.f32.mrb[0].mxu0
  %v2120 = vpop.f32.mrb[0].mxu0
  %v2121 = vpop.f32.mrb[0].mxu0
  %2122 = vdwg.mxu0
  %v2124 = vsel %vm298, %v2076, 0
  %v2127 = vsel %vm298, %v1626, 0
  %2129 = vmatprep.subr.bf16.mxu0 0
  %2130 = vmatpush1.bf16.xpose.msra.mxu0 %v2127
  %2131 = vmatprep.subr.bf16.mxu0 0
  %2132 = vmatpush1.bf16.xpose.msra.mxu0 0
  %2133 = vmatprep.subr.bf16.mxu0 0
  %2134 = vmatpush1.bf16.xpose.msra.mxu0 0
  %2135 = vmatprep.subr.bf16.mxu0 0
  %2136 = vmatpush1.bf16.xpose.msra.mxu0 0
  %2137 = vmatprep.subr.bf16.mxu0 0
  %2138 = vmatpush1.bf16.xpose.msra.mxu0 0
  %2139 = vmatprep.subr.bf16.mxu0 0
  %2140 = vmatpush1.bf16.xpose.msra.mxu0 0
  %2141 = vmatprep.subr.bf16.mxu0 0
  %2142 = vmatpush1.bf16.xpose.msra.mxu0 0
  %2143 = vmatprep.subr.bf16.mxu0 0
  %2144 = vmatpush1.bf16.xpose.msra.mxu0 0
  %2145 = vmatprep.subr.bf16.mxu0 0
  %2146 = vmatpush1.bf16.xpose.msra.mxu0 0
  %2147 = vmatprep.subr.bf16.mxu0 0
  %2148 = vmatpush1.bf16.xpose.msra.mxu0 0
  %2149 = vmatprep.subr.bf16.mxu0 0
  %2150 = vmatpush1.bf16.xpose.msra.mxu0 0
  %2151 = vmatprep.subr.bf16.mxu0 0
  %2152 = vmatpush1.bf16.xpose.msra.mxu0 0
  %2153 = vmatprep.subr.bf16.mxu0 0
  %2154 = vmatpush1.bf16.xpose.msra.mxu0 0
  %2155 = vmatprep.subr.bf16.mxu0 0
  %2156 = vmatpush1.bf16.xpose.msra.mxu0 0
  %2157 = vmatprep.subr.bf16.mxu0 0
  %2158 = vmatpush1.bf16.xpose.msra.mxu0 0
  %2159 = vmatprep.subr.bf16.mxu0 0
  %2160 = vmatpush1.bf16.xpose.msra.mxu0 0
  %2161 = vmatprep.mubr.bf16.mxu0 0
  %2162 = vmatmul.mubr.bf16.gmra.mrb[0].mxu0 %v2124
  %v2163 = vpop.f32.mrb[0].mxu0
  %v2164 = vadd.f32 %v58, %v2163
  %v2165 = vpop.f32.mrb[0].mxu0
  %v2166 = vpop.f32.mrb[0].mxu0
  %v2167 = vpop.f32.mrb[0].mxu0
  %2168 = vdwg.mxu0
  %v2169 = vsel %vm298, %v2118, -inf
  %2170 = vmax.xlane.f32.xlu0 %v2169
  %v2171 = vpop.xlane.xlu0 %2170
  %v2172 = vsel %vm298, %v2164, -inf
  %2173 = vmax.xlane.f32.xlu0 %v2172
  %v2174 = vpop.xlane.xlu0 %2173
  %v2175 = vsub.f32 %v2118, %v2171
  %v2176 = vsub.f32 %v2164, %v2174
  %v2177 = vmul.f32 %v2175, 1.442695
  %v2178 = vpow.pop %v2177
  %v2179 = vmul.f32 %v2176, 1.442695
  %v2180 = vpow.pop %v2179
  %v2181 = vsel %vm298, %v2178, 0.0
  %2182 = vadd.xlane.f32.xlu0 %v2181
  %v2183 = vpop.xlane.xlu0 %2182
  %v2184 = vsel %vm298, %v2180, 0.0
  %2185 = vadd.xlane.f32.xlu0 %v2184
  %v2186 = vpop.xlane.xlu0 %2185
  %v2187 = vrcp.pop %v2183
  %v2188 = vrcp.pop %v2186
  %v2189 = vmul.f32 %v2178, %v2187
  %v2190 = vmul.f32 %v2180, %v2188
  %v2191 = vpack.c.bf16 %v2189, %v2189
  %v2192 = vpack.c.bf16 %v2190, %v2190
  %2193 = vrot.lane.b32.xlu0 %v1609, 72
  %v2194 = vpop.permute.xlu0 %2193
  %v2196 = vsel %vm298, %v2191, 0
  %v2199 = vsel %vm421, %v2194, 0
  %2201 = vmatprep.subr.bf16.mxu0 0
  %2202 = vmatpush1.bf16.msra.mxu0 %v2199
  %2203 = vmatprep.subr.bf16.mxu0 0
  %2204 = vmatpush1.bf16.msra.mxu0 0
  %2205 = vmatprep.subr.bf16.mxu0 0
  %2206 = vmatpush1.bf16.msra.mxu0 0
  %2207 = vmatprep.subr.bf16.mxu0 0
  %2208 = vmatpush1.bf16.msra.mxu0 0
  %2209 = vmatprep.subr.bf16.mxu0 0
  %2210 = vmatpush1.bf16.msra.mxu0 0
  %2211 = vmatprep.subr.bf16.mxu0 0
  %2212 = vmatpush1.bf16.msra.mxu0 0
  %2213 = vmatprep.subr.bf16.mxu0 0
  %2214 = vmatpush1.bf16.msra.mxu0 0
  %2215 = vmatprep.subr.bf16.mxu0 0
  %2216 = vmatpush1.bf16.msra.mxu0 0
  %2217 = vmatprep.subr.bf16.mxu0 0
  %2218 = vmatpush1.bf16.msra.mxu0 0
  %2219 = vmatprep.subr.bf16.mxu0 0
  %2220 = vmatpush1.bf16.msra.mxu0 0
  %2221 = vmatprep.subr.bf16.mxu0 0
  %2222 = vmatpush1.bf16.msra.mxu0 0
  %2223 = vmatprep.subr.bf16.mxu0 0
  %2224 = vmatpush1.bf16.msra.mxu0 0
  %2225 = vmatprep.subr.bf16.mxu0 0
  %2226 = vmatpush1.bf16.msra.mxu0 0
  %2227 = vmatprep.subr.bf16.mxu0 0
  %2228 = vmatpush1.bf16.msra.mxu0 0
  %2229 = vmatprep.subr.bf16.mxu0 0
  %2230 = vmatpush1.bf16.msra.mxu0 0
  %2231 = vmatprep.subr.bf16.mxu0 0
  %2232 = vmatpush1.bf16.msra.mxu0 0
  %2233 = vmatprep.mubr.bf16.mxu0 0
  %2234 = vmatmul.mubr.bf16.gmra.mrb[0].mxu0 %v2196
  %v2235 = vpop.f32.mrb[0].mxu0
  %v2236 = vadd.f32 0.0, %v2235
  %v2237 = vpop.f32.mrb[0].mxu0
  %v2238 = vpop.f32.mrb[0].mxu0
  %v2239 = vpop.f32.mrb[0].mxu0
  %2240 = vdwg.mxu0
  %2241 = vrot.lane.b32.xlu0 %v1610, 72
  %v2242 = vpop.permute.xlu0 %2241
  %v2244 = vsel %vm298, %v2192, 0
  %v2247 = vsel %vm421, %v2242, 0
  %2249 = vmatprep.subr.bf16.mxu0 0
  %2250 = vmatpush1.bf16.msra.mxu0 %v2247
  %2251 = vmatprep.subr.bf16.mxu0 0
  %2252 = vmatpush1.bf16.msra.mxu0 0
  %2253 = vmatprep.subr.bf16.mxu0 0
  %2254 = vmatpush1.bf16.msra.mxu0 0
  %2255 = vmatprep.subr.bf16.mxu0 0
  %2256 = vmatpush1.bf16.msra.mxu0 0
  %2257 = vmatprep.subr.bf16.mxu0 0
  %2258 = vmatpush1.bf16.msra.mxu0 0
  %2259 = vmatprep.subr.bf16.mxu0 0
  %2260 = vmatpush1.bf16.msra.mxu0 0
  %2261 = vmatprep.subr.bf16.mxu0 0
  %2262 = vmatpush1.bf16.msra.mxu0 0
  %2263 = vmatprep.subr.bf16.mxu0 0
  %2264 = vmatpush1.bf16.msra.mxu0 0
  %2265 = vmatprep.subr.bf16.mxu0 0
  %2266 = vmatpush1.bf16.msra.mxu0 0
  %2267 = vmatprep.subr.bf16.mxu0 0
  %2268 = vmatpush1.bf16.msra.mxu0 0
  %2269 = vmatprep.subr.bf16.mxu0 0
  %2270 = vmatpush1.bf16.msra.mxu0 0
  %2271 = vmatprep.subr.bf16.mxu0 0
  %2272 = vmatpush1.bf16.msra.mxu0 0
  %2273 = vmatprep.subr.bf16.mxu0 0
  %2274 = vmatpush1.bf16.msra.mxu0 0
  %2275 = vmatprep.subr.bf16.mxu0 0
  %2276 = vmatpush1.bf16.msra.mxu0 0
  %2277 = vmatprep.subr.bf16.mxu0 0
  %2278 = vmatpush1.bf16.msra.mxu0 0
  %2279 = vmatprep.subr.bf16.mxu0 0
  %2280 = vmatpush1.bf16.msra.mxu0 0
  %2281 = vmatprep.mubr.bf16.mxu0 0
  %2282 = vmatmul.mubr.bf16.gmra.mrb[0].mxu0 %v2244
  %v2283 = vpop.f32.mrb[0].mxu0
  %v2284 = vadd.f32 0.0, %v2283
  %v2285 = vpop.f32.mrb[0].mxu0
  %v2286 = vpop.f32.mrb[0].mxu0
  %v2287 = vpop.f32.mrb[0].mxu0
  %2288 = vdwg.mxu0
  %2289 = vrot.lane.b32.xlu0 %v1545, 116
  %v2290 = vpop.permute.xlu0 %2289
  %2291 = vrot.lane.b32.xlu0 %v1546, 116
  %v2292 = vpop.permute.xlu0 %2291
  %2295 = vrot.lane.b32.xlu0 %v1559, 120
  %v2296 = vpop.permute.xlu0 %2295
  %2297 = vrot.lane.b32.xlu0 %v1560, 120
  %v2298 = vpop.permute.xlu0 %2297
  %v2301 = vsel %vm263, %v2290, %v2296
  %v2302 = vsel %vm263, %v2292, %v2298
  %v2303 = vpack.c.bf16 %v2301, %v2301
  %v2304 = vpack.c.bf16 %v2302, %v2302
  %v2306 = vsel %vm298, %v2303, 0
  %2308 = vmatprep.subr.bf16.mxu0 0
  %2309 = vmatpush1.bf16.xpose.msra.mxu0 %v2081
  %2310 = vmatprep.subr.bf16.mxu0 0
  %2311 = vmatpush1.bf16.xpose.msra.mxu0 0
  %2312 = vmatprep.subr.bf16.mxu0 0
  %2313 = vmatpush1.bf16.xpose.msra.mxu0 0
  %2314 = vmatprep.subr.bf16.mxu0 0
  %2315 = vmatpush1.bf16.xpose.msra.mxu0 0
  %2316 = vmatprep.subr.bf16.mxu0 0
  %2317 = vmatpush1.bf16.xpose.msra.mxu0 0
  %2318 = vmatprep.subr.bf16.mxu0 0
  %2319 = vmatpush1.bf16.xpose.msra.mxu0 0
  %2320 = vmatprep.subr.bf16.mxu0 0
  %2321 = vmatpush1.bf16.xpose.msra.mxu0 0
  %2322 = vmatprep.subr.bf16.mxu0 0
  %2323 = vmatpush1.bf16.xpose.msra.mxu0 0
  %2324 = vmatprep.subr.bf16.mxu0 0
  %2325 = vmatpush1.bf16.xpose.msra.mxu0 0
  %2326 = vmatprep.subr.bf16.mxu0 0
  %2327 = vmatpush1.bf16.xpose.msra.mxu0 0
  %2328 = vmatprep.subr.bf16.mxu0 0
  %2329 = vmatpush1.bf16.xpose.msra.mxu0 0
  %2330 = vmatprep.subr.bf16.mxu0 0
  %2331 = vmatpush1.bf16.xpose.msra.mxu0 0
  %2332 = vmatprep.subr.bf16.mxu0 0
  %2333 = vmatpush1.bf16.xpose.msra.mxu0 0
  %2334 = vmatprep.subr.bf16.mxu0 0
  %2335 = vmatpush1.bf16.xpose.msra.mxu0 0
  %2336 = vmatprep.subr.bf16.mxu0 0
  %2337 = vmatpush1.bf16.xpose.msra.mxu0 0
  %2338 = vmatprep.subr.bf16.mxu0 0
  %2339 = vmatpush1.bf16.xpose.msra.mxu0 0
  %2340 = vmatprep.mubr.bf16.mxu0 0
  %2341 = vmatmul.mubr.bf16.gmra.mrb[0].mxu0 %v2306
  %v2342 = vpop.f32.mrb[0].mxu0
  %v2343 = vadd.f32 %v58, %v2342
  %v2344 = vpop.f32.mrb[0].mxu0
  %v2345 = vpop.f32.mrb[0].mxu0
  %v2346 = vpop.f32.mrb[0].mxu0
  %2347 = vdwg.mxu0
  %v2349 = vsel %vm298, %v2304, 0
  %2351 = vmatprep.subr.bf16.mxu0 0
  %2352 = vmatpush1.bf16.xpose.msra.mxu0 %v2127
  %2353 = vmatprep.subr.bf16.mxu0 0
  %2354 = vmatpush1.bf16.xpose.msra.mxu0 0
  %2355 = vmatprep.subr.bf16.mxu0 0
  %2356 = vmatpush1.bf16.xpose.msra.mxu0 0
  %2357 = vmatprep.subr.bf16.mxu0 0
  %2358 = vmatpush1.bf16.xpose.msra.mxu0 0
  %2359 = vmatprep.subr.bf16.mxu0 0
  %2360 = vmatpush1.bf16.xpose.msra.mxu0 0
  %2361 = vmatprep.subr.bf16.mxu0 0
  %2362 = vmatpush1.bf16.xpose.msra.mxu0 0
  %2363 = vmatprep.subr.bf16.mxu0 0
  %2364 = vmatpush1.bf16.xpose.msra.mxu0 0
  %2365 = vmatprep.subr.bf16.mxu0 0
  %2366 = vmatpush1.bf16.xpose.msra.mxu0 0
  %2367 = vmatprep.subr.bf16.mxu0 0
  %2368 = vmatpush1.bf16.xpose.msra.mxu0 0
  %2369 = vmatprep.subr.bf16.mxu0 0
  %2370 = vmatpush1.bf16.xpose.msra.mxu0 0
  %2371 = vmatprep.subr.bf16.mxu0 0
  %2372 = vmatpush1.bf16.xpose.msra.mxu0 0
  %2373 = vmatprep.subr.bf16.mxu0 0
  %2374 = vmatpush1.bf16.xpose.msra.mxu0 0
  %2375 = vmatprep.subr.bf16.mxu0 0
  %2376 = vmatpush1.bf16.xpose.msra.mxu0 0
  %2377 = vmatprep.subr.bf16.mxu0 0
  %2378 = vmatpush1.bf16.xpose.msra.mxu0 0
  %2379 = vmatprep.subr.bf16.mxu0 0
  %2380 = vmatpush1.bf16.xpose.msra.mxu0 0
  %2381 = vmatprep.subr.bf16.mxu0 0
  %2382 = vmatpush1.bf16.xpose.msra.mxu0 0
  %2383 = vmatprep.mubr.bf16.mxu0 0
  %2384 = vmatmul.mubr.bf16.gmra.mrb[0].mxu0 %v2349
  %v2385 = vpop.f32.mrb[0].mxu0
  %v2386 = vadd.f32 %v58, %v2385
  %v2387 = vpop.f32.mrb[0].mxu0
  %v2388 = vpop.f32.mrb[0].mxu0
  %v2389 = vpop.f32.mrb[0].mxu0
  %2390 = vdwg.mxu0
  %v2391 = vsel %vm298, %v2343, -inf
  %2392 = vmax.xlane.f32.xlu0 %v2391
  %v2393 = vpop.xlane.xlu0 %2392
  %v2394 = vsel %vm298, %v2386, -inf
  %2395 = vmax.xlane.f32.xlu0 %v2394
  %v2396 = vpop.xlane.xlu0 %2395
  %v2397 = vsub.f32 %v2343, %v2393
  %v2398 = vsub.f32 %v2386, %v2396
  %v2399 = vmul.f32 %v2397, 1.442695
  %v2400 = vpow.pop %v2399
  %v2401 = vmul.f32 %v2398, 1.442695
  %v2402 = vpow.pop %v2401
  %v2403 = vsel %vm298, %v2400, 0.0
  %2404 = vadd.xlane.f32.xlu0 %v2403
  %v2405 = vpop.xlane.xlu0 %2404
  %v2406 = vsel %vm298, %v2402, 0.0
  %2407 = vadd.xlane.f32.xlu0 %v2406
  %v2408 = vpop.xlane.xlu0 %2407
  %v2409 = vrcp.pop %v2405
  %v2410 = vrcp.pop %v2408
  %v2411 = vmul.f32 %v2400, %v2409
  %v2412 = vmul.f32 %v2402, %v2410
  %v2413 = vpack.c.bf16 %v2411, %v2411
  %v2414 = vpack.c.bf16 %v2412, %v2412
  %v2416 = vsel %vm298, %v2413, 0
  %2418 = vmatprep.subr.bf16.mxu0 0
  %2419 = vmatpush1.bf16.msra.mxu0 %v2199
  %2420 = vmatprep.subr.bf16.mxu0 0
  %2421 = vmatpush1.bf16.msra.mxu0 0
  %2422 = vmatprep.subr.bf16.mxu0 0
  %2423 = vmatpush1.bf16.msra.mxu0 0
  %2424 = vmatprep.subr.bf16.mxu0 0
  %2425 = vmatpush1.bf16.msra.mxu0 0
  %2426 = vmatprep.subr.bf16.mxu0 0
  %2427 = vmatpush1.bf16.msra.mxu0 0
  %2428 = vmatprep.subr.bf16.mxu0 0
  %2429 = vmatpush1.bf16.msra.mxu0 0
  %2430 = vmatprep.subr.bf16.mxu0 0
  %2431 = vmatpush1.bf16.msra.mxu0 0
  %2432 = vmatprep.subr.bf16.mxu0 0
  %2433 = vmatpush1.bf16.msra.mxu0 0
  %2434 = vmatprep.subr.bf16.mxu0 0
  %2435 = vmatpush1.bf16.msra.mxu0 0
  %2436 = vmatprep.subr.bf16.mxu0 0
  %2437 = vmatpush1.bf16.msra.mxu0 0
  %2438 = vmatprep.subr.bf16.mxu0 0
  %2439 = vmatpush1.bf16.msra.mxu0 0
  %2440 = vmatprep.subr.bf16.mxu0 0
  %2441 = vmatpush1.bf16.msra.mxu0 0
  %2442 = vmatprep.subr.bf16.mxu0 0
  %2443 = vmatpush1.bf16.msra.mxu0 0
  %2444 = vmatprep.subr.bf16.mxu0 0
  %2445 = vmatpush1.bf16.msra.mxu0 0
  %2446 = vmatprep.subr.bf16.mxu0 0
  %2447 = vmatpush1.bf16.msra.mxu0 0
  %2448 = vmatprep.subr.bf16.mxu0 0
  %2449 = vmatpush1.bf16.msra.mxu0 0
  %2450 = vmatprep.mubr.bf16.mxu0 0
  %2451 = vmatmul.mubr.bf16.gmra.mrb[0].mxu0 %v2416
  %v2452 = vpop.f32.mrb[0].mxu0
  %v2453 = vadd.f32 0.0, %v2452
  %v2454 = vpop.f32.mrb[0].mxu0
  %v2455 = vpop.f32.mrb[0].mxu0
  %v2456 = vpop.f32.mrb[0].mxu0
  %2457 = vdwg.mxu0
  %v2459 = vsel %vm298, %v2414, 0
  %2461 = vmatprep.subr.bf16.mxu0 0
  %2462 = vmatpush1.bf16.msra.mxu0 %v2247
  %2463 = vmatprep.subr.bf16.mxu0 0
  %2464 = vmatpush1.bf16.msra.mxu0 0
  %2465 = vmatprep.subr.bf16.mxu0 0
  %2466 = vmatpush1.bf16.msra.mxu0 0
  %2467 = vmatprep.subr.bf16.mxu0 0
  %2468 = vmatpush1.bf16.msra.mxu0 0
  %2469 = vmatprep.subr.bf16.mxu0 0
  %2470 = vmatpush1.bf16.msra.mxu0 0
  %2471 = vmatprep.subr.bf16.mxu0 0
  %2472 = vmatpush1.bf16.msra.mxu0 0
  %2473 = vmatprep.subr.bf16.mxu0 0
  %2474 = vmatpush1.bf16.msra.mxu0 0
  %2475 = vmatprep.subr.bf16.mxu0 0
  %2476 = vmatpush1.bf16.msra.mxu0 0
  %2477 = vmatprep.subr.bf16.mxu0 0
  %2478 = vmatpush1.bf16.msra.mxu0 0
  %2479 = vmatprep.subr.bf16.mxu0 0
  %2480 = vmatpush1.bf16.msra.mxu0 0
  %2481 = vmatprep.subr.bf16.mxu0 0
  %2482 = vmatpush1.bf16.msra.mxu0 0
  %2483 = vmatprep.subr.bf16.mxu0 0
  %2484 = vmatpush1.bf16.msra.mxu0 0
  %2485 = vmatprep.subr.bf16.mxu0 0
  %2486 = vmatpush1.bf16.msra.mxu0 0
  %2487 = vmatprep.subr.bf16.mxu0 0
  %2488 = vmatpush1.bf16.msra.mxu0 0
  %2489 = vmatprep.subr.bf16.mxu0 0
  %2490 = vmatpush1.bf16.msra.mxu0 0
  %2491 = vmatprep.subr.bf16.mxu0 0
  %2492 = vmatpush1.bf16.msra.mxu0 0
  %2493 = vmatprep.mubr.bf16.mxu0 0
  %2494 = vmatmul.mubr.bf16.gmra.mrb[0].mxu0 %v2459
  %v2495 = vpop.f32.mrb[0].mxu0
  %v2496 = vadd.f32 0.0, %v2495
  %v2497 = vpop.f32.mrb[0].mxu0
  %v2498 = vpop.f32.mrb[0].mxu0
  %v2499 = vpop.f32.mrb[0].mxu0
  %2500 = vdwg.mxu0
  %2503 = vrot.lane.b32.xlu0 %v2013, 8
  %v2504 = vpop.permute.xlu0 %2503
  %2505 = vrot.lane.b32.xlu0 %v2056, 8
  %v2506 = vpop.permute.xlu0 %2505
  %2511 = vrot.lane.b32.xlu0 %v2236, 16
  %v2512 = vpop.permute.xlu0 %2511
  %2513 = vrot.lane.b32.xlu0 %v2284, 16
  %v2514 = vpop.permute.xlu0 %2513
  %2519 = vrot.lane.b32.xlu0 %v2453, 24
  %v2520 = vpop.permute.xlu0 %2519
  %2521 = vrot.lane.b32.xlu0 %v2496, 24
  %v2522 = vpop.permute.xlu0 %2521
  %v2525 = vsel %vm298, %v1799, %v2504
  %v2526 = vsel %vm298, %v1848, %v2506
  %v2527 = vsel %vm1188, %v2525, %v2512
  %v2528 = vsel %vm1188, %v2526, %v2514
  %v2529 = vsel %vm1191, %v2527, %v2520
  %v2530 = vsel %vm1191, %v2528, %v2522
  %s2531 = scalar_lea.vmem %s8, 16
  %v2532 = vld [vmem:[%s2531] sm:$0xf]
  %v2533 = vld [vmem:[%s2531 + $0x4] sm:$0xf]
  %v2534 = vld [vmem:[%s2531 + $0x8] sm:$0xf]
  %v2535 = vld [vmem:[%s2531 + $0xc] sm:$0xf]
  %v2536 = vpack.c.bf16 %v2530, %v2529
  %v2541 = vunpack.c.l.b16 %v2532
  %v2542 = vunpack.c.l.b16 %v2533
  %v2543 = vunpack.c.l.b16 %v2534
  %v2544 = vunpack.c.l.b16 %v2535
  %v2545 = vpack.c.b16 %v2542, %v2541
  %v2546 = vpack.c.b16 %v2544, %v2543
  %v2550 = vsel %vm62, %v2536, 0
  %2552 = vmatprep.subr.bf16.mxu0 0
  %2553 = vmatpush1.bf16.msra.mxu0 %v2545
  %2554 = vmatprep.subr.bf16.mxu0 0
  %2555 = vmatpush1.bf16.msra.mxu0 %v2546
  %2556 = vmatprep.subr.bf16.mxu0 0
  %2557 = vmatpush1.bf16.msra.mxu0 0
  %2558 = vmatprep.subr.bf16.mxu0 0
  %2559 = vmatpush1.bf16.msra.mxu0 0
  %2560 = vmatprep.subr.bf16.mxu0 0
  %2561 = vmatpush1.bf16.msra.mxu0 0
  %2562 = vmatprep.subr.bf16.mxu0 0
  %2563 = vmatpush1.bf16.msra.mxu0 0
  %2564 = vmatprep.subr.bf16.mxu0 0
  %2565 = vmatpush1.bf16.msra.mxu0 0
  %2566 = vmatprep.subr.bf16.mxu0 0
  %2567 = vmatpush1.bf16.msra.mxu0 0
  %2568 = vmatprep.subr.bf16.mxu0 0
  %2569 = vmatpush1.bf16.msra.mxu0 0
  %2570 = vmatprep.subr.bf16.mxu0 0
  %2571 = vmatpush1.bf16.msra.mxu0 0
  %2572 = vmatprep.subr.bf16.mxu0 0
  %2573 = vmatpush1.bf16.msra.mxu0 0
  %2574 = vmatprep.subr.bf16.mxu0 0
  %2575 = vmatpush1.bf16.msra.mxu0 0
  %2576 = vmatprep.subr.bf16.mxu0 0
  %2577 = vmatpush1.bf16.msra.mxu0 0
  %2578 = vmatprep.subr.bf16.mxu0 0
  %2579 = vmatpush1.bf16.msra.mxu0 0
  %2580 = vmatprep.subr.bf16.mxu0 0
  %2581 = vmatpush1.bf16.msra.mxu0 0
  %2582 = vmatprep.subr.bf16.mxu0 0
  %2583 = vmatpush1.bf16.msra.mxu0 0
  %2584 = vmatprep.mubr.bf16.mxu0 0
  %2585 = vmatmul.mubr.bf16.gmra.mrb[0].mxu0 %v2550
  %v2586 = vpop.f32.mrb[0].mxu0
  %v2587 = vadd.f32 0.0, %v2586
  %v2588 = vpop.f32.mrb[0].mxu0
  %v2589 = vpop.f32.mrb[0].mxu0
  %v2590 = vadd.f32 0.0, %v2589
  %v2591 = vpop.f32.mrb[0].mxu0
  %2592 = vdwg.mxu0
  %v2593 = vadd.f32 %v1443, %v2587
  %v2594 = vadd.f32 %v1444, %v2590
  %s2595 = scalar_lea.vmem %s9, 1
  %v2596 = vld [vmem:[%s2595] sm:$0x1]
  %v2597 = vmul.f32 %v2593, %v2593
  %v2598 = vmul.f32 %v2594, %v2594
  %v2599 = vsel %vm62, %v2597, 0.0
  %2600 = vadd.xlane.f32.xlu0 %v2599
  %v2601 = vpop.xlane.xlu0 %2600
  %v2602 = vsel %vm62, %v2598, 0.0
  %2603 = vadd.xlane.f32.xlu0 %v2602
  %v2604 = vpop.xlane.xlu0 %2603
  %v2605 = vmul.f32 %v2601, %v69
  %v2606 = vmul.f32 %v2604, %v69
  %v2607 = vadd.f32 %v2605, 1e-06
  %v2608 = vadd.f32 %v2606, 1e-06
  %v2609 = vrsqrt.pop %v2607
  %v2610 = vrsqrt.pop %v2608
  %v2611 = vmul.f32 %v2593, %v2609
  %v2612 = vmul.f32 %v2594, %v2610
  %v2614 = vlaneseq
  %v2615 = vshrl.u32 %v2614, 7
  %v2616 = vsub.s32 0, %v2615
  %v2617 = vrot.slane %v2596, %v2616
  %v2619 = vmul.f32 %v2611, %v2617
  %v2620 = vmul.f32 %v2612, %v2617
  %s2621 = scalar_lea.vmem %s10, 16
  %v2622 = vld [vmem:[%s2621] sm:$0xf]
  %v2623 = vld [vmem:[%s2621 + $0x4] sm:$0xf]
  %v2624 = vld [vmem:[%s2621 + $0x8] sm:$0xf]
  %v2625 = vld [vmem:[%s2621 + $0xc] sm:$0xf]
  %v2626 = vpack.c.bf16 %v2620, %v2619
  %v2631 = vunpack.c.l.b16 %v2622
  %v2632 = vunpack.c.l.b16 %v2623
  %v2633 = vunpack.c.l.b16 %v2624
  %v2634 = vunpack.c.l.b16 %v2625
  %v2635 = vpack.c.b16 %v2632, %v2631
  %v2636 = vpack.c.b16 %v2634, %v2633
  %v2640 = vsel %vm62, %v2626, 0
  %2642 = vmatprep.subr.bf16.mxu0 0
  %2643 = vmatpush1.bf16.msra.mxu0 %v2635
  %2644 = vmatprep.subr.bf16.mxu0 0
  %2645 = vmatpush1.bf16.msra.mxu0 %v2636
  %2646 = vmatprep.subr.bf16.mxu0 0
  %2647 = vmatpush1.bf16.msra.mxu0 0
  %2648 = vmatprep.subr.bf16.mxu0 0
  %2649 = vmatpush1.bf16.msra.mxu0 0
  %2650 = vmatprep.subr.bf16.mxu0 0
  %2651 = vmatpush1.bf16.msra.mxu0 0
  %2652 = vmatprep.subr.bf16.mxu0 0
  %2653 = vmatpush1.bf16.msra.mxu0 0
  %2654 = vmatprep.subr.bf16.mxu0 0
  %2655 = vmatpush1.bf16.msra.mxu0 0
  %2656 = vmatprep.subr.bf16.mxu0 0
  %2657 = vmatpush1.bf16.msra.mxu0 0
  %2658 = vmatprep.subr.bf16.mxu0 0
  %2659 = vmatpush1.bf16.msra.mxu0 0
  %2660 = vmatprep.subr.bf16.mxu0 0
  %2661 = vmatpush1.bf16.msra.mxu0 0
  %2662 = vmatprep.subr.bf16.mxu0 0
  %2663 = vmatpush1.bf16.msra.mxu0 0
  %2664 = vmatprep.subr.bf16.mxu0 0
  %2665 = vmatpush1.bf16.msra.mxu0 0
  %2666 = vmatprep.subr.bf16.mxu0 0
  %2667 = vmatpush1.bf16.msra.mxu0 0
  %2668 = vmatprep.subr.bf16.mxu0 0
  %2669 = vmatpush1.bf16.msra.mxu0 0
  %2670 = vmatprep.subr.bf16.mxu0 0
  %2671 = vmatpush1.bf16.msra.mxu0 0
  %2672 = vmatprep.subr.bf16.mxu0 0
  %2673 = vmatpush1.bf16.msra.mxu0 0
  %2674 = vmatprep.mubr.bf16.mxu0 0
  %2675 = vmatmul.mubr.bf16.gmra.mrb[0].mxu0 %v2640
  %v2676 = vpop.f32.mrb[0].mxu0
  %v2677 = vadd.f32 0.0, %v2676
  %v2678 = vpop.f32.mrb[0].mxu0
  %v2679 = vpop.f32.mrb[0].mxu0
  %v2680 = vadd.f32 0.0, %v2679
  %v2681 = vpop.f32.mrb[0].mxu0
  %2682 = vdwg.mxu0
  %v2683 = vsub.f32 0.0, %v2677
  %v2684 = vsub.f32 0.0, %v2680
  %v2685 = vmul.f32 %v2683, 1.442695
  %v2686 = vpow.pop %v2685
  %v2687 = vmul.f32 %v2684, 1.442695
  %v2688 = vpow.pop %v2687
  %v2689 = vadd.f32 %v2686, 1.0
  %v2690 = vadd.f32 %v2688, 1.0
  %v2691 = vrcp.pop %v2689
  %v2692 = vrcp.pop %v2690
  %v2693 = vmul.f32 %v2677, %v2691
  %v2694 = vmul.f32 %v2680, %v2692
  %2697 = vrot.lane.b32.xlu0 %v2677, 64
  %v2698 = vpop.permute.xlu0 %2697
  %2699 = vrot.lane.b32.xlu0 %v2680, 64
  %v2700 = vpop.permute.xlu0 %2699
  %v2703 = vmul.f32 %v2693, %v2698
  %v2704 = vmul.f32 %v2694, %v2700
  %s2705 = scalar_lea.vmem %s11, 32
  %v2706 = vld [vmem:[%s2705] sm:$0xf]
  %v2707 = vld [vmem:[%s2705 + $0x4] sm:$0xf]
  %v2708 = vld [vmem:[%s2705 + $0x8] sm:$0xf]
  %v2709 = vld [vmem:[%s2705 + $0xc] sm:$0xf]
  %v2710 = vld [vmem:[%s2705 + $0x10] sm:$0xf]
  %v2711 = vld [vmem:[%s2705 + $0x14] sm:$0xf]
  %v2712 = vld [vmem:[%s2705 + $0x18] sm:$0xf]
  %v2713 = vld [vmem:[%s2705 + $0x1c] sm:$0xf]
  %v2714 = vpack.c.bf16 %v2704, %v2703
  %v2723 = vunpack.c.l.b16 %v2706
  %v2724 = vunpack.c.l.b16 %v2707
  %v2725 = vunpack.c.l.b16 %v2708
  %v2726 = vunpack.c.l.b16 %v2709
  %v2727 = vunpack.c.l.b16 %v2710
  %v2728 = vunpack.c.l.b16 %v2711
  %v2729 = vunpack.c.l.b16 %v2712
  %v2730 = vunpack.c.l.b16 %v2713
  %v2731 = vpack.c.b16 %v2724, %v2723
  %v2732 = vpack.c.b16 %v2726, %v2725
  %v2733 = vpack.c.b16 %v2728, %v2727
  %v2734 = vpack.c.b16 %v2730, %v2729
  %v2740 = vsel %vm1398, %v2714, 0
  %2742 = vmatprep.subr.bf16.mxu0 0
  %2743 = vmatpush1.bf16.msra.mxu0 %v2731
  %2744 = vmatprep.subr.bf16.mxu0 0
  %2745 = vmatpush1.bf16.msra.mxu0 %v2732
  %2746 = vmatprep.subr.bf16.mxu0 0
  %2747 = vmatpush1.bf16.msra.mxu0 %v2733
  %2748 = vmatprep.subr.bf16.mxu0 0
  %2749 = vmatpush1.bf16.msra.mxu0 %v2734
  %2750 = vmatprep.subr.bf16.mxu0 0
  %2751 = vmatpush1.bf16.msra.mxu0 0
  %2752 = vmatprep.subr.bf16.mxu0 0
  %2753 = vmatpush1.bf16.msra.mxu0 0
  %2754 = vmatprep.subr.bf16.mxu0 0
  %2755 = vmatpush1.bf16.msra.mxu0 0
  %2756 = vmatprep.subr.bf16.mxu0 0
  %2757 = vmatpush1.bf16.msra.mxu0 0
  %2758 = vmatprep.subr.bf16.mxu0 0
  %2759 = vmatpush1.bf16.msra.mxu0 0
  %2760 = vmatprep.subr.bf16.mxu0 0
  %2761 = vmatpush1.bf16.msra.mxu0 0
  %2762 = vmatprep.subr.bf16.mxu0 0
  %2763 = vmatpush1.bf16.msra.mxu0 0
  %2764 = vmatprep.subr.bf16.mxu0 0
  %2765 = vmatpush1.bf16.msra.mxu0 0
  %2766 = vmatprep.subr.bf16.mxu0 0
  %2767 = vmatpush1.bf16.msra.mxu0 0
  %2768 = vmatprep.subr.bf16.mxu0 0
  %2769 = vmatpush1.bf16.msra.mxu0 0
  %2770 = vmatprep.subr.bf16.mxu0 0
  %2771 = vmatpush1.bf16.msra.mxu0 0
  %2772 = vmatprep.subr.bf16.mxu0 0
  %2773 = vmatpush1.bf16.msra.mxu0 0
  %2774 = vmatprep.mubr.bf16.mxu0 0
  %2775 = vmatmul.mubr.bf16.gmra.mrb[0].mxu0 %v2740
  %v2776 = vpop.f32.mrb[0].mxu0
  %v2777 = vadd.f32 0.0, %v2776
  %v2778 = vpop.f32.mrb[0].mxu0
  %v2779 = vpop.f32.mrb[0].mxu0
  %v2780 = vadd.f32 0.0, %v2779
  %v2781 = vpop.f32.mrb[0].mxu0
  %2782 = vdwg.mxu0
  %v2783 = vadd.f32 %v2593, %v2777
  %v2784 = vadd.f32 %v2594, %v2780
  %v2785 = vld [vmem:[%s12] sm:$0x1]
  %v2786 = vmul.f32 %v2783, %v2783
  %v2787 = vmul.f32 %v2784, %v2784
  %v2788 = vsel %vm62, %v2786, 0.0
  %2789 = vadd.xlane.f32.xlu0 %v2788
  %v2790 = vpop.xlane.xlu0 %2789
  %v2791 = vsel %vm62, %v2787, 0.0
  %2792 = vadd.xlane.f32.xlu0 %v2791
  %v2793 = vpop.xlane.xlu0 %2792
  %v2794 = vmul.f32 %v2790, %v69
  %v2795 = vmul.f32 %v2793, %v69
  %v2796 = vadd.f32 %v2794, 1e-06
  %v2797 = vadd.f32 %v2795, 1e-06
  %v2798 = vrsqrt.pop %v2796
  %v2799 = vrsqrt.pop %v2797
  %v2800 = vmul.f32 %v2783, %v2798
  %v2801 = vmul.f32 %v2784, %v2799
  %v2803 = vlaneseq
  %v2804 = vshrl.u32 %v2803, 7
  %v2805 = vsub.s32 0, %v2804
  %v2806 = vrot.slane %v2785, %v2805
  %v2808 = vmul.f32 %v2800, %v2806
  %v2809 = vmul.f32 %v2801, %v2806
  %v2810 = vld [vmem:[%s13] sm:$0xf]
  %v2811 = vld [vmem:[%s13 + $0x4] sm:$0xf]
  %v2812 = vld [vmem:[%s13 + $0x8] sm:$0xf]
  %v2813 = vld [vmem:[%s13 + $0xc] sm:$0xf]
  %v2814 = vpack.c.bf16 %v2809, %v2808
  %v2819 = vunpack.c.l.b16 %v2810
  %v2820 = vunpack.c.l.b16 %v2811
  %v2821 = vunpack.c.l.b16 %v2812
  %v2822 = vunpack.c.l.b16 %v2813
  %v2823 = vpack.c.b16 %v2820, %v2819
  %v2824 = vpack.c.b16 %v2822, %v2821
  %v2828 = vsel %vm62, %v2814, 0
  %2830 = vmatprep.subr.bf16.mxu0 0
  %2831 = vmatpush1.bf16.msra.mxu0 %v2823
  %2832 = vmatprep.subr.bf16.mxu0 0
  %2833 = vmatpush1.bf16.msra.mxu0 %v2824
  %2834 = vmatprep.subr.bf16.mxu0 0
  %2835 = vmatpush1.bf16.msra.mxu0 0
  %2836 = vmatprep.subr.bf16.mxu0 0
  %2837 = vmatpush1.bf16.msra.mxu0 0
  %2838 = vmatprep.subr.bf16.mxu0 0
  %2839 = vmatpush1.bf16.msra.mxu0 0
  %2840 = vmatprep.subr.bf16.mxu0 0
  %2841 = vmatpush1.bf16.msra.mxu0 0
  %2842 = vmatprep.subr.bf16.mxu0 0
  %2843 = vmatpush1.bf16.msra.mxu0 0
  %2844 = vmatprep.subr.bf16.mxu0 0
  %2845 = vmatpush1.bf16.msra.mxu0 0
  %2846 = vmatprep.subr.bf16.mxu0 0
  %2847 = vmatpush1.bf16.msra.mxu0 0
  %2848 = vmatprep.subr.bf16.mxu0 0
  %2849 = vmatpush1.bf16.msra.mxu0 0
  %2850 = vmatprep.subr.bf16.mxu0 0
  %2851 = vmatpush1.bf16.msra.mxu0 0
  %2852 = vmatprep.subr.bf16.mxu0 0
  %2853 = vmatpush1.bf16.msra.mxu0 0
  %2854 = vmatprep.subr.bf16.mxu0 0
  %2855 = vmatpush1.bf16.msra.mxu0 0
  %2856 = vmatprep.subr.bf16.mxu0 0
  %2857 = vmatpush1.bf16.msra.mxu0 0
  %2858 = vmatprep.subr.bf16.mxu0 0
  %2859 = vmatpush1.bf16.msra.mxu0 0
  %2860 = vmatprep.subr.bf16.mxu0 0
  %2861 = vmatpush1.bf16.msra.mxu0 0
  %2862 = vmatprep.mubr.bf16.mxu0 0
  %2863 = vmatmul.mubr.bf16.gmra.mrb[0].mxu0 %v2828
  %v2864 = vpop.f32.mrb[0].mxu0
  %v2865 = vadd.f32 0.0, %v2864
  %v2866 = vpop.f32.mrb[0].mxu0
  %v2867 = vpop.f32.mrb[0].mxu0
  %v2868 = vadd.f32 0.0, %v2867
  %v2869 = vpop.f32.mrb[0].mxu0
  %2870 = vdwg.mxu0
  %2871 = vst [vmem:[%s14] sm:$0xff] %v2865
  %2872 = vst [vmem:[%s14 + $0x8] sm:$0xff] %v2868
  // Predicated region
  $region58: #{transformer_forward.1} parent=0 // pred_check
    _
  $region59: #{transformer_forward.1} parent=0 // pred_check_branch
    %2874 = sbr.rel (0) target = $region61
  $region60: #{transformer_forward.1} parent=0 // pred_region
    _
  $region61: #{transformer_forward.1} parent=0 // pred_fallthru
    _
  // Predicated region
  $region62: #{transformer_forward.1} parent=0 // pred_check
    _
  $region63: #{transformer_forward.1} parent=0 // pred_check_branch
    %2876 = sbr.rel (0) target = $region65
  $region64: #{transformer_forward.1} parent=0 // pred_region
    _
  $region65: #{transformer_forward.1} parent=0 // pred_fallthru
    _

</llo_original>
